<compile_context>
chip_gen: v6e
topology: v6e:2x2x1
jax: 0.10.0
libtpu: 0.0.40
codegen_flags: <defaults>
</compile_context>

<pallas_src>
import functools

import jax
import jax.numpy as jnp
from jax.experimental import pallas as pl
from jax.experimental.pallas import tpu as pltpu


# ----------------------------------------------------------------------------
# shared math helpers (used identically inside the kernel and the reference)
# ----------------------------------------------------------------------------
def _gelu(x):
    # tanh-approximate GELU.  TODO(synk): PyTorch nn.GELU defaults to erf.
    return 0.5 * x * (1.0 + jnp.tanh(0.7978845608028654 *
                                     (x + 0.044715 * x * x * x)))


def _layernorm(x, g, b, eps=1e-5):
    mu = jnp.mean(x, axis=-1, keepdims=True)
    xc = x - mu
    var = jnp.mean(xc * xc, axis=-1, keepdims=True)
    return xc * jax.lax.rsqrt(var + eps) * g + b


def _mxu(a, b):
    # bf16 operands on the MXU, f32 accumulation.
    return jnp.dot(a.astype(jnp.bfloat16), b.astype(jnp.bfloat16),
                   preferred_element_type=jnp.float32)


def _layer_math(x, wqkv, wo, w1, w2, bqkv, bvec, b1, *, num_heads):
    """One post-norm transformer encoder layer on a (B, L, D) f32 block."""
    B, L, D = x.shape
    hd = D // num_heads
    scale = float(hd) ** -0.5
    x2 = x.reshape(B * L, D)

    bo, g1, be1, mb2, g2, be2 = (bvec[0:1], bvec[1:2], bvec[2:3],
                                 bvec[3:4], bvec[4:5], bvec[5:6])

    # fused q/k/v projection (wide N = 3D keeps the MXU fuller)
    qkv = _mxu(x2, wqkv) + bqkv                      # (B*L, 3D) f32
    q = qkv[:, :D].reshape(B, L, D) * scale          # scale folded into q
    k = qkv[:, D:2 * D].reshape(B, L, D)
    v = qkv[:, 2 * D:].reshape(B, L, D)

    # per-head attention; each head's output is accumulated straight into the
    # matching row-slice of the output projection -> no lane-axis concat.
    attn = jnp.zeros((B * L, D), jnp.float32)
    for h in range(num_heads):
        sl = slice(h * hd, (h + 1) * hd)
        s = jnp.einsum('bld,bmd->blm',
                       q[..., sl].astype(jnp.bfloat16),
                       k[..., sl].astype(jnp.bfloat16),
                       preferred_element_type=jnp.float32)
        s = s - jnp.max(s, axis=-1, keepdims=True)
        e = jnp.exp(s)
        # exact divide here (not approx reciprocal): keeps the kernel and the
        # reference numerically tight for the downstream discrete top-k.
        p = e / jnp.sum(e, axis=-1, keepdims=True)
        oh = jnp.einsum('blm,bmd->bld',
                        p.astype(jnp.bfloat16),
                        v[..., sl].astype(jnp.bfloat16),
                        preferred_element_type=jnp.float32)
        attn = attn + _mxu(oh.reshape(B * L, hd), wo[sl, :])

    # forward_post: x = x + LN1(attn(x)) ; x = x + LN2(mlp(x))
    x2 = x2 + _layernorm(attn + bo, g1, be1)
    hmid = _gelu(_mxu(x2, w1) + b1)
    mlp = _mxu(hmid, w2) + mb2
    x2 = x2 + _layernorm(mlp, g2, be2)
    return x2.reshape(B, L, D)


def _score_logits_math(xn2, B, L, wf0, wf1, bf0, bf1, wf3, bf3):
    """MLP_Purification logits: fc3(GELU(fc1(GELU(fc0(x_norm)))))."""
    s0 = _gelu(_mxu(xn2, wf0) + bf0)
    s1 = _gelu(_mxu(s0, wf1) + bf1)
    d4 = s1.shape[-1]
    # fc3 (D/4 -> 1) as a weighted lane reduction
    return jnp.sum(s1.reshape(B, L, d4) * wf3, axis=-1) + bf3   # (B, L)


# ----------------------------------------------------------------------------
# the fused kernel: all encoder layers + encoder_norm + purification scores
# ----------------------------------------------------------------------------
def _fused_forward_kernel(x_ref, wqkv_ref, wo_ref, w1_ref, w2_ref,
                          bqkv_ref, bvec_ref, b1_ref,
                          wf0_ref, wf1_ref, hvec_ref, hvec4_ref, bf3_ref,
                          xn_ref, score_ref, *, num_heads):
    B, L, D = x_ref.shape
    depth = wqkv_ref.shape[0]

    x = x_ref[...].astype(jnp.float32)
    # Static unroll over layers: the residual stream never leaves VMEM.
    # (For deep encoders switch to lax.fori_loop with a dynamic layer index.)
    for l in range(depth):
        x = _layer_math(x, wqkv_ref[l], wo_ref[l], w1_ref[l], w2_ref[l],
                        bqkv_ref[l], bvec_ref[l], b1_ref[l],
                        num_heads=num_heads)

    hv = hvec_ref[...]        # rows: [encoder_norm g, encoder_norm b, fc0 b]
    hv4 = hvec4_ref[...]      # rows: [fc1 b, fc3 w]

    xn2 = _layernorm(x.reshape(B * L, D), hv[0:1], hv[1:2])
    xn_ref[...] = xn2.reshape(B, L, D).astype(xn_ref.dtype)

    logits = _score_logits_math(xn2, B, L, wf0_ref[...], wf1_ref[...],
                                hv[2:3], hv4[0:1], hv4[1:2], bf3_ref[...])
    logits = logits - jnp.max(logits, axis=-1, keepdims=True)
    e = jnp.exp(logits)
    # approximate reciprocal (EUP slot); uniform per-row scale, so the top-k
    # ordering downstream is unaffected.
    probs = e * pl.reciprocal(jnp.sum(e, axis=-1, keepdims=True), approx=True)
    # NOTE: for production P, pad the score last dim to a multiple of 128 for
    # lane-dense (unmasked) stores.
    score_ref[...] = probs[:, None, :].astype(score_ref.dtype)


# ----------------------------------------------------------------------------
# VMEM budgeting / block sizing helpers
# ----------------------------------------------------------------------------
def _r128(n):
    return ((n + 127) // 128) * 128


def _vmem_need_bytes(block_b, L, D, H, D4, depth):
    """Rough per-grid-step VMEM footprint (bytes) of the fused kernel."""
    # bf16 matmul weights, single-buffered (pl.Buffered(1))
    w = 2 * (depth * (D * _r128(3 * D) + D * _r128(D) + D * _r128(H)
                      + H * _r128(D)) + D * _r128(D) + D * _r128(D4))
    # small f32 vector params (sublane pad to 8), assume worst-case 2 buffers
    v = 4 * 2 * 8 * (depth * (_r128(3 * D) + _r128(D) + _r128(H))
                     + _r128(D) + _r128(D4) + 128)
    rows = block_b * L
    act = 4 * 2 * rows * (2 * _r128(D) + 128)                 # in/out, 2 bufs
    live = 4 * rows * (_r128(3 * D) + _r128(H) + 4 * _r128(D)
                       + 2 * _r128(L))                        # qkv/hmid/attn
    return w + v + act + live


def _vmem_limit_bytes(block_b, L, D, H, D4, depth):
    need = _vmem_need_bytes(block_b, L, D, H, D4, depth)
    # >= the default scoped limit, <= 48 MiB so there is headroom even under
    # v7x's 64 MiB physical VMEM.
    return int(min(max(2 * need, 32 * 2 ** 20), 48 * 2 ** 20))


def _pick_block_b(Bp, L, D, H, D4, depth):
    """Largest divisor of Bp that leaves >= 2 grid steps (v7x megacore +
    DMA/compute overlap) and keeps the VMEM footprint within budget."""
    if Bp <= 1:
        return 1
    best = 1
    for cand in range(1, Bp // 2 + 1):
        if Bp % cand == 0 and \
                2 * _vmem_need_bytes(cand, L, D, H, D4, depth) <= 48 * 2 ** 20:
            best = cand
    return best


# ----------------------------------------------------------------------------
# weight packing (done once in the wrapper; weights pre-cast to bf16)
# ----------------------------------------------------------------------------
def _pack_params(params):
    layers = params["layers"]
    wqkv = jnp.stack([jnp.concatenate([l["wq"], l["wk"], l["wv"]], axis=1)
                      for l in layers]).astype(jnp.bfloat16)   # (depth, D, 3D)
    wo = jnp.stack([l["wo"] for l in layers]).astype(jnp.bfloat16)
    w1 = jnp.stack([l["w1"] for l in layers]).astype(jnp.bfloat16)
    w2 = jnp.stack([l["w2"] for l in layers]).astype(jnp.bfloat16)
    bqkv = jnp.stack([jnp.concatenate([l["bq"], l["bk"], l["bv"]], axis=1)
                      for l in layers])                        # (depth, 1, 3D)
    bvec = jnp.stack([jnp.concatenate([l["bo"], l["ln1g"], l["ln1b"],
                                       l["mb2"], l["ln2g"], l["ln2b"]], axis=0)
                      for l in layers])                        # (depth, 6, D)
    b1 = jnp.stack([l["mb1"] for l in layers])                 # (depth, 1, H)
    return dict(
        wqkv=wqkv, wo=wo, w1=w1, w2=w2, bqkv=bqkv, bvec=bvec, b1=b1,
        wf0=params["wf0"].astype(jnp.bfloat16),
        wf1=params["wf1"].astype(jnp.bfloat16),
        hvec=jnp.concatenate([params["gn"], params["bn"], params["bf0"]],
                             axis=0),                          # (3, D)
        hvec4=jnp.concatenate([params["bf1"], params["wf3"]], axis=0),  # (2,D4)
        bf3=params["bf3"])                                     # (1, 1)


def _fused_encode_and_score(x_local, packed, *, num_heads, block_b, vmem_limit):
    Bp, L, D = x_local.shape
    depth, _, H = packed["w1"].shape
    D4 = packed["wf1"].shape[1]

    def wspec(shape):
        zeros = (0,) * len(shape)
        # grid-invariant: stays resident in VMEM, single-buffered.
        return pl.BlockSpec(shape, lambda i, _z=zeros: _z,
                            pipeline_mode=pl.Buffered(1))

    row3 = lambda i: (i, 0, 0)
    in_specs = [
        pl.BlockSpec((block_b, L, D), row3),
        wspec((depth, D, 3 * D)),
        wspec((depth, D, D)),
        wspec((depth, D, H)),
        wspec((depth, H, D)),
        wspec((depth, 1, 3 * D)),
        wspec((depth, 6, D)),
        wspec((depth, 1, H)),
        wspec((D, D)),
        wspec((D, D4)),
        wspec((3, D)),
        wspec((2, D4)),
        wspec((1, 1)),
    ]
    out_specs = [
        pl.BlockSpec((block_b, L, D), row3),
        pl.BlockSpec((block_b, 1, L), row3),
    ]
    kernel = functools.partial(_fused_forward_kernel, num_heads=num_heads)
    xn, scores = pl.pallas_call(
        kernel,
        out_shape=(jax.ShapeDtypeStruct((Bp, L, D), jnp.float32),
                   jax.ShapeDtypeStruct((Bp, 1, L), jnp.float32)),
        grid_spec=pltpu.PrefetchScalarGridSpec(
            num_scalar_prefetch=0,
            grid=(Bp // block_b,),
            in_specs=in_specs,
            out_specs=out_specs),
        compiler_params=pltpu.CompilerParams(
            dimension_semantics=("parallel",),
            vmem_limit_bytes=vmem_limit),
    )(x_local, packed["wqkv"], packed["wo"], packed["w1"], packed["w2"],
      packed["bqkv"], packed["bvec"], packed["b1"],
      packed["wf0"], packed["wf1"], packed["hvec"], packed["hvec4"],
      packed["bf3"])
    return xn, scores[:, 0, :]


# ----------------------------------------------------------------------------
# full forward (wrapper)
# ----------------------------------------------------------------------------
def local_purification_forward(x, pos_emb, params, *, n_leads, keep_ratio,
                               num_heads, block_b=None):
    bs, total_p, d = x.shape
    assert total_p % n_leads == 0
    P = total_p // n_leads
    Bp = bs * n_leads
    depth = len(params["layers"])
    H = params["layers"][0]["w1"].shape[1]
    D4 = params["wf1"].shape[1]

    if block_b is None:
        block_b = _pick_block_b(Bp, P, d, H, D4, depth)
    assert Bp % block_b == 0

    # x + pos_emb and the "separately" reshape are a fused add + free views.
    x_local = (x + pos_emb).reshape(Bp, P, d)
    pos_local = pos_emb.reshape(Bp, P, d)

    packed = _pack_params(params)
    vmem_limit = _vmem_limit_bytes(block_b, P, d, H, D4, depth)
    x_norm, scores = _fused_encode_and_score(
        x_local, packed, num_heads=num_heads, block_b=block_b,
        vmem_limit=vmem_limit)

    len_keep = int(P * keep_ratio)
    # TODO(synk): top-k token selection + index gather have no clean Pallas TPU
    # equivalent (data-dependent sort/gather); done with lax.top_k /
    # take_along_axis in the wrapper.
    _, ids_keep = jax.lax.top_k(scores, len_keep)          # descending scores
    idx = jnp.broadcast_to(ids_keep[:, :, None], (Bp, len_keep, d))
    x_sel = jnp.take_along_axis(x_norm, idx, axis=1)
    pos_sel = jnp.take_along_axis(pos_local, idx, axis=1)

    # "unseparately": back to (bs, n_leads * len_keep, d)
    return (x_sel.reshape(bs, n_leads * len_keep, d),
            pos_sel.reshape(bs, n_leads * len_keep, d))


# ----------------------------------------------------------------------------
# pure-JAX reference mirroring the kernel's numerics (same bf16 MXU casts)
# ----------------------------------------------------------------------------
def _reference(x, pos_emb, params, *, n_leads, keep_ratio, num_heads):
    bs, total_p, d = x.shape
    P = total_p // n_leads
    Bp = bs * n_leads
    h = (x + pos_emb).reshape(Bp, P, d)
    pos_local = pos_emb.reshape(Bp, P, d)
    for lp in params["layers"]:
        wqkv = jnp.concatenate([lp["wq"], lp["wk"], lp["wv"]], axis=1)
        bqkv = jnp.concatenate([lp["bq"], lp["bk"], lp["bv"]], axis=1)
        bvec = jnp.concatenate([lp["bo"], lp["ln1g"], lp["ln1b"],
                                lp["mb2"], lp["ln2g"], lp["ln2b"]], axis=0)
        h = _layer_math(h, wqkv, lp["wo"], lp["w1"], lp["w2"],
                        bqkv, bvec, lp["mb1"], num_heads=num_heads)
    hn2 = _layernorm(h.reshape(Bp * P, d), params["gn"], params["bn"])
    hn = hn2.reshape(Bp, P, d)
    logits = _score_logits_math(hn2, Bp, P, params["wf0"], params["wf1"],
                                params["bf0"], params["bf1"],
                                params["wf3"], params["bf3"])
    scores = jax.nn.softmax(logits, axis=-1)
    len_keep = int(P * keep_ratio)
    _, ids = jax.lax.top_k(scores, len_keep)
    idx = jnp.broadcast_to(ids[:, :, None], (Bp, len_keep, d))
    x_sel = jnp.take_along_axis(hn, idx, axis=1)
    pos_sel = jnp.take_along_axis(pos_local, idx, axis=1)
    return (x_sel.reshape(bs, n_leads * len_keep, d),
            pos_sel.reshape(bs, n_leads * len_keep, d))


# ----------------------------------------------------------------------------
# deterministic synthetic parameters (PyTorch weights would be transposed to
# (in, out) layout before being passed in)
# ----------------------------------------------------------------------------
def init_params(key, depth, d, mlp_ratio):
    hidden = int(d * mlp_ratio)
    d4 = d // 4
    ks = iter(jax.random.split(key, depth * 16 + 10))

    def dense(fi, fo):
        w = 0.1 * jax.random.normal(next(ks), (fi, fo), jnp.float32)
        b = 0.1 * jax.random.normal(next(ks), (1, fo), jnp.float32)
        return w, b

    def ln():
        g = 1.0 + 0.1 * jax.random.normal(next(ks), (1, d), jnp.float32)
        b = 0.1 * jax.random.normal(next(ks), (1, d), jnp.float32)
        return g, b

    layers = []
    for _ in range(depth):
        wq, bq = dense(d, d); wk, bk = dense(d, d); wv, bv = dense(d, d)
        wo, bo = dense(d, d)
        g1, be1 = ln()
        w1, mb1 = dense(d, hidden); w2, mb2 = dense(hidden, d)
        g2, be2 = ln()
        layers.append(dict(wq=wq, bq=bq, wk=wk, bk=bk, wv=wv, bv=bv,
                           wo=wo, bo=bo, ln1g=g1, ln1b=be1,
                           w1=w1, mb1=mb1, w2=w2, mb2=mb2,
                           ln2g=g2, ln2b=be2))
    gn, bn = ln()
    wf0, bf0 = dense(d, d)
    wf1, bf1 = dense(d, d4)
    wf3 = 0.1 * jax.random.normal(next(ks), (1, d4), jnp.float32)
    bf3 = 0.1 * jax.random.normal(next(ks), (1, 1), jnp.float32)
    return dict(layers=layers, gn=gn, bn=bn, wf0=wf0, bf0=bf0,
                wf1=wf1, bf1=bf1, wf3=wf3, bf3=bf3)


if __name__ == "__main__":
    # small shapes consistent with the module: 4 leads x 8 patches per lead
    bs, n_leads, patches_per_lead = 2, 4, 8
    embed_dim, num_heads, encoder_depth = 32, 2, 2
    mlp_ratio, keep_ratio = 4, 0.5
    total_p = n_leads * patches_per_lead

    key = jax.random.PRNGKey(0)
    kx, kp, kparam = jax.random.split(key, 3)
    x = jax.random.normal(kx, (bs, total_p, embed_dim), jnp.float32)
    pos_emb = 0.1 * jax.random.normal(kp, (bs, total_p, embed_dim), jnp.float32)
    params = init_params(kparam, encoder_depth, embed_dim, mlp_ratio)

    # block_b=2 -> grid=(4,): >=2 "parallel" steps (v7x megacore) + pipelining.
    out_x, out_pos = local_purification_forward(
        x, pos_emb, params, n_leads=n_leads, keep_ratio=keep_ratio,
        num_heads=num_heads, block_b=2)
    out_x, out_pos = jax.block_until_ready((out_x, out_pos))

    ref_x, ref_pos = _reference(x, pos_emb, params, n_leads=n_leads,
                                keep_ratio=keep_ratio, num_heads=num_heads)

    len_keep = int(patches_per_lead * keep_ratio)
    assert out_x.shape == (bs, n_leads * len_keep, embed_dim), out_x.shape
    assert out_pos.shape == (bs, n_leads * len_keep, embed_dim), out_pos.shape
    assert jnp.allclose(out_x, ref_x, atol=5e-3, rtol=5e-3), \
        float(jnp.max(jnp.abs(out_x - ref_x)))
    assert jnp.allclose(out_pos, ref_pos, atol=5e-3, rtol=5e-3), \
        float(jnp.max(jnp.abs(out_pos - ref_pos)))

    print("KERNEL_OK")
</pallas_src>

<mosaic_0001>
module attributes {stable_mosaic.version = 11 : i64} {
  func.func @_fused_forward_kernel(%arg0: i32, %arg1: memref<2x8x32xf32, #tpu.memory_space<vmem>>, %arg2: memref<2x32x96xbf16, #tpu.memory_space<vmem>>, %arg3: memref<2x32x32xbf16, #tpu.memory_space<vmem>>, %arg4: memref<2x32x128xbf16, #tpu.memory_space<vmem>>, %arg5: memref<2x128x32xbf16, #tpu.memory_space<vmem>>, %arg6: memref<2x1x96xf32, #tpu.memory_space<vmem>>, %arg7: memref<2x6x32xf32, #tpu.memory_space<vmem>>, %arg8: memref<2x1x128xf32, #tpu.memory_space<vmem>>, %arg9: memref<32x32xbf16, #tpu.memory_space<vmem>>, %arg10: memref<32x8xbf16, #tpu.memory_space<vmem>>, %arg11: memref<3x32xf32, #tpu.memory_space<vmem>>, %arg12: memref<2x8xf32, #tpu.memory_space<vmem>>, %arg13: memref<1x1xf32, #tpu.memory_space<vmem>>, %arg14: memref<2x8x32xf32, #tpu.memory_space<vmem>>, %arg15: memref<2x1x8xf32, #tpu.memory_space<vmem>>) attributes {dimension_semantics = [#tpu.dimension_semantics<parallel>], iteration_bounds = array<i64: 4>, scalar_prefetch = 0 : i64, scratch_operands = 0 : i64, tpu.core_type = #tpu.core_type<tc>, window_params = [{transform_indices = @transform_0, window_bounds = array<i64: 2, 8, 32>}, {pipeline_mode = #tpu.pipeline_mode<synchronous>, transform_indices = @transform_1, window_bounds = array<i64: 2, 32, 96>}, {pipeline_mode = #tpu.pipeline_mode<synchronous>, transform_indices = @transform_2, window_bounds = array<i64: 2, 32, 32>}, {pipeline_mode = #tpu.pipeline_mode<synchronous>, transform_indices = @transform_3, window_bounds = array<i64: 2, 32, 128>}, {pipeline_mode = #tpu.pipeline_mode<synchronous>, transform_indices = @transform_4, window_bounds = array<i64: 2, 128, 32>}, {pipeline_mode = #tpu.pipeline_mode<synchronous>, transform_indices = @transform_5, window_bounds = array<i64: 2, 1, 96>}, {pipeline_mode = #tpu.pipeline_mode<synchronous>, transform_indices = @transform_6, window_bounds = array<i64: 2, 6, 32>}, {pipeline_mode = #tpu.pipeline_mode<synchronous>, transform_indices = @transform_7, window_bounds = array<i64: 2, 1, 128>}, {pipeline_mode = #tpu.pipeline_mode<synchronous>, transform_indices = @transform_8, window_bounds = array<i64: 32, 32>}, {pipeline_mode = #tpu.pipeline_mode<synchronous>, transform_indices = @transform_9, window_bounds = array<i64: 32, 8>}, {pipeline_mode = #tpu.pipeline_mode<synchronous>, transform_indices = @transform_10, window_bounds = array<i64: 3, 32>}, {pipeline_mode = #tpu.pipeline_mode<synchronous>, transform_indices = @transform_11, window_bounds = array<i64: 2, 8>}, {pipeline_mode = #tpu.pipeline_mode<synchronous>, transform_indices = @transform_12, window_bounds = array<i64: 1, 1>}, {transform_indices = @transform_13, window_bounds = array<i64: 2, 8, 32>}, {transform_indices = @transform_14, window_bounds = array<i64: 2, 1, 8>}]} {
    %c0 = arith.constant 0 : index
    %c0_0 = arith.constant 0 : index
    %c0_1 = arith.constant 0 : index
    %0 = vector.load %arg1[%c0, %c0_0, %c0_1] : memref<2x8x32xf32, #tpu.memory_space<vmem>>, vector<2x8x32xf32>
    %c0_2 = arith.constant 0 : index
    %c0_3 = arith.constant 0 : index
    %c0_4 = arith.constant 0 : index
    %1 = vector.load %arg2[%c0_2, %c0_3, %c0_4] : memref<2x32x96xbf16, #tpu.memory_space<vmem>>, vector<1x32x96xbf16>
    %2 = vector.shape_cast %1 : vector<1x32x96xbf16> to vector<32x96xbf16>
    %c0_5 = arith.constant 0 : index
    %c0_6 = arith.constant 0 : index
    %c0_7 = arith.constant 0 : index
    %3 = vector.load %arg3[%c0_5, %c0_6, %c0_7] : memref<2x32x32xbf16, #tpu.memory_space<vmem>>, vector<1x32x32xbf16>
    %4 = vector.shape_cast %3 : vector<1x32x32xbf16> to vector<32x32xbf16>
    %c0_8 = arith.constant 0 : index
    %c0_9 = arith.constant 0 : index
    %c0_10 = arith.constant 0 : index
    %5 = vector.load %arg4[%c0_8, %c0_9, %c0_10] : memref<2x32x128xbf16, #tpu.memory_space<vmem>>, vector<1x32x128xbf16>
    %6 = vector.shape_cast %5 : vector<1x32x128xbf16> to vector<32x128xbf16>
    %c0_11 = arith.constant 0 : index
    %c0_12 = arith.constant 0 : index
    %c0_13 = arith.constant 0 : index
    %7 = vector.load %arg5[%c0_11, %c0_12, %c0_13] : memref<2x128x32xbf16, #tpu.memory_space<vmem>>, vector<1x128x32xbf16>
    %8 = vector.shape_cast %7 : vector<1x128x32xbf16> to vector<128x32xbf16>
    %c0_14 = arith.constant 0 : index
    %c0_15 = arith.constant 0 : index
    %c0_16 = arith.constant 0 : index
    %9 = vector.load %arg6[%c0_14, %c0_15, %c0_16] : memref<2x1x96xf32, #tpu.memory_space<vmem>>, vector<1x1x96xf32>
    %10 = vector.shape_cast %9 : vector<1x1x96xf32> to vector<1x96xf32>
    %c0_17 = arith.constant 0 : index
    %c0_18 = arith.constant 0 : index
    %c0_19 = arith.constant 0 : index
    %11 = vector.load %arg7[%c0_17, %c0_18, %c0_19] : memref<2x6x32xf32, #tpu.memory_space<vmem>>, vector<1x6x32xf32>
    %12 = vector.shape_cast %11 : vector<1x6x32xf32> to vector<6x32xf32>
    %c0_20 = arith.constant 0 : index
    %c0_21 = arith.constant 0 : index
    %c0_22 = arith.constant 0 : index
    %13 = vector.load %arg8[%c0_20, %c0_21, %c0_22] : memref<2x1x128xf32, #tpu.memory_space<vmem>>, vector<1x1x128xf32>
    %14 = vector.shape_cast %13 : vector<1x1x128xf32> to vector<1x128xf32>
    %15 = vector.shape_cast %0 : vector<2x8x32xf32> to vector<16x32xf32>
    %16 = vector.extract_strided_slice %12 {offsets = [0, 0], sizes = [1, 32], strides = [1, 1]} : vector<6x32xf32> to vector<1x32xf32>
    %17 = vector.extract_strided_slice %12 {offsets = [1, 0], sizes = [1, 32], strides = [1, 1]} : vector<6x32xf32> to vector<1x32xf32>
    %18 = vector.extract_strided_slice %12 {offsets = [2, 0], sizes = [1, 32], strides = [1, 1]} : vector<6x32xf32> to vector<1x32xf32>
    %19 = vector.extract_strided_slice %12 {offsets = [3, 0], sizes = [1, 32], strides = [1, 1]} : vector<6x32xf32> to vector<1x32xf32>
    %20 = vector.extract_strided_slice %12 {offsets = [4, 0], sizes = [1, 32], strides = [1, 1]} : vector<6x32xf32> to vector<1x32xf32>
    %21 = vector.extract_strided_slice %12 {offsets = [5, 0], sizes = [1, 32], strides = [1, 1]} : vector<6x32xf32> to vector<1x32xf32>
    %22 = arith.truncf %15 : vector<16x32xf32> to vector<16x32xbf16>
    %cst = arith.constant dense<0.000000e+00> : vector<16x96xf32>
    %23 = tpu.matmul %22, %2, %cst {dimension_numbers = #tpu.dot_dimension_numbers<[1], [0], [0], [1], [0, 0, 1, 1], [], []>} : vector<16x32xbf16>, vector<32x96xbf16>, vector<16x96xf32> -> vector<16x96xf32>
    %24 = vector.broadcast %10 : vector<1x96xf32> to vector<16x96xf32>
    %25 = arith.addf %23, %24 : vector<16x96xf32>
    %26 = vector.extract_strided_slice %25 {offsets = [0, 0], sizes = [16, 32], strides = [1, 1]} : vector<16x96xf32> to vector<16x32xf32>
    %27 = vector.shape_cast %26 : vector<16x32xf32> to vector<2x8x32xf32>
    %cst_23 = arith.constant 2.500000e-01 : f32
    %28 = vector.broadcast %cst_23 : f32 to vector<2x8x32xf32>
    %29 = arith.mulf %27, %28 : vector<2x8x32xf32>
    %30 = vector.extract_strided_slice %25 {offsets = [0, 32], sizes = [16, 32], strides = [1, 1]} : vector<16x96xf32> to vector<16x32xf32>
    %31 = vector.shape_cast %30 : vector<16x32xf32> to vector<2x8x32xf32>
    %32 = vector.extract_strided_slice %25 {offsets = [0, 64], sizes = [16, 32], strides = [1, 1]} : vector<16x96xf32> to vector<16x32xf32>
    %33 = vector.shape_cast %32 : vector<16x32xf32> to vector<2x8x32xf32>
    %cst_24 = arith.constant 0.000000e+00 : f32
    %34 = vector.broadcast %cst_24 : f32 to vector<16x32xf32>
    %35 = vector.extract_strided_slice %29 {offsets = [0, 0, 0], sizes = [2, 8, 16], strides = [1, 1, 1]} : vector<2x8x32xf32> to vector<2x8x16xf32>
    %36 = arith.truncf %35 : vector<2x8x16xf32> to vector<2x8x16xbf16>
    %37 = vector.extract_strided_slice %31 {offsets = [0, 0, 0], sizes = [2, 8, 16], strides = [1, 1, 1]} : vector<2x8x32xf32> to vector<2x8x16xf32>
    %38 = arith.truncf %37 : vector<2x8x16xf32> to vector<2x8x16xbf16>
    "tpu.trace_start"() <{level = 10 : i32, message = "bld,bmd->blm"}> : () -> ()
    %cst_25 = arith.constant dense<0.000000e+00> : vector<2x8x8xf32>
    %39 = tpu.matmul %36, %38, %cst_25 {dimension_numbers = #tpu.dot_dimension_numbers<[2], [2], [1], [1], [0, 0, 0, 1, 1, 1], [0], [0]>} : vector<2x8x16xbf16>, vector<2x8x16xbf16>, vector<2x8x8xf32> -> vector<2x8x8xf32>
    "tpu.trace_stop"() : () -> ()
    %cst_26 = arith.constant dense<0xFF800000> : vector<2x8xf32>
    %40 = vector.multi_reduction <maximumf>, %39, %cst_26 [2] : vector<2x8x8xf32> to vector<2x8xf32>
    %41 = vector.shape_cast %40 : vector<2x8xf32> to vector<2x8x1xf32>
    %42 = vector.broadcast %41 : vector<2x8x1xf32> to vector<2x8x8xf32>
    %43 = arith.subf %39, %42 : vector<2x8x8xf32>
    %44 = math.exp %43 : vector<2x8x8xf32>
    %cst_27 = arith.constant dense<0.000000e+00> : vector<2x8xf32>
    %45 = vector.multi_reduction <add>, %44, %cst_27 [2] : vector<2x8x8xf32> to vector<2x8xf32>
    %46 = vector.shape_cast %45 : vector<2x8xf32> to vector<2x8x1xf32>
    %47 = vector.broadcast %46 : vector<2x8x1xf32> to vector<2x8x8xf32>
    %48 = arith.divf %44, %47 : vector<2x8x8xf32>
    %49 = arith.truncf %48 : vector<2x8x8xf32> to vector<2x8x8xbf16>
    %50 = vector.extract_strided_slice %33 {offsets = [0, 0, 0], sizes = [2, 8, 16], strides = [1, 1, 1]} : vector<2x8x32xf32> to vector<2x8x16xf32>
    %51 = arith.truncf %50 : vector<2x8x16xf32> to vector<2x8x16xbf16>
    "tpu.trace_start"() <{level = 10 : i32, message = "blm,bmd->bld"}> : () -> ()
    %cst_28 = arith.constant dense<0.000000e+00> : vector<2x8x16xf32>
    %52 = tpu.matmul %49, %51, %cst_28 {dimension_numbers = #tpu.dot_dimension_numbers<[2], [1], [1], [2], [0, 0, 0, 1, 1, 2], [0], [0]>} : vector<2x8x8xbf16>, vector<2x8x16xbf16>, vector<2x8x16xf32> -> vector<2x8x16xf32>
    "tpu.trace_stop"() : () -> ()
    %53 = vector.shape_cast %52 : vector<2x8x16xf32> to vector<16x16xf32>
    %54 = vector.extract_strided_slice %4 {offsets = [0, 0], sizes = [16, 32], strides = [1, 1]} : vector<32x32xbf16> to vector<16x32xbf16>
    %55 = arith.truncf %53 : vector<16x16xf32> to vector<16x16xbf16>
    %cst_29 = arith.constant dense<0.000000e+00> : vector<16x32xf32>
    %56 = tpu.matmul %55, %54, %cst_29 {dimension_numbers = #tpu.dot_dimension_numbers<[1], [0], [0], [1], [0, 0, 1, 1], [], []>} : vector<16x16xbf16>, vector<16x32xbf16>, vector<16x32xf32> -> vector<16x32xf32>
    %57 = arith.addf %34, %56 : vector<16x32xf32>
    %58 = vector.extract_strided_slice %29 {offsets = [0, 0, 16], sizes = [2, 8, 16], strides = [1, 1, 1]} : vector<2x8x32xf32> to vector<2x8x16xf32>
    %59 = arith.truncf %58 : vector<2x8x16xf32> to vector<2x8x16xbf16>
    %60 = vector.extract_strided_slice %31 {offsets = [0, 0, 16], sizes = [2, 8, 16], strides = [1, 1, 1]} : vector<2x8x32xf32> to vector<2x8x16xf32>
    %61 = arith.truncf %60 : vector<2x8x16xf32> to vector<2x8x16xbf16>
    "tpu.trace_start"() <{level = 10 : i32, message = "bld,bmd->blm"}> : () -> ()
    %cst_30 = arith.constant dense<0.000000e+00> : vector<2x8x8xf32>
    %62 = tpu.matmul %59, %61, %cst_30 {dimension_numbers = #tpu.dot_dimension_numbers<[2], [2], [1], [1], [0, 0, 0, 1, 1, 1], [0], [0]>} : vector<2x8x16xbf16>, vector<2x8x16xbf16>, vector<2x8x8xf32> -> vector<2x8x8xf32>
    "tpu.trace_stop"() : () -> ()
    %cst_31 = arith.constant dense<0xFF800000> : vector<2x8xf32>
    %63 = vector.multi_reduction <maximumf>, %62, %cst_31 [2] : vector<2x8x8xf32> to vector<2x8xf32>
    %64 = vector.shape_cast %63 : vector<2x8xf32> to vector<2x8x1xf32>
    %65 = vector.broadcast %64 : vector<2x8x1xf32> to vector<2x8x8xf32>
    %66 = arith.subf %62, %65 : vector<2x8x8xf32>
    %67 = math.exp %66 : vector<2x8x8xf32>
    %cst_32 = arith.constant dense<0.000000e+00> : vector<2x8xf32>
    %68 = vector.multi_reduction <add>, %67, %cst_32 [2] : vector<2x8x8xf32> to vector<2x8xf32>
    %69 = vector.shape_cast %68 : vector<2x8xf32> to vector<2x8x1xf32>
    %70 = vector.broadcast %69 : vector<2x8x1xf32> to vector<2x8x8xf32>
    %71 = arith.divf %67, %70 : vector<2x8x8xf32>
    %72 = arith.truncf %71 : vector<2x8x8xf32> to vector<2x8x8xbf16>
    %73 = vector.extract_strided_slice %33 {offsets = [0, 0, 16], sizes = [2, 8, 16], strides = [1, 1, 1]} : vector<2x8x32xf32> to vector<2x8x16xf32>
    %74 = arith.truncf %73 : vector<2x8x16xf32> to vector<2x8x16xbf16>
    "tpu.trace_start"() <{level = 10 : i32, message = "blm,bmd->bld"}> : () -> ()
    %cst_33 = arith.constant dense<0.000000e+00> : vector<2x8x16xf32>
    %75 = tpu.matmul %72, %74, %cst_33 {dimension_numbers = #tpu.dot_dimension_numbers<[2], [1], [1], [2], [0, 0, 0, 1, 1, 2], [0], [0]>} : vector<2x8x8xbf16>, vector<2x8x16xbf16>, vector<2x8x16xf32> -> vector<2x8x16xf32>
    "tpu.trace_stop"() : () -> ()
    %76 = vector.shape_cast %75 : vector<2x8x16xf32> to vector<16x16xf32>
    %77 = vector.extract_strided_slice %4 {offsets = [16, 0], sizes = [16, 32], strides = [1, 1]} : vector<32x32xbf16> to vector<16x32xbf16>
    %78 = arith.truncf %76 : vector<16x16xf32> to vector<16x16xbf16>
    %cst_34 = arith.constant dense<0.000000e+00> : vector<16x32xf32>
    %79 = tpu.matmul %78, %77, %cst_34 {dimension_numbers = #tpu.dot_dimension_numbers<[1], [0], [0], [1], [0, 0, 1, 1], [], []>} : vector<16x16xbf16>, vector<16x32xbf16>, vector<16x32xf32> -> vector<16x32xf32>
    %80 = arith.addf %57, %79 : vector<16x32xf32>
    %81 = vector.broadcast %16 : vector<1x32xf32> to vector<16x32xf32>
    %82 = arith.addf %80, %81 : vector<16x32xf32>
    %cst_35 = arith.constant dense<0.000000e+00> : vector<16xf32>
    %83 = vector.multi_reduction <add>, %82, %cst_35 [1] : vector<16x32xf32> to vector<16xf32>
    %84 = vector.shape_cast %83 : vector<16xf32> to vector<16x1xf32>
    %cst_36 = arith.constant 3.200000e+01 : f32
    %85 = vector.broadcast %cst_36 : f32 to vector<16x1xf32>
    %86 = arith.divf %84, %85 : vector<16x1xf32>
    %87 = vector.broadcast %86 : vector<16x1xf32> to vector<16x32xf32>
    %88 = arith.subf %82, %87 : vector<16x32xf32>
    %89 = arith.mulf %88, %88 : vector<16x32xf32>
    %cst_37 = arith.constant dense<0.000000e+00> : vector<16xf32>
    %90 = vector.multi_reduction <add>, %89, %cst_37 [1] : vector<16x32xf32> to vector<16xf32>
    %91 = vector.shape_cast %90 : vector<16xf32> to vector<16x1xf32>
    %cst_38 = arith.constant 3.200000e+01 : f32
    %92 = vector.broadcast %cst_38 : f32 to vector<16x1xf32>
    %93 = arith.divf %91, %92 : vector<16x1xf32>
    %cst_39 = arith.constant 9.99999974E-6 : f32
    %94 = vector.broadcast %cst_39 : f32 to vector<16x1xf32>
    %95 = arith.addf %93, %94 : vector<16x1xf32>
    %96 = math.rsqrt %95 : vector<16x1xf32>
    %97 = vector.broadcast %96 : vector<16x1xf32> to vector<16x32xf32>
    %98 = arith.mulf %88, %97 : vector<16x32xf32>
    %99 = vector.broadcast %17 : vector<1x32xf32> to vector<16x32xf32>
    %100 = arith.mulf %98, %99 : vector<16x32xf32>
    %101 = vector.broadcast %18 : vector<1x32xf32> to vector<16x32xf32>
    %102 = arith.addf %100, %101 : vector<16x32xf32>
    %103 = arith.addf %15, %102 : vector<16x32xf32>
    %104 = arith.truncf %103 : vector<16x32xf32> to vector<16x32xbf16>
    %cst_40 = arith.constant dense<0.000000e+00> : vector<16x128xf32>
    %105 = tpu.matmul %104, %6, %cst_40 {dimension_numbers = #tpu.dot_dimension_numbers<[1], [0], [0], [1], [0, 0, 1, 1], [], []>} : vector<16x32xbf16>, vector<32x128xbf16>, vector<16x128xf32> -> vector<16x128xf32>
    %106 = vector.broadcast %14 : vector<1x128xf32> to vector<16x128xf32>
    %107 = arith.addf %105, %106 : vector<16x128xf32>
    %cst_41 = arith.constant 5.000000e-01 : f32
    %108 = vector.broadcast %cst_41 : f32 to vector<16x128xf32>
    %109 = arith.mulf %108, %107 : vector<16x128xf32>
    %cst_42 = arith.constant 4.471500e-02 : f32
    %110 = vector.broadcast %cst_42 : f32 to vector<16x128xf32>
    %111 = arith.mulf %110, %107 : vector<16x128xf32>
    %112 = arith.mulf %111, %107 : vector<16x128xf32>
    %113 = arith.mulf %112, %107 : vector<16x128xf32>
    %114 = arith.addf %107, %113 : vector<16x128xf32>
    %cst_43 = arith.constant 0.797884583 : f32
    %115 = vector.broadcast %cst_43 : f32 to vector<16x128xf32>
    %116 = arith.mulf %115, %114 : vector<16x128xf32>
    %117 = math.tanh %116 : vector<16x128xf32>
    %cst_44 = arith.constant 1.000000e+00 : f32
    %118 = vector.broadcast %cst_44 : f32 to vector<16x128xf32>
    %119 = arith.addf %118, %117 : vector<16x128xf32>
    %120 = arith.mulf %109, %119 : vector<16x128xf32>
    %121 = arith.truncf %120 : vector<16x128xf32> to vector<16x128xbf16>
    %cst_45 = arith.constant dense<0.000000e+00> : vector<16x32xf32>
    %122 = tpu.matmul %121, %8, %cst_45 {dimension_numbers = #tpu.dot_dimension_numbers<[1], [0], [0], [1], [0, 0, 1, 1], [], []>} : vector<16x128xbf16>, vector<128x32xbf16>, vector<16x32xf32> -> vector<16x32xf32>
    %123 = vector.broadcast %19 : vector<1x32xf32> to vector<16x32xf32>
    %124 = arith.addf %122, %123 : vector<16x32xf32>
    %cst_46 = arith.constant dense<0.000000e+00> : vector<16xf32>
    %125 = vector.multi_reduction <add>, %124, %cst_46 [1] : vector<16x32xf32> to vector<16xf32>
    %126 = vector.shape_cast %125 : vector<16xf32> to vector<16x1xf32>
    %cst_47 = arith.constant 3.200000e+01 : f32
    %127 = vector.broadcast %cst_47 : f32 to vector<16x1xf32>
    %128 = arith.divf %126, %127 : vector<16x1xf32>
    %129 = vector.broadcast %128 : vector<16x1xf32> to vector<16x32xf32>
    %130 = arith.subf %124, %129 : vector<16x32xf32>
    %131 = arith.mulf %130, %130 : vector<16x32xf32>
    %cst_48 = arith.constant dense<0.000000e+00> : vector<16xf32>
    %132 = vector.multi_reduction <add>, %131, %cst_48 [1] : vector<16x32xf32> to vector<16xf32>
    %133 = vector.shape_cast %132 : vector<16xf32> to vector<16x1xf32>
    %cst_49 = arith.constant 3.200000e+01 : f32
    %134 = vector.broadcast %cst_49 : f32 to vector<16x1xf32>
    %135 = arith.divf %133, %134 : vector<16x1xf32>
    %cst_50 = arith.constant 9.99999974E-6 : f32
    %136 = vector.broadcast %cst_50 : f32 to vector<16x1xf32>
    %137 = arith.addf %135, %136 : vector<16x1xf32>
    %138 = math.rsqrt %137 : vector<16x1xf32>
    %139 = vector.broadcast %138 : vector<16x1xf32> to vector<16x32xf32>
    %140 = arith.mulf %130, %139 : vector<16x32xf32>
    %141 = vector.broadcast %20 : vector<1x32xf32> to vector<16x32xf32>
    %142 = arith.mulf %140, %141 : vector<16x32xf32>
    %143 = vector.broadcast %21 : vector<1x32xf32> to vector<16x32xf32>
    %144 = arith.addf %142, %143 : vector<16x32xf32>
    %145 = arith.addf %103, %144 : vector<16x32xf32>
    %146 = vector.shape_cast %145 : vector<16x32xf32> to vector<2x8x32xf32>
    %c1 = arith.constant 1 : index
    %c0_51 = arith.constant 0 : index
    %c0_52 = arith.constant 0 : index
    %147 = vector.load %arg2[%c1, %c0_51, %c0_52] : memref<2x32x96xbf16, #tpu.memory_space<vmem>>, vector<1x32x96xbf16>
    %148 = vector.shape_cast %147 : vector<1x32x96xbf16> to vector<32x96xbf16>
    %c1_53 = arith.constant 1 : index
    %c0_54 = arith.constant 0 : index
    %c0_55 = arith.constant 0 : index
    %149 = vector.load %arg3[%c1_53, %c0_54, %c0_55] : memref<2x32x32xbf16, #tpu.memory_space<vmem>>, vector<1x32x32xbf16>
    %150 = vector.shape_cast %149 : vector<1x32x32xbf16> to vector<32x32xbf16>
    %c1_56 = arith.constant 1 : index
    %c0_57 = arith.constant 0 : index
    %c0_58 = arith.constant 0 : index
    %151 = vector.load %arg4[%c1_56, %c0_57, %c0_58] : memref<2x32x128xbf16, #tpu.memory_space<vmem>>, vector<1x32x128xbf16>
    %152 = vector.shape_cast %151 : vector<1x32x128xbf16> to vector<32x128xbf16>
    %c1_59 = arith.constant 1 : index
    %c0_60 = arith.constant 0 : index
    %c0_61 = arith.constant 0 : index
    %153 = vector.load %arg5[%c1_59, %c0_60, %c0_61] : memref<2x128x32xbf16, #tpu.memory_space<vmem>>, vector<1x128x32xbf16>
    %154 = vector.shape_cast %153 : vector<1x128x32xbf16> to vector<128x32xbf16>
    %c1_62 = arith.constant 1 : index
    %c0_63 = arith.constant 0 : index
    %c0_64 = arith.constant 0 : index
    %155 = vector.load %arg6[%c1_62, %c0_63, %c0_64] : memref<2x1x96xf32, #tpu.memory_space<vmem>>, vector<1x1x96xf32>
    %156 = vector.shape_cast %155 : vector<1x1x96xf32> to vector<1x96xf32>
    %c1_65 = arith.constant 1 : index
    %c0_66 = arith.constant 0 : index
    %c0_67 = arith.constant 0 : index
    %157 = vector.load %arg7[%c1_65, %c0_66, %c0_67] : memref<2x6x32xf32, #tpu.memory_space<vmem>>, vector<1x6x32xf32>
    %158 = vector.shape_cast %157 : vector<1x6x32xf32> to vector<6x32xf32>
    %c1_68 = arith.constant 1 : index
    %c0_69 = arith.constant 0 : index
    %c0_70 = arith.constant 0 : index
    %159 = vector.load %arg8[%c1_68, %c0_69, %c0_70] : memref<2x1x128xf32, #tpu.memory_space<vmem>>, vector<1x1x128xf32>
    %160 = vector.shape_cast %159 : vector<1x1x128xf32> to vector<1x128xf32>
    %161 = vector.shape_cast %146 : vector<2x8x32xf32> to vector<16x32xf32>
    %162 = vector.extract_strided_slice %158 {offsets = [0, 0], sizes = [1, 32], strides = [1, 1]} : vector<6x32xf32> to vector<1x32xf32>
    %163 = vector.extract_strided_slice %158 {offsets = [1, 0], sizes = [1, 32], strides = [1, 1]} : vector<6x32xf32> to vector<1x32xf32>
    %164 = vector.extract_strided_slice %158 {offsets = [2, 0], sizes = [1, 32], strides = [1, 1]} : vector<6x32xf32> to vector<1x32xf32>
    %165 = vector.extract_strided_slice %158 {offsets = [3, 0], sizes = [1, 32], strides = [1, 1]} : vector<6x32xf32> to vector<1x32xf32>
    %166 = vector.extract_strided_slice %158 {offsets = [4, 0], sizes = [1, 32], strides = [1, 1]} : vector<6x32xf32> to vector<1x32xf32>
    %167 = vector.extract_strided_slice %158 {offsets = [5, 0], sizes = [1, 32], strides = [1, 1]} : vector<6x32xf32> to vector<1x32xf32>
    %168 = arith.truncf %161 : vector<16x32xf32> to vector<16x32xbf16>
    %cst_71 = arith.constant dense<0.000000e+00> : vector<16x96xf32>
    %169 = tpu.matmul %168, %148, %cst_71 {dimension_numbers = #tpu.dot_dimension_numbers<[1], [0], [0], [1], [0, 0, 1, 1], [], []>} : vector<16x32xbf16>, vector<32x96xbf16>, vector<16x96xf32> -> vector<16x96xf32>
    %170 = vector.broadcast %156 : vector<1x96xf32> to vector<16x96xf32>
    %171 = arith.addf %169, %170 : vector<16x96xf32>
    %172 = vector.extract_strided_slice %171 {offsets = [0, 0], sizes = [16, 32], strides = [1, 1]} : vector<16x96xf32> to vector<16x32xf32>
    %173 = vector.shape_cast %172 : vector<16x32xf32> to vector<2x8x32xf32>
    %cst_72 = arith.constant 2.500000e-01 : f32
    %174 = vector.broadcast %cst_72 : f32 to vector<2x8x32xf32>
    %175 = arith.mulf %173, %174 : vector<2x8x32xf32>
    %176 = vector.extract_strided_slice %171 {offsets = [0, 32], sizes = [16, 32], strides = [1, 1]} : vector<16x96xf32> to vector<16x32xf32>
    %177 = vector.shape_cast %176 : vector<16x32xf32> to vector<2x8x32xf32>
    %178 = vector.extract_strided_slice %171 {offsets = [0, 64], sizes = [16, 32], strides = [1, 1]} : vector<16x96xf32> to vector<16x32xf32>
    %179 = vector.shape_cast %178 : vector<16x32xf32> to vector<2x8x32xf32>
    %cst_73 = arith.constant 0.000000e+00 : f32
    %180 = vector.broadcast %cst_73 : f32 to vector<16x32xf32>
    %181 = vector.extract_strided_slice %175 {offsets = [0, 0, 0], sizes = [2, 8, 16], strides = [1, 1, 1]} : vector<2x8x32xf32> to vector<2x8x16xf32>
    %182 = arith.truncf %181 : vector<2x8x16xf32> to vector<2x8x16xbf16>
    %183 = vector.extract_strided_slice %177 {offsets = [0, 0, 0], sizes = [2, 8, 16], strides = [1, 1, 1]} : vector<2x8x32xf32> to vector<2x8x16xf32>
    %184 = arith.truncf %183 : vector<2x8x16xf32> to vector<2x8x16xbf16>
    "tpu.trace_start"() <{level = 10 : i32, message = "bld,bmd->blm"}> : () -> ()
    %cst_74 = arith.constant dense<0.000000e+00> : vector<2x8x8xf32>
    %185 = tpu.matmul %182, %184, %cst_74 {dimension_numbers = #tpu.dot_dimension_numbers<[2], [2], [1], [1], [0, 0, 0, 1, 1, 1], [0], [0]>} : vector<2x8x16xbf16>, vector<2x8x16xbf16>, vector<2x8x8xf32> -> vector<2x8x8xf32>
    "tpu.trace_stop"() : () -> ()
    %cst_75 = arith.constant dense<0xFF800000> : vector<2x8xf32>
    %186 = vector.multi_reduction <maximumf>, %185, %cst_75 [2] : vector<2x8x8xf32> to vector<2x8xf32>
    %187 = vector.shape_cast %186 : vector<2x8xf32> to vector<2x8x1xf32>
    %188 = vector.broadcast %187 : vector<2x8x1xf32> to vector<2x8x8xf32>
    %189 = arith.subf %185, %188 : vector<2x8x8xf32>
    %190 = math.exp %189 : vector<2x8x8xf32>
    %cst_76 = arith.constant dense<0.000000e+00> : vector<2x8xf32>
    %191 = vector.multi_reduction <add>, %190, %cst_76 [2] : vector<2x8x8xf32> to vector<2x8xf32>
    %192 = vector.shape_cast %191 : vector<2x8xf32> to vector<2x8x1xf32>
    %193 = vector.broadcast %192 : vector<2x8x1xf32> to vector<2x8x8xf32>
    %194 = arith.divf %190, %193 : vector<2x8x8xf32>
    %195 = arith.truncf %194 : vector<2x8x8xf32> to vector<2x8x8xbf16>
    %196 = vector.extract_strided_slice %179 {offsets = [0, 0, 0], sizes = [2, 8, 16], strides = [1, 1, 1]} : vector<2x8x32xf32> to vector<2x8x16xf32>
    %197 = arith.truncf %196 : vector<2x8x16xf32> to vector<2x8x16xbf16>
    "tpu.trace_start"() <{level = 10 : i32, message = "blm,bmd->bld"}> : () -> ()
    %cst_77 = arith.constant dense<0.000000e+00> : vector<2x8x16xf32>
    %198 = tpu.matmul %195, %197, %cst_77 {dimension_numbers = #tpu.dot_dimension_numbers<[2], [1], [1], [2], [0, 0, 0, 1, 1, 2], [0], [0]>} : vector<2x8x8xbf16>, vector<2x8x16xbf16>, vector<2x8x16xf32> -> vector<2x8x16xf32>
    "tpu.trace_stop"() : () -> ()
    %199 = vector.shape_cast %198 : vector<2x8x16xf32> to vector<16x16xf32>
    %200 = vector.extract_strided_slice %150 {offsets = [0, 0], sizes = [16, 32], strides = [1, 1]} : vector<32x32xbf16> to vector<16x32xbf16>
    %201 = arith.truncf %199 : vector<16x16xf32> to vector<16x16xbf16>
    %cst_78 = arith.constant dense<0.000000e+00> : vector<16x32xf32>
    %202 = tpu.matmul %201, %200, %cst_78 {dimension_numbers = #tpu.dot_dimension_numbers<[1], [0], [0], [1], [0, 0, 1, 1], [], []>} : vector<16x16xbf16>, vector<16x32xbf16>, vector<16x32xf32> -> vector<16x32xf32>
    %203 = arith.addf %180, %202 : vector<16x32xf32>
    %204 = vector.extract_strided_slice %175 {offsets = [0, 0, 16], sizes = [2, 8, 16], strides = [1, 1, 1]} : vector<2x8x32xf32> to vector<2x8x16xf32>
    %205 = arith.truncf %204 : vector<2x8x16xf32> to vector<2x8x16xbf16>
    %206 = vector.extract_strided_slice %177 {offsets = [0, 0, 16], sizes = [2, 8, 16], strides = [1, 1, 1]} : vector<2x8x32xf32> to vector<2x8x16xf32>
    %207 = arith.truncf %206 : vector<2x8x16xf32> to vector<2x8x16xbf16>
    "tpu.trace_start"() <{level = 10 : i32, message = "bld,bmd->blm"}> : () -> ()
    %cst_79 = arith.constant dense<0.000000e+00> : vector<2x8x8xf32>
    %208 = tpu.matmul %205, %207, %cst_79 {dimension_numbers = #tpu.dot_dimension_numbers<[2], [2], [1], [1], [0, 0, 0, 1, 1, 1], [0], [0]>} : vector<2x8x16xbf16>, vector<2x8x16xbf16>, vector<2x8x8xf32> -> vector<2x8x8xf32>
    "tpu.trace_stop"() : () -> ()
    %cst_80 = arith.constant dense<0xFF800000> : vector<2x8xf32>
    %209 = vector.multi_reduction <maximumf>, %208, %cst_80 [2] : vector<2x8x8xf32> to vector<2x8xf32>
    %210 = vector.shape_cast %209 : vector<2x8xf32> to vector<2x8x1xf32>
    %211 = vector.broadcast %210 : vector<2x8x1xf32> to vector<2x8x8xf32>
    %212 = arith.subf %208, %211 : vector<2x8x8xf32>
    %213 = math.exp %212 : vector<2x8x8xf32>
    %cst_81 = arith.constant dense<0.000000e+00> : vector<2x8xf32>
    %214 = vector.multi_reduction <add>, %213, %cst_81 [2] : vector<2x8x8xf32> to vector<2x8xf32>
    %215 = vector.shape_cast %214 : vector<2x8xf32> to vector<2x8x1xf32>
    %216 = vector.broadcast %215 : vector<2x8x1xf32> to vector<2x8x8xf32>
    %217 = arith.divf %213, %216 : vector<2x8x8xf32>
    %218 = arith.truncf %217 : vector<2x8x8xf32> to vector<2x8x8xbf16>
    %219 = vector.extract_strided_slice %179 {offsets = [0, 0, 16], sizes = [2, 8, 16], strides = [1, 1, 1]} : vector<2x8x32xf32> to vector<2x8x16xf32>
    %220 = arith.truncf %219 : vector<2x8x16xf32> to vector<2x8x16xbf16>
    "tpu.trace_start"() <{level = 10 : i32, message = "blm,bmd->bld"}> : () -> ()
    %cst_82 = arith.constant dense<0.000000e+00> : vector<2x8x16xf32>
    %221 = tpu.matmul %218, %220, %cst_82 {dimension_numbers = #tpu.dot_dimension_numbers<[2], [1], [1], [2], [0, 0, 0, 1, 1, 2], [0], [0]>} : vector<2x8x8xbf16>, vector<2x8x16xbf16>, vector<2x8x16xf32> -> vector<2x8x16xf32>
    "tpu.trace_stop"() : () -> ()
    %222 = vector.shape_cast %221 : vector<2x8x16xf32> to vector<16x16xf32>
    %223 = vector.extract_strided_slice %150 {offsets = [16, 0], sizes = [16, 32], strides = [1, 1]} : vector<32x32xbf16> to vector<16x32xbf16>
    %224 = arith.truncf %222 : vector<16x16xf32> to vector<16x16xbf16>
    %cst_83 = arith.constant dense<0.000000e+00> : vector<16x32xf32>
    %225 = tpu.matmul %224, %223, %cst_83 {dimension_numbers = #tpu.dot_dimension_numbers<[1], [0], [0], [1], [0, 0, 1, 1], [], []>} : vector<16x16xbf16>, vector<16x32xbf16>, vector<16x32xf32> -> vector<16x32xf32>
    %226 = arith.addf %203, %225 : vector<16x32xf32>
    %227 = vector.broadcast %162 : vector<1x32xf32> to vector<16x32xf32>
    %228 = arith.addf %226, %227 : vector<16x32xf32>
    %cst_84 = arith.constant dense<0.000000e+00> : vector<16xf32>
    %229 = vector.multi_reduction <add>, %228, %cst_84 [1] : vector<16x32xf32> to vector<16xf32>
    %230 = vector.shape_cast %229 : vector<16xf32> to vector<16x1xf32>
    %cst_85 = arith.constant 3.200000e+01 : f32
    %231 = vector.broadcast %cst_85 : f32 to vector<16x1xf32>
    %232 = arith.divf %230, %231 : vector<16x1xf32>
    %233 = vector.broadcast %232 : vector<16x1xf32> to vector<16x32xf32>
    %234 = arith.subf %228, %233 : vector<16x32xf32>
    %235 = arith.mulf %234, %234 : vector<16x32xf32>
    %cst_86 = arith.constant dense<0.000000e+00> : vector<16xf32>
    %236 = vector.multi_reduction <add>, %235, %cst_86 [1] : vector<16x32xf32> to vector<16xf32>
    %237 = vector.shape_cast %236 : vector<16xf32> to vector<16x1xf32>
    %cst_87 = arith.constant 3.200000e+01 : f32
    %238 = vector.broadcast %cst_87 : f32 to vector<16x1xf32>
    %239 = arith.divf %237, %238 : vector<16x1xf32>
    %cst_88 = arith.constant 9.99999974E-6 : f32
    %240 = vector.broadcast %cst_88 : f32 to vector<16x1xf32>
    %241 = arith.addf %239, %240 : vector<16x1xf32>
    %242 = math.rsqrt %241 : vector<16x1xf32>
    %243 = vector.broadcast %242 : vector<16x1xf32> to vector<16x32xf32>
    %244 = arith.mulf %234, %243 : vector<16x32xf32>
    %245 = vector.broadcast %163 : vector<1x32xf32> to vector<16x32xf32>
    %246 = arith.mulf %244, %245 : vector<16x32xf32>
    %247 = vector.broadcast %164 : vector<1x32xf32> to vector<16x32xf32>
    %248 = arith.addf %246, %247 : vector<16x32xf32>
    %249 = arith.addf %161, %248 : vector<16x32xf32>
    %250 = arith.truncf %249 : vector<16x32xf32> to vector<16x32xbf16>
    %cst_89 = arith.constant dense<0.000000e+00> : vector<16x128xf32>
    %251 = tpu.matmul %250, %152, %cst_89 {dimension_numbers = #tpu.dot_dimension_numbers<[1], [0], [0], [1], [0, 0, 1, 1], [], []>} : vector<16x32xbf16>, vector<32x128xbf16>, vector<16x128xf32> -> vector<16x128xf32>
    %252 = vector.broadcast %160 : vector<1x128xf32> to vector<16x128xf32>
    %253 = arith.addf %251, %252 : vector<16x128xf32>
    %cst_90 = arith.constant 5.000000e-01 : f32
    %254 = vector.broadcast %cst_90 : f32 to vector<16x128xf32>
    %255 = arith.mulf %254, %253 : vector<16x128xf32>
    %cst_91 = arith.constant 4.471500e-02 : f32
    %256 = vector.broadcast %cst_91 : f32 to vector<16x128xf32>
    %257 = arith.mulf %256, %253 : vector<16x128xf32>
    %258 = arith.mulf %257, %253 : vector<16x128xf32>
    %259 = arith.mulf %258, %253 : vector<16x128xf32>
    %260 = arith.addf %253, %259 : vector<16x128xf32>
    %cst_92 = arith.constant 0.797884583 : f32
    %261 = vector.broadcast %cst_92 : f32 to vector<16x128xf32>
    %262 = arith.mulf %261, %260 : vector<16x128xf32>
    %263 = math.tanh %262 : vector<16x128xf32>
    %cst_93 = arith.constant 1.000000e+00 : f32
    %264 = vector.broadcast %cst_93 : f32 to vector<16x128xf32>
    %265 = arith.addf %264, %263 : vector<16x128xf32>
    %266 = arith.mulf %255, %265 : vector<16x128xf32>
    %267 = arith.truncf %266 : vector<16x128xf32> to vector<16x128xbf16>
    %cst_94 = arith.constant dense<0.000000e+00> : vector<16x32xf32>
    %268 = tpu.matmul %267, %154, %cst_94 {dimension_numbers = #tpu.dot_dimension_numbers<[1], [0], [0], [1], [0, 0, 1, 1], [], []>} : vector<16x128xbf16>, vector<128x32xbf16>, vector<16x32xf32> -> vector<16x32xf32>
    %269 = vector.broadcast %165 : vector<1x32xf32> to vector<16x32xf32>
    %270 = arith.addf %268, %269 : vector<16x32xf32>
    %cst_95 = arith.constant dense<0.000000e+00> : vector<16xf32>
    %271 = vector.multi_reduction <add>, %270, %cst_95 [1] : vector<16x32xf32> to vector<16xf32>
    %272 = vector.shape_cast %271 : vector<16xf32> to vector<16x1xf32>
    %cst_96 = arith.constant 3.200000e+01 : f32
    %273 = vector.broadcast %cst_96 : f32 to vector<16x1xf32>
    %274 = arith.divf %272, %273 : vector<16x1xf32>
    %275 = vector.broadcast %274 : vector<16x1xf32> to vector<16x32xf32>
    %276 = arith.subf %270, %275 : vector<16x32xf32>
    %277 = arith.mulf %276, %276 : vector<16x32xf32>
    %cst_97 = arith.constant dense<0.000000e+00> : vector<16xf32>
    %278 = vector.multi_reduction <add>, %277, %cst_97 [1] : vector<16x32xf32> to vector<16xf32>
    %279 = vector.shape_cast %278 : vector<16xf32> to vector<16x1xf32>
    %cst_98 = arith.constant 3.200000e+01 : f32
    %280 = vector.broadcast %cst_98 : f32 to vector<16x1xf32>
    %281 = arith.divf %279, %280 : vector<16x1xf32>
    %cst_99 = arith.constant 9.99999974E-6 : f32
    %282 = vector.broadcast %cst_99 : f32 to vector<16x1xf32>
    %283 = arith.addf %281, %282 : vector<16x1xf32>
    %284 = math.rsqrt %283 : vector<16x1xf32>
    %285 = vector.broadcast %284 : vector<16x1xf32> to vector<16x32xf32>
    %286 = arith.mulf %276, %285 : vector<16x32xf32>
    %287 = vector.broadcast %166 : vector<1x32xf32> to vector<16x32xf32>
    %288 = arith.mulf %286, %287 : vector<16x32xf32>
    %289 = vector.broadcast %167 : vector<1x32xf32> to vector<16x32xf32>
    %290 = arith.addf %288, %289 : vector<16x32xf32>
    %291 = arith.addf %249, %290 : vector<16x32xf32>
    %292 = vector.shape_cast %291 : vector<16x32xf32> to vector<2x8x32xf32>
    %c0_100 = arith.constant 0 : index
    %c0_101 = arith.constant 0 : index
    %293 = vector.load %arg11[%c0_100, %c0_101] : memref<3x32xf32, #tpu.memory_space<vmem>>, vector<3x32xf32>
    %c0_102 = arith.constant 0 : index
    %c0_103 = arith.constant 0 : index
    %294 = vector.load %arg12[%c0_102, %c0_103] : memref<2x8xf32, #tpu.memory_space<vmem>>, vector<2x8xf32>
    %295 = vector.shape_cast %292 : vector<2x8x32xf32> to vector<16x32xf32>
    %296 = vector.extract_strided_slice %293 {offsets = [0, 0], sizes = [1, 32], strides = [1, 1]} : vector<3x32xf32> to vector<1x32xf32>
    %297 = vector.extract_strided_slice %293 {offsets = [1, 0], sizes = [1, 32], strides = [1, 1]} : vector<3x32xf32> to vector<1x32xf32>
    %cst_104 = arith.constant dense<0.000000e+00> : vector<16xf32>
    %298 = vector.multi_reduction <add>, %295, %cst_104 [1] : vector<16x32xf32> to vector<16xf32>
    %299 = vector.shape_cast %298 : vector<16xf32> to vector<16x1xf32>
    %cst_105 = arith.constant 3.200000e+01 : f32
    %300 = vector.broadcast %cst_105 : f32 to vector<16x1xf32>
    %301 = arith.divf %299, %300 : vector<16x1xf32>
    %302 = vector.broadcast %301 : vector<16x1xf32> to vector<16x32xf32>
    %303 = arith.subf %295, %302 : vector<16x32xf32>
    %304 = arith.mulf %303, %303 : vector<16x32xf32>
    %cst_106 = arith.constant dense<0.000000e+00> : vector<16xf32>
    %305 = vector.multi_reduction <add>, %304, %cst_106 [1] : vector<16x32xf32> to vector<16xf32>
    %306 = vector.shape_cast %305 : vector<16xf32> to vector<16x1xf32>
    %cst_107 = arith.constant 3.200000e+01 : f32
    %307 = vector.broadcast %cst_107 : f32 to vector<16x1xf32>
    %308 = arith.divf %306, %307 : vector<16x1xf32>
    %cst_108 = arith.constant 9.99999974E-6 : f32
    %309 = vector.broadcast %cst_108 : f32 to vector<16x1xf32>
    %310 = arith.addf %308, %309 : vector<16x1xf32>
    %311 = math.rsqrt %310 : vector<16x1xf32>
    %312 = vector.broadcast %311 : vector<16x1xf32> to vector<16x32xf32>
    %313 = arith.mulf %303, %312 : vector<16x32xf32>
    %314 = vector.broadcast %296 : vector<1x32xf32> to vector<16x32xf32>
    %315 = arith.mulf %313, %314 : vector<16x32xf32>
    %316 = vector.broadcast %297 : vector<1x32xf32> to vector<16x32xf32>
    %317 = arith.addf %315, %316 : vector<16x32xf32>
    %318 = vector.shape_cast %317 : vector<16x32xf32> to vector<2x8x32xf32>
    %c0_109 = arith.constant 0 : index
    %c0_110 = arith.constant 0 : index
    %c0_111 = arith.constant 0 : index
    %319 = vector.load %arg14[%c0_109, %c0_110, %c0_111] : memref<2x8x32xf32, #tpu.memory_space<vmem>>, vector<2x8x32xf32>
    tpu.vector_store %arg14[%c0_109, %c0_110, %c0_111], %318 {strides = array<i32>} : memref<2x8x32xf32, #tpu.memory_space<vmem>>, vector<2x8x32xf32>,
    %c0_112 = arith.constant 0 : index
    %c0_113 = arith.constant 0 : index
    %320 = vector.load %arg9[%c0_112, %c0_113] : memref<32x32xbf16, #tpu.memory_space<vmem>>, vector<32x32xbf16>
    %c0_114 = arith.constant 0 : index
    %c0_115 = arith.constant 0 : index
    %321 = vector.load %arg10[%c0_114, %c0_115] : memref<32x8xbf16, #tpu.memory_space<vmem>>, vector<32x8xbf16>
    %322 = vector.extract_strided_slice %293 {offsets = [2, 0], sizes = [1, 32], strides = [1, 1]} : vector<3x32xf32> to vector<1x32xf32>
    %323 = vector.extract_strided_slice %294 {offsets = [0, 0], sizes = [1, 8], strides = [1, 1]} : vector<2x8xf32> to vector<1x8xf32>
    %324 = vector.extract_strided_slice %294 {offsets = [1, 0], sizes = [1, 8], strides = [1, 1]} : vector<2x8xf32> to vector<1x8xf32>
    %c0_116 = arith.constant 0 : index
    %c0_117 = arith.constant 0 : index
    %325 = vector.load %arg13[%c0_116, %c0_117] : memref<1x1xf32, #tpu.memory_space<vmem>>, vector<1x1xf32>
    %326 = arith.truncf %317 : vector<16x32xf32> to vector<16x32xbf16>
    %cst_118 = arith.constant dense<0.000000e+00> : vector<16x32xf32>
    %327 = tpu.matmul %326, %320, %cst_118 {dimension_numbers = #tpu.dot_dimension_numbers<[1], [0], [0], [1], [0, 0, 1, 1], [], []>} : vector<16x32xbf16>, vector<32x32xbf16>, vector<16x32xf32> -> vector<16x32xf32>
    %328 = vector.broadcast %322 : vector<1x32xf32> to vector<16x32xf32>
    %329 = arith.addf %327, %328 : vector<16x32xf32>
    %cst_119 = arith.constant 5.000000e-01 : f32
    %330 = vector.broadcast %cst_119 : f32 to vector<16x32xf32>
    %331 = arith.mulf %330, %329 : vector<16x32xf32>
    %cst_120 = arith.constant 4.471500e-02 : f32
    %332 = vector.broadcast %cst_120 : f32 to vector<16x32xf32>
    %333 = arith.mulf %332, %329 : vector<16x32xf32>
    %334 = arith.mulf %333, %329 : vector<16x32xf32>
    %335 = arith.mulf %334, %329 : vector<16x32xf32>
    %336 = arith.addf %329, %335 : vector<16x32xf32>
    %cst_121 = arith.constant 0.797884583 : f32
    %337 = vector.broadcast %cst_121 : f32 to vector<16x32xf32>
    %338 = arith.mulf %337, %336 : vector<16x32xf32>
    %339 = math.tanh %338 : vector<16x32xf32>
    %cst_122 = arith.constant 1.000000e+00 : f32
    %340 = vector.broadcast %cst_122 : f32 to vector<16x32xf32>
    %341 = arith.addf %340, %339 : vector<16x32xf32>
    %342 = arith.mulf %331, %341 : vector<16x32xf32>
    %343 = arith.truncf %342 : vector<16x32xf32> to vector<16x32xbf16>
    %cst_123 = arith.constant dense<0.000000e+00> : vector<16x8xf32>
    %344 = tpu.matmul %343, %321, %cst_123 {dimension_numbers = #tpu.dot_dimension_numbers<[1], [0], [0], [1], [0, 0, 1, 1], [], []>} : vector<16x32xbf16>, vector<32x8xbf16>, vector<16x8xf32> -> vector<16x8xf32>
    %345 = vector.broadcast %323 : vector<1x8xf32> to vector<16x8xf32>
    %346 = arith.addf %344, %345 : vector<16x8xf32>
    %cst_124 = arith.constant 5.000000e-01 : f32
    %347 = vector.broadcast %cst_124 : f32 to vector<16x8xf32>
    %348 = arith.mulf %347, %346 : vector<16x8xf32>
    %cst_125 = arith.constant 4.471500e-02 : f32
    %349 = vector.broadcast %cst_125 : f32 to vector<16x8xf32>
    %350 = arith.mulf %349, %346 : vector<16x8xf32>
    %351 = arith.mulf %350, %346 : vector<16x8xf32>
    %352 = arith.mulf %351, %346 : vector<16x8xf32>
    %353 = arith.addf %346, %352 : vector<16x8xf32>
    %cst_126 = arith.constant 0.797884583 : f32
    %354 = vector.broadcast %cst_126 : f32 to vector<16x8xf32>
    %355 = arith.mulf %354, %353 : vector<16x8xf32>
    %356 = math.tanh %355 : vector<16x8xf32>
    %cst_127 = arith.constant 1.000000e+00 : f32
    %357 = vector.broadcast %cst_127 : f32 to vector<16x8xf32>
    %358 = arith.addf %357, %356 : vector<16x8xf32>
    %359 = arith.mulf %348, %358 : vector<16x8xf32>
    %360 = vector.shape_cast %359 : vector<16x8xf32> to vector<2x8x8xf32>
    %361 = vector.shape_cast %324 : vector<1x8xf32> to vector<1x1x8xf32>
    %362 = vector.broadcast %361 : vector<1x1x8xf32> to vector<2x8x8xf32>
    %363 = arith.mulf %360, %362 : vector<2x8x8xf32>
    %cst_128 = arith.constant dense<0.000000e+00> : vector<2x8xf32>
    %364 = vector.multi_reduction <add>, %363, %cst_128 [2] : vector<2x8x8xf32> to vector<2x8xf32>
    %365 = vector.broadcast %325 : vector<1x1xf32> to vector<2x8xf32>
    %366 = arith.addf %364, %365 : vector<2x8xf32>
    %cst_129 = arith.constant dense<0xFF800000> : vector<2xf32>
    %367 = vector.multi_reduction <maximumf>, %366, %cst_129 [1] : vector<2x8xf32> to vector<2xf32>
    %368 = vector.shape_cast %367 : vector<2xf32> to vector<2x1xf32>
    %369 = vector.broadcast %368 : vector<2x1xf32> to vector<2x8xf32>
    %370 = arith.subf %366, %369 : vector<2x8xf32>
    %371 = math.exp %370 : vector<2x8xf32>
    %cst_130 = arith.constant dense<0.000000e+00> : vector<2xf32>
    %372 = vector.multi_reduction <add>, %371, %cst_130 [1] : vector<2x8xf32> to vector<2xf32>
    %373 = vector.shape_cast %372 : vector<2xf32> to vector<2x1xf32>
    %374 = tpu.reciprocal %373 {approx = true} : vector<2x1xf32> -> vector<2x1xf32>
    %375 = vector.broadcast %374 : vector<2x1xf32> to vector<2x8xf32>
    %376 = arith.mulf %371, %375 : vector<2x8xf32>
    %377 = vector.shape_cast %376 : vector<2x8xf32> to vector<2x1x8xf32>
    %c0_131 = arith.constant 0 : index
    %c0_132 = arith.constant 0 : index
    %c0_133 = arith.constant 0 : index
    %378 = vector.load %arg15[%c0_131, %c0_132, %c0_133] : memref<2x1x8xf32, #tpu.memory_space<vmem>>, vector<2x1x8xf32>
    tpu.vector_store %arg15[%c0_131, %c0_132, %c0_133], %377 {strides = array<i32>} : memref<2x1x8xf32, #tpu.memory_space<vmem>>, vector<2x1x8xf32>,
    return
  }
  func.func @transform_0(%arg0: i32) -> (i32, i32, i32) {
    %c0_i32 = arith.constant 0 : i32
    %c0_i32_0 = arith.constant 0 : i32
    %c0_i32_1 = arith.constant 0 : i32
    return %arg0, %c0_i32, %c0_i32_0 : i32, i32, i32
  }
  func.func @transform_1(%arg0: i32) -> (i32, i32, i32) {
    %c0_i32 = arith.constant 0 : i32
    %c0_i32_0 = arith.constant 0 : i32
    %c0_i32_1 = arith.constant 0 : i32
    %c0_i32_2 = arith.constant 0 : i32
    return %c0_i32, %c0_i32_0, %c0_i32_1 : i32, i32, i32
  }
  func.func @transform_2(%arg0: i32) -> (i32, i32, i32) {
    %c0_i32 = arith.constant 0 : i32
    %c0_i32_0 = arith.constant 0 : i32
    %c0_i32_1 = arith.constant 0 : i32
    %c0_i32_2 = arith.constant 0 : i32
    return %c0_i32, %c0_i32_0, %c0_i32_1 : i32, i32, i32
  }
  func.func @transform_3(%arg0: i32) -> (i32, i32, i32) {
    %c0_i32 = arith.constant 0 : i32
    %c0_i32_0 = arith.constant 0 : i32
    %c0_i32_1 = arith.constant 0 : i32
    %c0_i32_2 = arith.constant 0 : i32
    return %c0_i32, %c0_i32_0, %c0_i32_1 : i32, i32, i32
  }
  func.func @transform_4(%arg0: i32) -> (i32, i32, i32) {
    %c0_i32 = arith.constant 0 : i32
    %c0_i32_0 = arith.constant 0 : i32
    %c0_i32_1 = arith.constant 0 : i32
    %c0_i32_2 = arith.constant 0 : i32
    return %c0_i32, %c0_i32_0, %c0_i32_1 : i32, i32, i32
  }
  func.func @transform_5(%arg0: i32) -> (i32, i32, i32) {
    %c0_i32 = arith.constant 0 : i32
    %c0_i32_0 = arith.constant 0 : i32
    %c0_i32_1 = arith.constant 0 : i32
    %c0_i32_2 = arith.constant 0 : i32
    return %c0_i32, %c0_i32_0, %c0_i32_1 : i32, i32, i32
  }
  func.func @transform_6(%arg0: i32) -> (i32, i32, i32) {
    %c0_i32 = arith.constant 0 : i32
    %c0_i32_0 = arith.constant 0 : i32
    %c0_i32_1 = arith.constant 0 : i32
    %c0_i32_2 = arith.constant 0 : i32
    return %c0_i32, %c0_i32_0, %c0_i32_1 : i32, i32, i32
  }
  func.func @transform_7(%arg0: i32) -> (i32, i32, i32) {
    %c0_i32 = arith.constant 0 : i32
    %c0_i32_0 = arith.constant 0 : i32
    %c0_i32_1 = arith.constant 0 : i32
    %c0_i32_2 = arith.constant 0 : i32
    return %c0_i32, %c0_i32_0, %c0_i32_1 : i32, i32, i32
  }
  func.func @transform_8(%arg0: i32) -> (i32, i32) {
    %c0_i32 = arith.constant 0 : i32
    %c0_i32_0 = arith.constant 0 : i32
    %c0_i32_1 = arith.constant 0 : i32
    return %c0_i32, %c0_i32_0 : i32, i32
  }
  func.func @transform_9(%arg0: i32) -> (i32, i32) {
    %c0_i32 = arith.constant 0 : i32
    %c0_i32_0 = arith.constant 0 : i32
    %c0_i32_1 = arith.constant 0 : i32
    return %c0_i32, %c0_i32_0 : i32, i32
  }
  func.func @transform_10(%arg0: i32) -> (i32, i32) {
    %c0_i32 = arith.constant 0 : i32
    %c0_i32_0 = arith.constant 0 : i32
    %c0_i32_1 = arith.constant 0 : i32
    return %c0_i32, %c0_i32_0 : i32, i32
  }
  func.func @transform_11(%arg0: i32) -> (i32, i32) {
    %c0_i32 = arith.constant 0 : i32
    %c0_i32_0 = arith.constant 0 : i32
    %c0_i32_1 = arith.constant 0 : i32
    return %c0_i32, %c0_i32_0 : i32, i32
  }
  func.func @transform_12(%arg0: i32) -> (i32, i32) {
    %c0_i32 = arith.constant 0 : i32
    %c0_i32_0 = arith.constant 0 : i32
    %c0_i32_1 = arith.constant 0 : i32
    return %c0_i32, %c0_i32_0 : i32, i32
  }
  func.func @transform_13(%arg0: i32) -> (i32, i32, i32) {
    %c0_i32 = arith.constant 0 : i32
    %c0_i32_0 = arith.constant 0 : i32
    %c0_i32_1 = arith.constant 0 : i32
    return %arg0, %c0_i32, %c0_i32_0 : i32, i32, i32
  }
  func.func @transform_14(%arg0: i32) -> (i32, i32, i32) {
    %c0_i32 = arith.constant 0 : i32
    %c0_i32_0 = arith.constant 0 : i32
    %c0_i32_1 = arith.constant 0 : i32
    return %arg0, %c0_i32, %c0_i32_0 : i32, i32, i32
  }
}

</mosaic_0001>

<llo_original>
// kernel: tpu_custom_call.1
$region0: #{tpu_custom_call.1}
  #allocation0 [shape = 'u32[]', space=smem, size = 0x4, offset = 0x4, fixed_abs, tag = 'smem constant byte address 0x4 - core index']
  #allocation1 [shape = 'u32[144,128]{1,0:T(1,128)}', space=vmem, size = 0x12000, scoped, tag = 'internal scratch']
  #allocation2 [shape = 'f32[1,1]{1,0:T(1,128)S(1)}', space=vmem, size = 0x200, scoped, tag = 'scoped memory for tpu_custom_call.1']
  %s0 = inlined_call_operand.vmem [shape: f32[8,8,32], index: 0, kind: input, shape index: {}]
  %s1 = inlined_call_operand.vmem [shape: bf16[2,32,96], index: 1, kind: input, shape index: {}]
  %s2 = inlined_call_operand.vmem [shape: bf16[2,32,32], index: 2, kind: input, shape index: {}]
  %s3 = inlined_call_operand.vmem [shape: bf16[2,32,128], index: 3, kind: input, shape index: {}]
  %s4 = inlined_call_operand.vmem [shape: bf16[2,128,32], index: 4, kind: input, shape index: {}]
  %s5 = inlined_call_operand.hbm [shape: f32[2,1,96], index: 5, kind: input, shape index: {}]
  %s6 = inlined_call_operand.vmem [shape: f32[2,6,32], index: 6, kind: input, shape index: {}]
  %s7 = inlined_call_operand.hbm [shape: f32[2,1,128], index: 7, kind: input, shape index: {}]
  %s8 = inlined_call_operand.vmem [shape: bf16[32,32], index: 8, kind: input, shape index: {}]
  %s9 = inlined_call_operand.vmem [shape: bf16[32,8], index: 9, kind: input, shape index: {}]
  %s10 = inlined_call_operand.hbm [shape: f32[3,32], index: 10, kind: input, shape index: {}]
  %s11 = inlined_call_operand.vmem [shape: f32[2,8], index: 11, kind: input, shape index: {}]
  %s12 = inlined_call_operand.<no memory space> [shape: f32[1,1], index: 12, kind: input, shape index: {}]
  %s13 = inlined_call_operand.hbm [shape: f32[8,8,32], index: 13, kind: output, shape index: {0}]
  %s14 = inlined_call_operand.hbm [shape: f32[8,1,8], index: 14, kind: output, shape index: {1}]
  %15 = xla_tuple %s13, %s14
  %s16 = sld [smem:[#allocation0]]
  $region105: #{tpu_custom_call.1} parent=0
    _
  %s18 = ssub.s32 1, %s16
  %s19 = scalar_select 0, %s18, %s16
  %v20 = vstv %s12
  %21 = vst [vmem:[#allocation2] sm:$0x1] %v20
  $region1: #{tpu_custom_call.1} parent=0
    #allocation3 [shape = 'u8[1024]{0}', space=vmem, size = 0x400, scoped, tag = 'input window, operand 5, single buffered']
    #allocation4 [shape = 's32[2]{0}', space=sflag, size = 0x8, scoped, tag = 'scoped memory for tpu_custom_call.1']
    #allocation5 [shape = 's32[2]{0}', space=sflag, size = 0x8, scoped, tag = 'scoped memory for tpu_custom_call.1']
    #allocation6 [shape = 'u8[1024]{0}', space=vmem, size = 0x400, scoped, tag = 'input window, operand 7, single buffered']
    #allocation7 [shape = 's32[1]{0}', space=sflag, size = 0x4, scoped, tag = 'scoped memory for tpu_custom_call.1']
    #allocation8 [shape = 'u8[2048]{0}', space=vmem, size = 0x800, scoped, tag = 'input window, operand 10, single buffered']
    #allocation9 [shape = 'u8[16384]{0}', space=vmem, size = 0x4000, scoped, tag = 'output window, operand 0']
    #allocation10 [shape = 'u8[2048]{0}', space=vmem, size = 0x800, scoped, tag = 'output window, operand 1']
    #allocation11 [shape = 's32[2]{0}', space=sflag, size = 0x8, scoped, tag = 'scoped memory for tpu_custom_call.1']
    %22 = vsyncpa [#allocation4], 0
    %23 = vsyncpa [#allocation7], 0
    %24 = vsyncpa [#allocation5], 0
    %s25 = scalar_lea.sflag [#allocation5], 1
    %26 = vsyncpa %s25, 0
    %27 = vsyncpa [#allocation11], 0
    %s28 = scalar_lea.sflag [#allocation11], 1
    %29 = vsyncpa %s28, 0
    loop: start=0, step=1, limit=6
    $region2: #{tpu_custom_call.1} parent=1 // loop_pre_header
      _
    $region3: #{tpu_custom_call.1} parent=1 // loop_header
      %s31 = sphi 0, %s35
      %p32 = scmp.ge.s32.totalorder %s31, 6
      %s41 = sphi 0, %s43
      %s44 = sphi 0, %s41
      %s45 = sphi 0, %s44
      %s61 = sphi 0, %s45
      %s65 = sphi 0, %s65
      %s67 = sphi 0, %s65
      %s68 = sphi 0, %s67
      %s82 = sphi 0, %s68
      %s86 = sphi 0, %s86
      %s88 = sphi 0, %s86
      %s89 = sphi 0, %s88
      %s103 = sphi 0, %s89
      %s107 = sphi 0, %s107
      %s109 = sphi 0, %s107
      %s110 = sphi 0, %s109
      %s124 = sphi 0, %s110
      %s128 = sphi 0, %s128
      %s130 = sphi 0, %s128
      %s131 = sphi 0, %s130
      %s145 = sphi 0, %s131
      %s149 = sphi 0, %s149
      %s151 = sphi 0, %s149
      %s152 = sphi 0, %s151
      %s166 = sphi 0, %s152
      %s170 = sphi 0, %s170
      %s172 = sphi 0, %s170
      %s173 = sphi 0, %s172
      %s187 = sphi 0, %s173
      %s191 = sphi 0, %s191
      %s193 = sphi 0, %s191
      %s194 = sphi 0, %s193
      %s208 = sphi 0, %s194
      %s212 = sphi 0, %s212
      %s214 = sphi 0, %s212
      %s215 = sphi 0, %s214
      %s229 = sphi 0, %s215
      %s233 = sphi 0, %s233
      %s235 = sphi 0, %s233
      %s236 = sphi 0, %s235
      %s250 = sphi 0, %s236
      %s254 = sphi 0, %s254
      %s256 = sphi 0, %s254
      %s257 = sphi 0, %s256
      %s271 = sphi 0, %s257
      %s275 = sphi 0, %s275
      %s277 = sphi 0, %s275
      %s278 = sphi 0, %s277
      %s292 = sphi 0, %s278
      %s296 = sphi 0, %s296
      %s298 = sphi 0, %s296
      %s299 = sphi 0, %s298
      %s313 = sphi 0, %s299
      %s319 = sphi 0, %s321
      %s322 = sphi 0, %s319
      %s323 = sphi 0, %s322
      %s339 = sphi 0, %s323
      %s345 = sphi 0, %s347
      %s348 = sphi 0, %s345
      %s349 = sphi 0, %s348
      %s365 = sphi 0, %s349
    $region4: #{tpu_custom_call.1} parent=1 // loop_header_branch
      %34 = sbr.rel (%p32) target = $region8
    $region5: #{tpu_custom_call.1} parent=1 // loop_body
      %s36 = ssub.s32 %s31, 1
      %s37 = ssub.s32 %s31, 2
      %s38 = sadd.s32 %s31, 1
      %s39 = ssub.s32 %s31, %s38
      %p40 = scmp.eq.s32.totalorder %s39, 0
      %s42 = sadd.s32 %s41, 1
      %s43 = scalar_select %p40, %s41, %s42
      %p46 = pneg %p40
      %p47 = scmp.eq.s32.totalorder %s31, 3
      %p48 = por %p46, %p47
      %p49 = scmp.ne.s32.totalorder %s41, %s44
      %p50 = scmp.eq.s32.totalorder %s31, 0
      %p51 = por %p49, %p50
      %p52 = scmp.ne.s32.totalorder %s41, %s44
      %p53 = scmp.eq.s32.totalorder %s36, 3
      %p54 = por %p52, %p53
      %p55 = scmp.ne.s32.totalorder %s44, %s45
      %p56 = scmp.eq.s32.totalorder %s36, 0
      %p57 = por %p55, %p56
      %p58 = scmp.ne.s32.totalorder %s44, %s45
      %p59 = scmp.eq.s32.totalorder %s37, 3
      %p60 = por %p58, %p59
      %p62 = scmp.ne.s32.totalorder %s45, %s61
      %p63 = scmp.eq.s32.totalorder %s37, 0
      %p64 = por %p62, %p63
      %s66 = sadd.s32 %s65, 1
      %p69 = scmp.eq.s32.totalorder %s31, 3
      %p70 = scmp.ne.s32.totalorder %s65, %s67
      %p71 = scmp.eq.s32.totalorder %s31, 0
      %p72 = por %p70, %p71
      %p73 = scmp.ne.s32.totalorder %s65, %s67
      %p74 = scmp.eq.s32.totalorder %s36, 3
      %p75 = por %p73, %p74
      %p76 = scmp.ne.s32.totalorder %s67, %s68
      %p77 = scmp.eq.s32.totalorder %s36, 0
      %p78 = por %p76, %p77
      %p79 = scmp.ne.s32.totalorder %s67, %s68
      %p80 = scmp.eq.s32.totalorder %s37, 3
      %p81 = por %p79, %p80
      %p83 = scmp.ne.s32.totalorder %s68, %s82
      %p84 = scmp.eq.s32.totalorder %s37, 0
      %p85 = por %p83, %p84
      %s87 = sadd.s32 %s86, 1
      %p90 = scmp.eq.s32.totalorder %s31, 3
      %p91 = scmp.ne.s32.totalorder %s86, %s88
      %p92 = scmp.eq.s32.totalorder %s31, 0
      %p93 = por %p91, %p92
      %p94 = scmp.ne.s32.totalorder %s86, %s88
      %p95 = scmp.eq.s32.totalorder %s36, 3
      %p96 = por %p94, %p95
      %p97 = scmp.ne.s32.totalorder %s88, %s89
      %p98 = scmp.eq.s32.totalorder %s36, 0
      %p99 = por %p97, %p98
      %p100 = scmp.ne.s32.totalorder %s88, %s89
      %p101 = scmp.eq.s32.totalorder %s37, 3
      %p102 = por %p100, %p101
      %p104 = scmp.ne.s32.totalorder %s89, %s103
      %p105 = scmp.eq.s32.totalorder %s37, 0
      %p106 = por %p104, %p105
      %s108 = sadd.s32 %s107, 1
      %p111 = scmp.eq.s32.totalorder %s31, 3
      %p112 = scmp.ne.s32.totalorder %s107, %s109
      %p113 = scmp.eq.s32.totalorder %s31, 0
      %p114 = por %p112, %p113
      %p115 = scmp.ne.s32.totalorder %s107, %s109
      %p116 = scmp.eq.s32.totalorder %s36, 3
      %p117 = por %p115, %p116
      %p118 = scmp.ne.s32.totalorder %s109, %s110
      %p119 = scmp.eq.s32.totalorder %s36, 0
      %p120 = por %p118, %p119
      %p121 = scmp.ne.s32.totalorder %s109, %s110
      %p122 = scmp.eq.s32.totalorder %s37, 3
      %p123 = por %p121, %p122
      %p125 = scmp.ne.s32.totalorder %s110, %s124
      %p126 = scmp.eq.s32.totalorder %s37, 0
      %p127 = por %p125, %p126
      %s129 = sadd.s32 %s128, 1
      %p132 = scmp.eq.s32.totalorder %s31, 3
      %p133 = scmp.ne.s32.totalorder %s128, %s130
      %p134 = scmp.eq.s32.totalorder %s31, 0
      %p135 = por %p133, %p134
      %p136 = scmp.ne.s32.totalorder %s128, %s130
      %p137 = scmp.eq.s32.totalorder %s36, 3
      %p138 = por %p136, %p137
      %p139 = scmp.ne.s32.totalorder %s130, %s131
      %p140 = scmp.eq.s32.totalorder %s36, 0
      %p141 = por %p139, %p140
      %p142 = scmp.ne.s32.totalorder %s130, %s131
      %p143 = scmp.eq.s32.totalorder %s37, 3
      %p144 = por %p142, %p143
      %p146 = scmp.ne.s32.totalorder %s131, %s145
      %p147 = scmp.eq.s32.totalorder %s37, 0
      %p148 = por %p146, %p147
      %s150 = sadd.s32 %s149, 1
      %p153 = scmp.eq.s32.totalorder %s31, 3
      %p154 = scmp.ne.s32.totalorder %s149, %s151
      %p155 = scmp.eq.s32.totalorder %s31, 0
      %p156 = por %p154, %p155
      %p157 = scmp.ne.s32.totalorder %s149, %s151
      %p158 = scmp.eq.s32.totalorder %s36, 3
      %p159 = por %p157, %p158
      %p160 = scmp.ne.s32.totalorder %s151, %s152
      %p161 = scmp.eq.s32.totalorder %s36, 0
      %p162 = por %p160, %p161
      %p163 = scmp.ne.s32.totalorder %s151, %s152
      %p164 = scmp.eq.s32.totalorder %s37, 3
      %p165 = por %p163, %p164
      %p167 = scmp.ne.s32.totalorder %s152, %s166
      %p168 = scmp.eq.s32.totalorder %s37, 0
      %p169 = por %p167, %p168
      %s171 = sadd.s32 %s170, 1
      %p174 = scmp.eq.s32.totalorder %s31, 3
      %p175 = scmp.ne.s32.totalorder %s170, %s172
      %p176 = scmp.eq.s32.totalorder %s31, 0
      %p177 = por %p175, %p176
      %p178 = scmp.ne.s32.totalorder %s170, %s172
      %p179 = scmp.eq.s32.totalorder %s36, 3
      %p180 = por %p178, %p179
      %p181 = scmp.ne.s32.totalorder %s172, %s173
      %p182 = scmp.eq.s32.totalorder %s36, 0
      %p183 = por %p181, %p182
      %p184 = scmp.ne.s32.totalorder %s172, %s173
      %p185 = scmp.eq.s32.totalorder %s37, 3
      %p186 = por %p184, %p185
      %p188 = scmp.ne.s32.totalorder %s173, %s187
      %p189 = scmp.eq.s32.totalorder %s37, 0
      %p190 = por %p188, %p189
      %s192 = sadd.s32 %s191, 1
      %p195 = scmp.eq.s32.totalorder %s31, 3
      %p196 = scmp.ne.s32.totalorder %s191, %s193
      %p197 = scmp.eq.s32.totalorder %s31, 0
      %p198 = por %p196, %p197
      %p199 = scmp.ne.s32.totalorder %s191, %s193
      %p200 = scmp.eq.s32.totalorder %s36, 3
      %p201 = por %p199, %p200
      %p202 = scmp.ne.s32.totalorder %s193, %s194
      %p203 = scmp.eq.s32.totalorder %s36, 0
      %p204 = por %p202, %p203
      %p205 = scmp.ne.s32.totalorder %s193, %s194
      %p206 = scmp.eq.s32.totalorder %s37, 3
      %p207 = por %p205, %p206
      %p209 = scmp.ne.s32.totalorder %s194, %s208
      %p210 = scmp.eq.s32.totalorder %s37, 0
      %p211 = por %p209, %p210
      %s213 = sadd.s32 %s212, 1
      %p216 = scmp.eq.s32.totalorder %s31, 3
      %p217 = scmp.ne.s32.totalorder %s212, %s214
      %p218 = scmp.eq.s32.totalorder %s31, 0
      %p219 = por %p217, %p218
      %p220 = scmp.ne.s32.totalorder %s212, %s214
      %p221 = scmp.eq.s32.totalorder %s36, 3
      %p222 = por %p220, %p221
      %p223 = scmp.ne.s32.totalorder %s214, %s215
      %p224 = scmp.eq.s32.totalorder %s36, 0
      %p225 = por %p223, %p224
      %p226 = scmp.ne.s32.totalorder %s214, %s215
      %p227 = scmp.eq.s32.totalorder %s37, 3
      %p228 = por %p226, %p227
      %p230 = scmp.ne.s32.totalorder %s215, %s229
      %p231 = scmp.eq.s32.totalorder %s37, 0
      %p232 = por %p230, %p231
      %s234 = sadd.s32 %s233, 1
      %p237 = scmp.eq.s32.totalorder %s31, 3
      %p238 = scmp.ne.s32.totalorder %s233, %s235
      %p239 = scmp.eq.s32.totalorder %s31, 0
      %p240 = por %p238, %p239
      %p241 = scmp.ne.s32.totalorder %s233, %s235
      %p242 = scmp.eq.s32.totalorder %s36, 3
      %p243 = por %p241, %p242
      %p244 = scmp.ne.s32.totalorder %s235, %s236
      %p245 = scmp.eq.s32.totalorder %s36, 0
      %p246 = por %p244, %p245
      %p247 = scmp.ne.s32.totalorder %s235, %s236
      %p248 = scmp.eq.s32.totalorder %s37, 3
      %p249 = por %p247, %p248
      %p251 = scmp.ne.s32.totalorder %s236, %s250
      %p252 = scmp.eq.s32.totalorder %s37, 0
      %p253 = por %p251, %p252
      %s255 = sadd.s32 %s254, 1
      %p258 = scmp.eq.s32.totalorder %s31, 3
      %p259 = scmp.ne.s32.totalorder %s254, %s256
      %p260 = scmp.eq.s32.totalorder %s31, 0
      %p261 = por %p259, %p260
      %p262 = scmp.ne.s32.totalorder %s254, %s256
      %p263 = scmp.eq.s32.totalorder %s36, 3
      %p264 = por %p262, %p263
      %p265 = scmp.ne.s32.totalorder %s256, %s257
      %p266 = scmp.eq.s32.totalorder %s36, 0
      %p267 = por %p265, %p266
      %p268 = scmp.ne.s32.totalorder %s256, %s257
      %p269 = scmp.eq.s32.totalorder %s37, 3
      %p270 = por %p268, %p269
      %p272 = scmp.ne.s32.totalorder %s257, %s271
      %p273 = scmp.eq.s32.totalorder %s37, 0
      %p274 = por %p272, %p273
      %s276 = sadd.s32 %s275, 1
      %p279 = scmp.eq.s32.totalorder %s31, 3
      %p280 = scmp.ne.s32.totalorder %s275, %s277
      %p281 = scmp.eq.s32.totalorder %s31, 0
      %p282 = por %p280, %p281
      %p283 = scmp.ne.s32.totalorder %s275, %s277
      %p284 = scmp.eq.s32.totalorder %s36, 3
      %p285 = por %p283, %p284
      %p286 = scmp.ne.s32.totalorder %s277, %s278
      %p287 = scmp.eq.s32.totalorder %s36, 0
      %p288 = por %p286, %p287
      %p289 = scmp.ne.s32.totalorder %s277, %s278
      %p290 = scmp.eq.s32.totalorder %s37, 3
      %p291 = por %p289, %p290
      %p293 = scmp.ne.s32.totalorder %s278, %s292
      %p294 = scmp.eq.s32.totalorder %s37, 0
      %p295 = por %p293, %p294
      %s297 = sadd.s32 %s296, 1
      %p300 = scmp.eq.s32.totalorder %s31, 3
      %p301 = scmp.ne.s32.totalorder %s296, %s298
      %p302 = scmp.eq.s32.totalorder %s31, 0
      %p303 = por %p301, %p302
      %p304 = scmp.ne.s32.totalorder %s296, %s298
      %p305 = scmp.eq.s32.totalorder %s36, 3
      %p306 = por %p304, %p305
      %p307 = scmp.ne.s32.totalorder %s298, %s299
      %p308 = scmp.eq.s32.totalorder %s36, 0
      %p309 = por %p307, %p308
      %p310 = scmp.ne.s32.totalorder %s298, %s299
      %p311 = scmp.eq.s32.totalorder %s37, 3
      %p312 = por %p310, %p311
      %p314 = scmp.ne.s32.totalorder %s299, %s313
      %p315 = scmp.eq.s32.totalorder %s37, 0
      %p316 = por %p314, %p315
      %s317 = ssub.s32 %s31, %s38
      %p318 = scmp.eq.s32.totalorder %s317, 0
      %s320 = sadd.s32 %s319, 1
      %s321 = scalar_select %p318, %s319, %s320
      %p324 = pneg %p318
      %p325 = scmp.eq.s32.totalorder %s31, 3
      %p326 = por %p324, %p325
      %p327 = scmp.ne.s32.totalorder %s319, %s322
      %p328 = scmp.eq.s32.totalorder %s31, 0
      %p329 = por %p327, %p328
      %p330 = scmp.ne.s32.totalorder %s319, %s322
      %p331 = scmp.eq.s32.totalorder %s36, 3
      %p332 = por %p330, %p331
      %p333 = scmp.ne.s32.totalorder %s322, %s323
      %p334 = scmp.eq.s32.totalorder %s36, 0
      %p335 = por %p333, %p334
      %p336 = scmp.ne.s32.totalorder %s322, %s323
      %p337 = scmp.eq.s32.totalorder %s37, 3
      %p338 = por %p336, %p337
      %p340 = scmp.ne.s32.totalorder %s323, %s339
      %p341 = scmp.eq.s32.totalorder %s37, 0
      %p342 = por %p340, %p341
      %s343 = ssub.s32 %s31, %s38
      %p344 = scmp.eq.s32.totalorder %s343, 0
      %s346 = sadd.s32 %s345, 1
      %s347 = scalar_select %p344, %s345, %s346
      %p350 = pneg %p344
      %p351 = scmp.eq.s32.totalorder %s31, 3
      %p352 = por %p350, %p351
      %p353 = scmp.ne.s32.totalorder %s345, %s348
      %p354 = scmp.eq.s32.totalorder %s31, 0
      %p355 = por %p353, %p354
      %p356 = scmp.ne.s32.totalorder %s345, %s348
      %p357 = scmp.eq.s32.totalorder %s36, 3
      %p358 = por %p356, %p357
      %p359 = scmp.ne.s32.totalorder %s348, %s349
      %p360 = scmp.eq.s32.totalorder %s36, 0
      %p361 = por %p359, %p360
      %p362 = scmp.ne.s32.totalorder %s348, %s349
      %p363 = scmp.eq.s32.totalorder %s37, 3
      %p364 = por %p362, %p363
      %p366 = scmp.ne.s32.totalorder %s349, %s365
      %p367 = scmp.eq.s32.totalorder %s37, 0
      %p368 = por %p366, %p367
      %p369 = scmp.le.s32.totalorder 1, %s31
      %p370 = scmp.lt.s32.totalorder %s31, 5
      %p371 = pnand %p369, %p370
      %p372 = pneg %p371
      // Predicated region
      $region9: #{tpu_custom_call.1} parent=5 // pred_check
        _
      $region10: #{tpu_custom_call.1} parent=5 // pred_check_branch
        %374 = sbr.rel (%p371) target = $region12
      $region11: #{tpu_custom_call.1} parent=5 // pred_region
        %s375 = ssub.s32 %s31, 1
        // Predicated region
        $region13: #{tpu_custom_call.1} parent=11 // pred_check
          %p376 = pneg %p78
        $region14: #{tpu_custom_call.1} parent=11 // pred_check_branch
          %378 = sbr.rel (%p376) target = $region16
        $region15: #{tpu_custom_call.1} parent=11 // pred_region
          _
        $region16: #{tpu_custom_call.1} parent=11 // pred_fallthru
          _
        // Predicated region
        $region17: #{tpu_custom_call.1} parent=11 // pred_check
          %p379 = pneg %p99
        $region18: #{tpu_custom_call.1} parent=11 // pred_check_branch
          %381 = sbr.rel (%p379) target = $region20
        $region19: #{tpu_custom_call.1} parent=11 // pred_region
          _
        $region20: #{tpu_custom_call.1} parent=11 // pred_fallthru
          _
        // Predicated region
        $region21: #{tpu_custom_call.1} parent=11 // pred_check
          %p382 = pneg %p120
        $region22: #{tpu_custom_call.1} parent=11 // pred_check_branch
          %384 = sbr.rel (%p382) target = $region24
        $region23: #{tpu_custom_call.1} parent=11 // pred_region
          _
        $region24: #{tpu_custom_call.1} parent=11 // pred_fallthru
          _
        // Predicated region
        $region25: #{tpu_custom_call.1} parent=11 // pred_check
          %p385 = pneg %p141
        $region26: #{tpu_custom_call.1} parent=11 // pred_check_branch
          %387 = sbr.rel (%p385) target = $region28
        $region27: #{tpu_custom_call.1} parent=11 // pred_region
          _
        $region28: #{tpu_custom_call.1} parent=11 // pred_fallthru
          _
        // Predicated region
        $region29: #{tpu_custom_call.1} parent=11 // pred_check
          %p388 = pneg %p162
        $region30: #{tpu_custom_call.1} parent=11 // pred_check_branch
          %390 = sbr.rel (%p388) target = $region32
        $region31: #{tpu_custom_call.1} parent=11 // pred_region
          %s392 = ssub.s32 32, 32
          %393 = vsyncadd [#allocation4], %s392
          %s394 = sshll.u32 [#allocation3], 4
          %s395 = int_to_ptr.vmem [resolvable:$true] %s394
          %400 = dma.hbm_to_vmem [thread:$0]  %s5, 32, %s395, [#allocation4], 16, 16, 1
        $region32: #{tpu_custom_call.1} parent=11 // pred_fallthru
          _
        // Predicated region
        $region33: #{tpu_custom_call.1} parent=11 // pred_check
          %p401 = pneg %p183
        $region34: #{tpu_custom_call.1} parent=11 // pred_check_branch
          %403 = sbr.rel (%p401) target = $region36
        $region35: #{tpu_custom_call.1} parent=11 // pred_region
          _
        $region36: #{tpu_custom_call.1} parent=11 // pred_fallthru
          _
        // Predicated region
        $region37: #{tpu_custom_call.1} parent=11 // pred_check
          %p404 = pneg %p204
        $region38: #{tpu_custom_call.1} parent=11 // pred_check_branch
          %406 = sbr.rel (%p404) target = $region40
        $region39: #{tpu_custom_call.1} parent=11 // pred_region
          %s408 = ssub.s32 32, 32
          %409 = vsyncadd [#allocation7], %s408
          %s410 = sshll.u32 [#allocation6], 4
          %s411 = int_to_ptr.vmem [resolvable:$true] %s410
          %416 = dma.hbm_to_vmem [thread:$0]  %s7, 32, %s411, [#allocation7], 16, 16, 1
        $region40: #{tpu_custom_call.1} parent=11 // pred_fallthru
          _
        // Predicated region
        $region41: #{tpu_custom_call.1} parent=11 // pred_check
          %p417 = pneg %p225
        $region42: #{tpu_custom_call.1} parent=11 // pred_check_branch
          %419 = sbr.rel (%p417) target = $region44
        $region43: #{tpu_custom_call.1} parent=11 // pred_region
          _
        $region44: #{tpu_custom_call.1} parent=11 // pred_fallthru
          _
        // Predicated region
        $region45: #{tpu_custom_call.1} parent=11 // pred_check
          %p420 = pneg %p246
        $region46: #{tpu_custom_call.1} parent=11 // pred_check_branch
          %422 = sbr.rel (%p420) target = $region48
        $region47: #{tpu_custom_call.1} parent=11 // pred_region
          _
        $region48: #{tpu_custom_call.1} parent=11 // pred_fallthru
          _
        // Predicated region
        $region49: #{tpu_custom_call.1} parent=11 // pred_check
          %p423 = pneg %p267
        $region50: #{tpu_custom_call.1} parent=11 // pred_check_branch
          %425 = sbr.rel (%p423) target = $region52
        $region51: #{tpu_custom_call.1} parent=11 // pred_region
          %s427 = ssub.s32 64, 64
          %428 = vsyncadd [#allocation7], %s427
          %s430 = sshll.u32 [#allocation8], 4
          %s431 = int_to_ptr.vmem [resolvable:$true] %s430
          %433 = dma.hbm_to_vmem [thread:$0]  %s10, 64, %s431, [#allocation7]
        $region52: #{tpu_custom_call.1} parent=11 // pred_fallthru
          _
        // Predicated region
        $region53: #{tpu_custom_call.1} parent=11 // pred_check
          %p434 = pneg %p288
        $region54: #{tpu_custom_call.1} parent=11 // pred_check_branch
          %436 = sbr.rel (%p434) target = $region56
        $region55: #{tpu_custom_call.1} parent=11 // pred_region
          _
        $region56: #{tpu_custom_call.1} parent=11 // pred_fallthru
          _
        // Predicated region
        $region57: #{tpu_custom_call.1} parent=11 // pred_check
          %p437 = pneg %p309
        $region58: #{tpu_custom_call.1} parent=11 // pred_check_branch
          %439 = sbr.rel (%p437) target = $region60
        $region59: #{tpu_custom_call.1} parent=11 // pred_region
          _
        $region60: #{tpu_custom_call.1} parent=11 // pred_fallthru
          _
      $region12: #{tpu_custom_call.1} parent=5 // pred_fallthru
        _
      %p440 = scmp.lt.s32.totalorder %s31, 4
      // Predicated region
      $region61: #{tpu_custom_call.1} parent=5 // pred_check
        %p441 = pneg %p440
      $region62: #{tpu_custom_call.1} parent=5 // pred_check_branch
        %443 = sbr.rel (%p441) target = $region64
      $region63: #{tpu_custom_call.1} parent=5 // pred_region
        // Predicated region
        $region65: #{tpu_custom_call.1} parent=63 // pred_check
          %p444 = pneg %p51
        $region66: #{tpu_custom_call.1} parent=63 // pred_check_branch
          %446 = sbr.rel (%p444) target = $region68
        $region67: #{tpu_custom_call.1} parent=63 // pred_region
          %s447 = smul.u32 2, %s31
          %p448 = scmp.lt.s32.totalorder %s447, 7
          %s449 = scalar_select %p448, %s447, 7
          %s450 = smul.addr %s449, 8
          %s451 = scalar_lea.vmem %s0, %s450
          %s452 = smul.u32 2, %s31
        $region68: #{tpu_custom_call.1} parent=63 // pred_fallthru
          _
      $region64: #{tpu_custom_call.1} parent=5 // pred_fallthru
        _
      %p453 = scmp.le.s32.totalorder 1, %s31
      %p454 = scmp.lt.s32.totalorder %s31, 5
      %p455 = pnand %p453, %p454
      %p456 = pneg %p455
      // Predicated region
      $region69: #{tpu_custom_call.1} parent=5 // pred_check
        _
      $region70: #{tpu_custom_call.1} parent=5 // pred_check_branch
        %458 = sbr.rel (%p455) target = $region72
      $region71: #{tpu_custom_call.1} parent=5 // pred_region
        %s459 = ssub.s32 %s31, 1
        // Predicated region
        $region73: #{tpu_custom_call.1} parent=71 // pred_check
          %p460 = pneg %p162
        $region74: #{tpu_custom_call.1} parent=71 // pred_check_branch
          %462 = sbr.rel (%p460) target = $region76
        $region75: #{tpu_custom_call.1} parent=71 // pred_region
          %463 = dma.done [#allocation4], 32
        $region76: #{tpu_custom_call.1} parent=71 // pred_fallthru
          _
        // Predicated region
        $region77: #{tpu_custom_call.1} parent=71 // pred_check
          %p464 = pneg %p204
        $region78: #{tpu_custom_call.1} parent=71 // pred_check_branch
          %466 = sbr.rel (%p464) target = $region80
        $region79: #{tpu_custom_call.1} parent=71 // pred_region
          %467 = dma.done [#allocation7], 32
        $region80: #{tpu_custom_call.1} parent=71 // pred_fallthru
          _
        // Predicated region
        $region81: #{tpu_custom_call.1} parent=71 // pred_check
          %p468 = pneg %p267
        $region82: #{tpu_custom_call.1} parent=71 // pred_check_branch
          %470 = sbr.rel (%p468) target = $region84
        $region83: #{tpu_custom_call.1} parent=71 // pred_region
          %471 = dma.done [#allocation7], 64
        $region84: #{tpu_custom_call.1} parent=71 // pred_fallthru
          _
        %s472 = smul.u32 2, %s36
        %p473 = scmp.lt.s32.totalorder %s472, 7
        %s474 = scalar_select %p473, %s472, 7
        %s475 = smul.addr %s474, 8
        %s476 = scalar_lea.vmem %s0, %s475
        %p477 = pneg %p57
        %p478 = pneg %p54
        %p479 = pneg %p78
        %p480 = pneg %p75
        %p481 = pneg %p99
        %p482 = pneg %p96
        %p483 = pneg %p120
        %p484 = pneg %p117
        %p485 = pneg %p141
        %p486 = pneg %p138
        %p487 = pneg %p162
        %p488 = pneg %p159
        %p489 = pneg %p183
        %p490 = pneg %p180
        %p491 = pneg %p204
        %p492 = pneg %p201
        %p493 = pneg %p225
        %p494 = pneg %p222
        %p495 = pneg %p246
        %p496 = pneg %p243
        %p497 = pneg %p267
        %p498 = pneg %p264
        %p499 = pneg %p288
        %p500 = pneg %p285
        %p501 = pneg %p309
        %p502 = pneg %p306
        %p503 = pneg %p335
        %p504 = pneg %p332
        %s505 = sand.u32 %s322, 1
        %s506 = scalar_lea.sflag [#allocation5], %s505
        %s507 = sand.u32 %s322, 1
        %s508 = smul.addr %s507, 16
        %s509 = scalar_lea.vmem [#allocation9], %s508
        %p510 = pneg %p361
        %p511 = pneg %p358
        %s512 = sand.u32 %s348, 1
        %s513 = scalar_lea.sflag [#allocation11], %s512
        %s514 = sand.u32 %s348, 1
        %s515 = smul.addr %s514, 2
        %s516 = scalar_lea.vmem [#allocation10], %s515
        %s517 = smul.u32 2, %s36
        %p518 = scmp.lt.s32.totalorder %s517, 7
        %s519 = scalar_select %p518, %s517, 7
        %s520 = smul.addr %s519, 8
        %s521 = scalar_lea.vmem %s0, %s520
        %s522 = smul.u32 2, %s36
        %s523 = smul.u32 2, %s36
        %s524 = smul.u32 2, %s36
        %v526 = vld [vmem:[%s521] sm:$0xff]
        %v527 = vld [vmem:[%s521 + $0x8] sm:$0xff]
        %v528 = vld [vmem:[%s1] sm:$0xf]
        %v529 = vld [vmem:[%s1 + $0x4] sm:$0xf]
        %v530 = vld [vmem:[%s1 + $0x8] sm:$0xf]
        %v531 = vld [vmem:[%s1 + $0xc] sm:$0xf]
        %v532 = vld [vmem:[%s2] sm:$0xf]
        %v533 = vld [vmem:[%s2 + $0x4] sm:$0xf]
        %v534 = vld [vmem:[%s2 + $0x8] sm:$0xf]
        %v535 = vld [vmem:[%s2 + $0xc] sm:$0xf]
        %v536 = vld [vmem:[%s3] sm:$0xf]
        %v537 = vld [vmem:[%s3 + $0x4] sm:$0xf]
        %v538 = vld [vmem:[%s3 + $0x8] sm:$0xf]
        %v539 = vld [vmem:[%s3 + $0xc] sm:$0xf]
        %v540 = vld [vmem:[%s4] sm:$0xf]
        %v541 = vld [vmem:[%s4 + $0x4] sm:$0xf]
        %v542 = vld [vmem:[%s4 + $0x8] sm:$0xf]
        %v543 = vld [vmem:[%s4 + $0xc] sm:$0xf]
        %v544 = vld [vmem:[%s4 + $0x10] sm:$0xf]
        %v545 = vld [vmem:[%s4 + $0x14] sm:$0xf]
        %v546 = vld [vmem:[%s4 + $0x18] sm:$0xf]
        %v547 = vld [vmem:[%s4 + $0x1c] sm:$0xf]
        %v548 = vld [vmem:[%s4 + $0x20] sm:$0xf]
        %v549 = vld [vmem:[%s4 + $0x24] sm:$0xf]
        %v550 = vld [vmem:[%s4 + $0x28] sm:$0xf]
        %v551 = vld [vmem:[%s4 + $0x2c] sm:$0xf]
        %v552 = vld [vmem:[%s4 + $0x30] sm:$0xf]
        %v553 = vld [vmem:[%s4 + $0x34] sm:$0xf]
        %v554 = vld [vmem:[%s4 + $0x38] sm:$0xf]
        %v555 = vld [vmem:[%s4 + $0x3c] sm:$0xf]
        %v556 = vld [vmem:[#allocation3] sm:$0x1]
        %v557 = vld [vmem:[%s6] sm:$0x3f]
        %v558 = vld [vmem:[#allocation6] sm:$0x1]
        %v559 = vpack.c.bf16 %v527, %v526
        %v561 = vlaneseq
        %v562 = vshrl.u32 %v561, 7
        %v563 = vsub.s32 0, %v562
        %v564 = vrot.slane %v556, %v563
        %v570 = vunpack.c.l.b16 %v528
        %v571 = vunpack.c.l.b16 %v529
        %v572 = vunpack.c.l.b16 %v530
        %v573 = vunpack.c.l.b16 %v531
        %v574 = vpack.c.b16 %v571, %v570
        %v575 = vpack.c.b16 %v573, %v572
        %vm578 = vcmask 261120
        %v580 = vsel %vm578, %v559, 0
        %582 = vmatprep.subr.bf16.mxu0 0
        %583 = vmatpush1.bf16.msra.mxu0 0
        %584 = vmatprep.subr.bf16.mxu0 0
        %585 = vmatpush1.bf16.msra.mxu0 0
        %586 = vmatprep.subr.bf16.mxu0 0
        %587 = vmatpush1.bf16.msra.mxu0 0
        %588 = vmatprep.subr.bf16.mxu0 0
        %589 = vmatpush1.bf16.msra.mxu0 0
        %590 = vmatprep.subr.bf16.mxu0 0
        %591 = vmatpush1.bf16.msra.mxu0 0
        %592 = vmatprep.subr.bf16.mxu0 0
        %593 = vmatpush1.bf16.msra.mxu0 0
        %594 = vmatprep.subr.bf16.mxu0 0
        %595 = vmatpush1.bf16.msra.mxu0 %v575
        %596 = vmatprep.subr.bf16.mxu0 0
        %597 = vmatpush1.bf16.msra.mxu0 %v574
        %598 = vmatprep.subr.bf16.mxu0 0
        %599 = vmatpush2.bf16.msra.mxu0 0
        %600 = vmatprep.subr.bf16.mxu0 0
        %601 = vmatpush2.bf16.msra.mxu0 0
        %602 = vmatprep.subr.bf16.mxu0 0
        %603 = vmatpush2.bf16.msra.mxu0 0
        %604 = vmatprep.subr.bf16.mxu0 0
        %605 = vmatpush2.bf16.msra.mxu0 0
        %606 = vmatprep.subr.bf16.mxu0 0
        %607 = vmatpush2.bf16.msra.mxu0 0
        %608 = vmatprep.subr.bf16.mxu0 0
        %609 = vmatpush2.bf16.msra.mxu0 0
        %610 = vmatprep.subr.bf16.mxu0 0
        %611 = vmatpush2.bf16.msra.mxu0 0
        %612 = vmatprep.subr.bf16.mxu0 0
        %613 = vmatpush2.bf16.msra.mxu0 0
        %614 = vmatprep.mubr.bf16.mxu0 0
        %615 = vmatmul.mubr.bf16.gmra.mxu0 %v580
        %v616 = vpop.f32.mrf.mxu0
        %v617 = vadd.f32 %v564, %v616
        %v618 = vpop.f32.mrf.mxu0
        %v619 = vpop.f32.mrf.mxu0
        %v620 = vadd.f32 %v564, %v619
        %v621 = vpop.f32.mrf.mxu0
        %622 = vdwg.mxu0
        %v623 = vmul.f32 %v617, 0.25
        %v624 = vmul.f32 %v620, 0.25
        %v625 = vpack.c.bf16 %v623, %v623
        %v626 = vpack.c.bf16 %v624, %v624
        %v627 = vpack.c.bf16 %v617, %v617
        %v628 = vpack.c.bf16 %v620, %v620
        %630 = vrot.lane.b32.xlu0 %v627, 96
        %v631 = vpop.permute.xlu0 %630
        %vm632 = vcmask 130048
        %v634 = vsel %vm632, %v625, 0
        %v637 = vsel %vm632, %v631, 0
        %639 = vmatprep.subr.bf16.mxu0 0
        %640 = vmatpush1.bf16.xpose.msra.mxu0 0
        %641 = vmatprep.subr.bf16.mxu0 0
        %642 = vmatpush1.bf16.xpose.msra.mxu0 0
        %643 = vmatprep.subr.bf16.mxu0 0
        %644 = vmatpush1.bf16.xpose.msra.mxu0 0
        %645 = vmatprep.subr.bf16.mxu0 0
        %646 = vmatpush1.bf16.xpose.msra.mxu0 0
        %647 = vmatprep.subr.bf16.mxu0 0
        %648 = vmatpush1.bf16.xpose.msra.mxu0 0
        %649 = vmatprep.subr.bf16.mxu0 0
        %650 = vmatpush1.bf16.xpose.msra.mxu0 0
        %651 = vmatprep.subr.bf16.mxu0 0
        %652 = vmatpush1.bf16.xpose.msra.mxu0 0
        %653 = vmatprep.subr.bf16.mxu0 0
        %654 = vmatpush1.bf16.xpose.msra.mxu0 %v637
        %655 = vmatprep.subr.bf16.mxu0 0
        %656 = vmatpush2.bf16.xpose.msra.mxu0 0
        %657 = vmatprep.subr.bf16.mxu0 0
        %658 = vmatpush2.bf16.xpose.msra.mxu0 0
        %659 = vmatprep.subr.bf16.mxu0 0
        %660 = vmatpush2.bf16.xpose.msra.mxu0 0
        %661 = vmatprep.subr.bf16.mxu0 0
        %662 = vmatpush2.bf16.xpose.msra.mxu0 0
        %663 = vmatprep.subr.bf16.mxu0 0
        %664 = vmatpush2.bf16.xpose.msra.mxu0 0
        %665 = vmatprep.subr.bf16.mxu0 0
        %666 = vmatpush2.bf16.xpose.msra.mxu0 0
        %667 = vmatprep.subr.bf16.mxu0 0
        %668 = vmatpush2.bf16.xpose.msra.mxu0 0
        %669 = vmatprep.subr.bf16.mxu0 0
        %670 = vmatpush2.bf16.xpose.msra.mxu0 0
        %671 = vmatprep.mubr.bf16.mxu0 0
        %672 = vmatmul.mubr.bf16.gmra.mxu0 %v634
        %v673 = vpop.f32.mrf.mxu0
        %v674 = vadd.f32 0.0, %v673
        %v675 = vpop.f32.mrf.mxu0
        %v676 = vpop.f32.mrf.mxu0
        %v677 = vpop.f32.mrf.mxu0
        %678 = vdwg.mxu0
        %680 = vrot.lane.b32.xlu0 %v628, 96
        %v681 = vpop.permute.xlu0 %680
        %v683 = vsel %vm632, %v626, 0
        %v686 = vsel %vm632, %v681, 0
        %688 = vmatprep.subr.bf16.mxu0 0
        %689 = vmatpush1.bf16.xpose.msra.mxu0 0
        %690 = vmatprep.subr.bf16.mxu0 0
        %691 = vmatpush1.bf16.xpose.msra.mxu0 0
        %692 = vmatprep.subr.bf16.mxu0 0
        %693 = vmatpush1.bf16.xpose.msra.mxu0 0
        %694 = vmatprep.subr.bf16.mxu0 0
        %695 = vmatpush1.bf16.xpose.msra.mxu0 0
        %696 = vmatprep.subr.bf16.mxu0 0
        %697 = vmatpush1.bf16.xpose.msra.mxu0 0
        %698 = vmatprep.subr.bf16.mxu0 0
        %699 = vmatpush1.bf16.xpose.msra.mxu0 0
        %700 = vmatprep.subr.bf16.mxu0 0
        %701 = vmatpush1.bf16.xpose.msra.mxu0 0
        %702 = vmatprep.subr.bf16.mxu0 0
        %703 = vmatpush1.bf16.xpose.msra.mxu0 %v686
        %704 = vmatprep.subr.bf16.mxu0 0
        %705 = vmatpush2.bf16.xpose.msra.mxu0 0
        %706 = vmatprep.subr.bf16.mxu0 0
        %707 = vmatpush2.bf16.xpose.msra.mxu0 0
        %708 = vmatprep.subr.bf16.mxu0 0
        %709 = vmatpush2.bf16.xpose.msra.mxu0 0
        %710 = vmatprep.subr.bf16.mxu0 0
        %711 = vmatpush2.bf16.xpose.msra.mxu0 0
        %712 = vmatprep.subr.bf16.mxu0 0
        %713 = vmatpush2.bf16.xpose.msra.mxu0 0
        %714 = vmatprep.subr.bf16.mxu0 0
        %715 = vmatpush2.bf16.xpose.msra.mxu0 0
        %716 = vmatprep.subr.bf16.mxu0 0
        %717 = vmatpush2.bf16.xpose.msra.mxu0 0
        %718 = vmatprep.subr.bf16.mxu0 0
        %719 = vmatpush2.bf16.xpose.msra.mxu0 0
        %720 = vmatprep.mubr.bf16.mxu0 0
        %721 = vmatmul.mubr.bf16.gmra.mxu0 %v683
        %v722 = vpop.f32.mrf.mxu0
        %v723 = vadd.f32 0.0, %v722
        %v724 = vpop.f32.mrf.mxu0
        %v725 = vpop.f32.mrf.mxu0
        %v726 = vpop.f32.mrf.mxu0
        %727 = vdwg.mxu0
        %vm728 = vcmask 64512
        %v729 = vsel %vm728, %v674, -inf
        %730 = vmax.xlane.f32.xlu0 %v729
        %v731 = vpop.xlane.xlu0 %730
        %v732 = vsel %vm728, %v723, -inf
        %733 = vmax.xlane.f32.xlu0 %v732
        %v734 = vpop.xlane.xlu0 %733
        %v735 = vsub.f32 %v674, %v731
        %v736 = vsub.f32 %v723, %v734
        %v737 = vmul.f32 %v735, 1.442695
        %v738 = vpow.pop %v737
        %v739 = vmul.f32 %v736, 1.442695
        %v740 = vpow.pop %v739
        %v741 = vsel %vm728, %v738, 0.0
        %742 = vadd.xlane.f32.xlu0 %v741
        %v743 = vpop.xlane.xlu0 %742
        %v744 = vsel %vm728, %v740, 0.0
        %745 = vadd.xlane.f32.xlu0 %v744
        %v746 = vpop.xlane.xlu0 %745
        %v747 = vrcp.pop %v743
        %v748 = vmul.f32 %v738, %v747
        %v749 = vrcp.pop %v746
        %v750 = vmul.f32 %v740, %v749
        %v751 = vpack.c.bf16 %v748, %v748
        %v752 = vpack.c.bf16 %v750, %v750
        %753 = vrot.lane.b32.xlu0 %v627, 64
        %v754 = vpop.permute.xlu0 %753
        %v756 = vsel %vm728, %v751, 0
        %vm758 = vcmask 1043456
        %v760 = vsel %vm758, %v754, 0
        %762 = vmatprep.subr.bf16.mxu0 0
        %763 = vmatpush1.bf16.msra.mxu0 0
        %764 = vmatprep.subr.bf16.mxu0 0
        %765 = vmatpush1.bf16.msra.mxu0 0
        %766 = vmatprep.subr.bf16.mxu0 0
        %767 = vmatpush1.bf16.msra.mxu0 0
        %768 = vmatprep.subr.bf16.mxu0 0
        %769 = vmatpush1.bf16.msra.mxu0 0
        %770 = vmatprep.subr.bf16.mxu0 0
        %771 = vmatpush1.bf16.msra.mxu0 0
        %772 = vmatprep.subr.bf16.mxu0 0
        %773 = vmatpush1.bf16.msra.mxu0 0
        %774 = vmatprep.subr.bf16.mxu0 0
        %775 = vmatpush1.bf16.msra.mxu0 0
        %776 = vmatprep.subr.bf16.mxu0 0
        %777 = vmatpush1.bf16.msra.mxu0 %v760
        %778 = vmatprep.subr.bf16.mxu0 0
        %779 = vmatpush2.bf16.msra.mxu0 0
        %780 = vmatprep.subr.bf16.mxu0 0
        %781 = vmatpush2.bf16.msra.mxu0 0
        %782 = vmatprep.subr.bf16.mxu0 0
        %783 = vmatpush2.bf16.msra.mxu0 0
        %784 = vmatprep.subr.bf16.mxu0 0
        %785 = vmatpush2.bf16.msra.mxu0 0
        %786 = vmatprep.subr.bf16.mxu0 0
        %787 = vmatpush2.bf16.msra.mxu0 0
        %788 = vmatprep.subr.bf16.mxu0 0
        %789 = vmatpush2.bf16.msra.mxu0 0
        %790 = vmatprep.subr.bf16.mxu0 0
        %791 = vmatpush2.bf16.msra.mxu0 0
        %792 = vmatprep.subr.bf16.mxu0 0
        %793 = vmatpush2.bf16.msra.mxu0 0
        %794 = vmatprep.mubr.bf16.mxu0 0
        %795 = vmatmul.mubr.bf16.gmra.mxu0 %v756
        %v796 = vpop.f32.mrf.mxu0
        %v797 = vadd.f32 0.0, %v796
        %v798 = vpop.f32.mrf.mxu0
        %v799 = vpop.f32.mrf.mxu0
        %v800 = vpop.f32.mrf.mxu0
        %801 = vdwg.mxu0
        %802 = vrot.lane.b32.xlu0 %v628, 64
        %v803 = vpop.permute.xlu0 %802
        %v805 = vsel %vm728, %v752, 0
        %v808 = vsel %vm758, %v803, 0
        %810 = vmatprep.subr.bf16.mxu0 0
        %811 = vmatpush1.bf16.msra.mxu0 0
        %812 = vmatprep.subr.bf16.mxu0 0
        %813 = vmatpush1.bf16.msra.mxu0 0
        %814 = vmatprep.subr.bf16.mxu0 0
        %815 = vmatpush1.bf16.msra.mxu0 0
        %816 = vmatprep.subr.bf16.mxu0 0
        %817 = vmatpush1.bf16.msra.mxu0 0
        %818 = vmatprep.subr.bf16.mxu0 0
        %819 = vmatpush1.bf16.msra.mxu0 0
        %820 = vmatprep.subr.bf16.mxu0 0
        %821 = vmatpush1.bf16.msra.mxu0 0
        %822 = vmatprep.subr.bf16.mxu0 0
        %823 = vmatpush1.bf16.msra.mxu0 0
        %824 = vmatprep.subr.bf16.mxu0 0
        %825 = vmatpush1.bf16.msra.mxu0 %v808
        %826 = vmatprep.subr.bf16.mxu0 0
        %827 = vmatpush2.bf16.msra.mxu0 0
        %828 = vmatprep.subr.bf16.mxu0 0
        %829 = vmatpush2.bf16.msra.mxu0 0
        %830 = vmatprep.subr.bf16.mxu0 0
        %831 = vmatpush2.bf16.msra.mxu0 0
        %832 = vmatprep.subr.bf16.mxu0 0
        %833 = vmatpush2.bf16.msra.mxu0 0
        %834 = vmatprep.subr.bf16.mxu0 0
        %835 = vmatpush2.bf16.msra.mxu0 0
        %836 = vmatprep.subr.bf16.mxu0 0
        %837 = vmatpush2.bf16.msra.mxu0 0
        %838 = vmatprep.subr.bf16.mxu0 0
        %839 = vmatpush2.bf16.msra.mxu0 0
        %840 = vmatprep.subr.bf16.mxu0 0
        %841 = vmatpush2.bf16.msra.mxu0 0
        %842 = vmatprep.mubr.bf16.mxu0 0
        %843 = vmatmul.mubr.bf16.gmra.mxu0 %v805
        %v844 = vpop.f32.mrf.mxu0
        %v845 = vadd.f32 0.0, %v844
        %v846 = vpop.f32.mrf.mxu0
        %v847 = vpop.f32.mrf.mxu0
        %v848 = vpop.f32.mrf.mxu0
        %849 = vdwg.mxu0
        %v850 = vpack.c.bf16 %v845, %v797
        %852 = vrot.lane.b32.xlu0 %v625, 112
        %v853 = vpop.permute.xlu0 %852
        %854 = vrot.lane.b32.xlu0 %v627, 80
        %v855 = vpop.permute.xlu0 %854
        %v857 = vsel %vm632, %v853, 0
        %v860 = vsel %vm632, %v855, 0
        %862 = vmatprep.subr.bf16.mxu0 0
        %863 = vmatpush1.bf16.xpose.msra.mxu0 0
        %864 = vmatprep.subr.bf16.mxu0 0
        %865 = vmatpush1.bf16.xpose.msra.mxu0 0
        %866 = vmatprep.subr.bf16.mxu0 0
        %867 = vmatpush1.bf16.xpose.msra.mxu0 0
        %868 = vmatprep.subr.bf16.mxu0 0
        %869 = vmatpush1.bf16.xpose.msra.mxu0 0
        %870 = vmatprep.subr.bf16.mxu0 0
        %871 = vmatpush1.bf16.xpose.msra.mxu0 0
        %872 = vmatprep.subr.bf16.mxu0 0
        %873 = vmatpush1.bf16.xpose.msra.mxu0 0
        %874 = vmatprep.subr.bf16.mxu0 0
        %875 = vmatpush1.bf16.xpose.msra.mxu0 0
        %876 = vmatprep.subr.bf16.mxu0 0
        %877 = vmatpush1.bf16.xpose.msra.mxu0 %v860
        %878 = vmatprep.subr.bf16.mxu0 0
        %879 = vmatpush2.bf16.xpose.msra.mxu0 0
        %880 = vmatprep.subr.bf16.mxu0 0
        %881 = vmatpush2.bf16.xpose.msra.mxu0 0
        %882 = vmatprep.subr.bf16.mxu0 0
        %883 = vmatpush2.bf16.xpose.msra.mxu0 0
        %884 = vmatprep.subr.bf16.mxu0 0
        %885 = vmatpush2.bf16.xpose.msra.mxu0 0
        %886 = vmatprep.subr.bf16.mxu0 0
        %887 = vmatpush2.bf16.xpose.msra.mxu0 0
        %888 = vmatprep.subr.bf16.mxu0 0
        %889 = vmatpush2.bf16.xpose.msra.mxu0 0
        %890 = vmatprep.subr.bf16.mxu0 0
        %891 = vmatpush2.bf16.xpose.msra.mxu0 0
        %892 = vmatprep.subr.bf16.mxu0 0
        %893 = vmatpush2.bf16.xpose.msra.mxu0 0
        %894 = vmatprep.mubr.bf16.mxu0 0
        %895 = vmatmul.mubr.bf16.gmra.mxu0 %v857
        %v896 = vpop.f32.mrf.mxu0
        %v897 = vadd.f32 0.0, %v896
        %v898 = vpop.f32.mrf.mxu0
        %v899 = vpop.f32.mrf.mxu0
        %v900 = vpop.f32.mrf.mxu0
        %901 = vdwg.mxu0
        %903 = vrot.lane.b32.xlu0 %v626, 112
        %v904 = vpop.permute.xlu0 %903
        %905 = vrot.lane.b32.xlu0 %v628, 80
        %v906 = vpop.permute.xlu0 %905
        %v908 = vsel %vm632, %v904, 0
        %v911 = vsel %vm632, %v906, 0
        %913 = vmatprep.subr.bf16.mxu0 0
        %914 = vmatpush1.bf16.xpose.msra.mxu0 0
        %915 = vmatprep.subr.bf16.mxu0 0
        %916 = vmatpush1.bf16.xpose.msra.mxu0 0
        %917 = vmatprep.subr.bf16.mxu0 0
        %918 = vmatpush1.bf16.xpose.msra.mxu0 0
        %919 = vmatprep.subr.bf16.mxu0 0
        %920 = vmatpush1.bf16.xpose.msra.mxu0 0
        %921 = vmatprep.subr.bf16.mxu0 0
        %922 = vmatpush1.bf16.xpose.msra.mxu0 0
        %923 = vmatprep.subr.bf16.mxu0 0
        %924 = vmatpush1.bf16.xpose.msra.mxu0 0
        %925 = vmatprep.subr.bf16.mxu0 0
        %926 = vmatpush1.bf16.xpose.msra.mxu0 0
        %927 = vmatprep.subr.bf16.mxu0 0
        %928 = vmatpush1.bf16.xpose.msra.mxu0 %v911
        %929 = vmatprep.subr.bf16.mxu0 0
        %930 = vmatpush2.bf16.xpose.msra.mxu0 0
        %931 = vmatprep.subr.bf16.mxu0 0
        %932 = vmatpush2.bf16.xpose.msra.mxu0 0
        %933 = vmatprep.subr.bf16.mxu0 0
        %934 = vmatpush2.bf16.xpose.msra.mxu0 0
        %935 = vmatprep.subr.bf16.mxu0 0
        %936 = vmatpush2.bf16.xpose.msra.mxu0 0
        %937 = vmatprep.subr.bf16.mxu0 0
        %938 = vmatpush2.bf16.xpose.msra.mxu0 0
        %939 = vmatprep.subr.bf16.mxu0 0
        %940 = vmatpush2.bf16.xpose.msra.mxu0 0
        %941 = vmatprep.subr.bf16.mxu0 0
        %942 = vmatpush2.bf16.xpose.msra.mxu0 0
        %943 = vmatprep.subr.bf16.mxu0 0
        %944 = vmatpush2.bf16.xpose.msra.mxu0 0
        %945 = vmatprep.mubr.bf16.mxu0 0
        %946 = vmatmul.mubr.bf16.gmra.mxu0 %v908
        %v947 = vpop.f32.mrf.mxu0
        %v948 = vadd.f32 0.0, %v947
        %v949 = vpop.f32.mrf.mxu0
        %v950 = vpop.f32.mrf.mxu0
        %v951 = vpop.f32.mrf.mxu0
        %952 = vdwg.mxu0
        %v953 = vsel %vm728, %v897, -inf
        %954 = vmax.xlane.f32.xlu0 %v953
        %v955 = vpop.xlane.xlu0 %954
        %v956 = vsel %vm728, %v948, -inf
        %957 = vmax.xlane.f32.xlu0 %v956
        %v958 = vpop.xlane.xlu0 %957
        %v959 = vsub.f32 %v897, %v955
        %v960 = vsub.f32 %v948, %v958
        %v961 = vmul.f32 %v959, 1.442695
        %v962 = vpow.pop %v961
        %v963 = vmul.f32 %v960, 1.442695
        %v964 = vpow.pop %v963
        %v965 = vsel %vm728, %v962, 0.0
        %966 = vadd.xlane.f32.xlu0 %v965
        %v967 = vpop.xlane.xlu0 %966
        %v968 = vsel %vm728, %v964, 0.0
        %969 = vadd.xlane.f32.xlu0 %v968
        %v970 = vpop.xlane.xlu0 %969
        %v971 = vrcp.pop %v967
        %v972 = vmul.f32 %v962, %v971
        %v973 = vrcp.pop %v970
        %v974 = vmul.f32 %v964, %v973
        %v975 = vpack.c.bf16 %v972, %v972
        %v976 = vpack.c.bf16 %v974, %v974
        %977 = vrot.lane.b32.xlu0 %v627, 48
        %v978 = vpop.permute.xlu0 %977
        %v980 = vsel %vm728, %v975, 0
        %v983 = vsel %vm758, %v978, 0
        %985 = vmatprep.subr.bf16.mxu0 0
        %986 = vmatpush1.bf16.msra.mxu0 0
        %987 = vmatprep.subr.bf16.mxu0 0
        %988 = vmatpush1.bf16.msra.mxu0 0
        %989 = vmatprep.subr.bf16.mxu0 0
        %990 = vmatpush1.bf16.msra.mxu0 0
        %991 = vmatprep.subr.bf16.mxu0 0
        %992 = vmatpush1.bf16.msra.mxu0 0
        %993 = vmatprep.subr.bf16.mxu0 0
        %994 = vmatpush1.bf16.msra.mxu0 0
        %995 = vmatprep.subr.bf16.mxu0 0
        %996 = vmatpush1.bf16.msra.mxu0 0
        %997 = vmatprep.subr.bf16.mxu0 0
        %998 = vmatpush1.bf16.msra.mxu0 0
        %999 = vmatprep.subr.bf16.mxu0 0
        %1000 = vmatpush1.bf16.msra.mxu0 %v983
        %1001 = vmatprep.subr.bf16.mxu0 0
        %1002 = vmatpush2.bf16.msra.mxu0 0
        %1003 = vmatprep.subr.bf16.mxu0 0
        %1004 = vmatpush2.bf16.msra.mxu0 0
        %1005 = vmatprep.subr.bf16.mxu0 0
        %1006 = vmatpush2.bf16.msra.mxu0 0
        %1007 = vmatprep.subr.bf16.mxu0 0
        %1008 = vmatpush2.bf16.msra.mxu0 0
        %1009 = vmatprep.subr.bf16.mxu0 0
        %1010 = vmatpush2.bf16.msra.mxu0 0
        %1011 = vmatprep.subr.bf16.mxu0 0
        %1012 = vmatpush2.bf16.msra.mxu0 0
        %1013 = vmatprep.subr.bf16.mxu0 0
        %1014 = vmatpush2.bf16.msra.mxu0 0
        %1015 = vmatprep.subr.bf16.mxu0 0
        %1016 = vmatpush2.bf16.msra.mxu0 0
        %1017 = vmatprep.mubr.bf16.mxu0 0
        %1018 = vmatmul.mubr.bf16.gmra.mxu0 %v980
        %v1019 = vpop.f32.mrf.mxu0
        %v1020 = vadd.f32 0.0, %v1019
        %v1021 = vpop.f32.mrf.mxu0
        %v1022 = vpop.f32.mrf.mxu0
        %v1023 = vpop.f32.mrf.mxu0
        %1024 = vdwg.mxu0
        %1025 = vrot.lane.b32.xlu0 %v628, 48
        %v1026 = vpop.permute.xlu0 %1025
        %v1028 = vsel %vm728, %v976, 0
        %v1031 = vsel %vm758, %v1026, 0
        %1033 = vmatprep.subr.bf16.mxu0 0
        %1034 = vmatpush1.bf16.msra.mxu0 0
        %1035 = vmatprep.subr.bf16.mxu0 0
        %1036 = vmatpush1.bf16.msra.mxu0 0
        %1037 = vmatprep.subr.bf16.mxu0 0
        %1038 = vmatpush1.bf16.msra.mxu0 0
        %1039 = vmatprep.subr.bf16.mxu0 0
        %1040 = vmatpush1.bf16.msra.mxu0 0
        %1041 = vmatprep.subr.bf16.mxu0 0
        %1042 = vmatpush1.bf16.msra.mxu0 0
        %1043 = vmatprep.subr.bf16.mxu0 0
        %1044 = vmatpush1.bf16.msra.mxu0 0
        %1045 = vmatprep.subr.bf16.mxu0 0
        %1046 = vmatpush1.bf16.msra.mxu0 0
        %1047 = vmatprep.subr.bf16.mxu0 0
        %1048 = vmatpush1.bf16.msra.mxu0 %v1031
        %1049 = vmatprep.subr.bf16.mxu0 0
        %1050 = vmatpush2.bf16.msra.mxu0 0
        %1051 = vmatprep.subr.bf16.mxu0 0
        %1052 = vmatpush2.bf16.msra.mxu0 0
        %1053 = vmatprep.subr.bf16.mxu0 0
        %1054 = vmatpush2.bf16.msra.mxu0 0
        %1055 = vmatprep.subr.bf16.mxu0 0
        %1056 = vmatpush2.bf16.msra.mxu0 0
        %1057 = vmatprep.subr.bf16.mxu0 0
        %1058 = vmatpush2.bf16.msra.mxu0 0
        %1059 = vmatprep.subr.bf16.mxu0 0
        %1060 = vmatpush2.bf16.msra.mxu0 0
        %1061 = vmatprep.subr.bf16.mxu0 0
        %1062 = vmatpush2.bf16.msra.mxu0 0
        %1063 = vmatprep.subr.bf16.mxu0 0
        %1064 = vmatpush2.bf16.msra.mxu0 0
        %1065 = vmatprep.mubr.bf16.mxu0 0
        %1066 = vmatmul.mubr.bf16.gmra.mxu0 %v1028
        %v1067 = vpop.f32.mrf.mxu0
        %v1068 = vadd.f32 0.0, %v1067
        %v1069 = vpop.f32.mrf.mxu0
        %v1070 = vpop.f32.mrf.mxu0
        %v1071 = vpop.f32.mrf.mxu0
        %1072 = vdwg.mxu0
        %v1073 = vpack.c.bf16 %v1068, %v1020
        %v1076 = vunpack.c.l.b16 %v534
        %v1077 = vunpack.c.l.b16 %v535
        %v1078 = vpack.c.b16 %v1077, %v1076
        %v1081 = vsel %vm632, %v1073, 0
        %1083 = vmatprep.subr.bf16.mxu0 0
        %1084 = vmatpush1.bf16.msra.mxu0 0
        %1085 = vmatprep.subr.bf16.mxu0 0
        %1086 = vmatpush1.bf16.msra.mxu0 0
        %1087 = vmatprep.subr.bf16.mxu0 0
        %1088 = vmatpush1.bf16.msra.mxu0 0
        %1089 = vmatprep.subr.bf16.mxu0 0
        %1090 = vmatpush1.bf16.msra.mxu0 0
        %1091 = vmatprep.subr.bf16.mxu0 0
        %1092 = vmatpush1.bf16.msra.mxu0 0
        %1093 = vmatprep.subr.bf16.mxu0 0
        %1094 = vmatpush1.bf16.msra.mxu0 0
        %1095 = vmatprep.subr.bf16.mxu0 0
        %1096 = vmatpush1.bf16.msra.mxu0 0
        %1097 = vmatprep.subr.bf16.mxu0 0
        %1098 = vmatpush1.bf16.msra.mxu0 %v1078
        %1099 = vmatprep.subr.bf16.mxu0 0
        %1100 = vmatpush2.bf16.msra.mxu0 0
        %1101 = vmatprep.subr.bf16.mxu0 0
        %1102 = vmatpush2.bf16.msra.mxu0 0
        %1103 = vmatprep.subr.bf16.mxu0 0
        %1104 = vmatpush2.bf16.msra.mxu0 0
        %1105 = vmatprep.subr.bf16.mxu0 0
        %1106 = vmatpush2.bf16.msra.mxu0 0
        %1107 = vmatprep.subr.bf16.mxu0 0
        %1108 = vmatpush2.bf16.msra.mxu0 0
        %1109 = vmatprep.subr.bf16.mxu0 0
        %1110 = vmatpush2.bf16.msra.mxu0 0
        %1111 = vmatprep.subr.bf16.mxu0 0
        %1112 = vmatpush2.bf16.msra.mxu0 0
        %1113 = vmatprep.subr.bf16.mxu0 0
        %1114 = vmatpush2.bf16.msra.mxu0 0
        %1115 = vmatprep.mubr.bf16.mxu0 0
        %1116 = vmatmul.mubr.bf16.gmra.mxu0 %v1081
        %v1117 = vpop.f32.mrf.mxu0
        %v1118 = vadd.f32 0.0, %v1117
        %v1119 = vpop.f32.mrf.mxu0
        %v1120 = vpop.f32.mrf.mxu0
        %v1121 = vadd.f32 0.0, %v1120
        %v1122 = vpop.f32.mrf.mxu0
        %1123 = vdwg.mxu0
        %v1126 = vunpack.c.l.b16 %v532
        %v1127 = vunpack.c.l.b16 %v533
        %v1128 = vpack.c.b16 %v1127, %v1126
        %v1131 = vsel %vm632, %v850, 0
        %1133 = vmatprep.subr.bf16.mxu0 0
        %1134 = vmatpush1.bf16.msra.mxu0 0
        %1135 = vmatprep.subr.bf16.mxu0 0
        %1136 = vmatpush1.bf16.msra.mxu0 0
        %1137 = vmatprep.subr.bf16.mxu0 0
        %1138 = vmatpush1.bf16.msra.mxu0 0
        %1139 = vmatprep.subr.bf16.mxu0 0
        %1140 = vmatpush1.bf16.msra.mxu0 0
        %1141 = vmatprep.subr.bf16.mxu0 0
        %1142 = vmatpush1.bf16.msra.mxu0 0
        %1143 = vmatprep.subr.bf16.mxu0 0
        %1144 = vmatpush1.bf16.msra.mxu0 0
        %1145 = vmatprep.subr.bf16.mxu0 0
        %1146 = vmatpush1.bf16.msra.mxu0 0
        %1147 = vmatprep.subr.bf16.mxu0 0
        %1148 = vmatpush1.bf16.msra.mxu0 %v1128
        %1149 = vmatprep.subr.bf16.mxu0 0
        %1150 = vmatpush2.bf16.msra.mxu0 0
        %1151 = vmatprep.subr.bf16.mxu0 0
        %1152 = vmatpush2.bf16.msra.mxu0 0
        %1153 = vmatprep.subr.bf16.mxu0 0
        %1154 = vmatpush2.bf16.msra.mxu0 0
        %1155 = vmatprep.subr.bf16.mxu0 0
        %1156 = vmatpush2.bf16.msra.mxu0 0
        %1157 = vmatprep.subr.bf16.mxu0 0
        %1158 = vmatpush2.bf16.msra.mxu0 0
        %1159 = vmatprep.subr.bf16.mxu0 0
        %1160 = vmatpush2.bf16.msra.mxu0 0
        %1161 = vmatprep.subr.bf16.mxu0 0
        %1162 = vmatpush2.bf16.msra.mxu0 0
        %1163 = vmatprep.subr.bf16.mxu0 0
        %1164 = vmatpush2.bf16.msra.mxu0 0
        %1165 = vmatprep.mubr.bf16.mxu0 0
        %1166 = vmatmul.mubr.bf16.gmra.mxu0 %v1131
        %v1167 = vpop.f32.mrf.mxu0
        %v1168 = vadd.f32 %v1118, %v1167
        %v1169 = vpop.f32.mrf.mxu0
        %v1170 = vpop.f32.mrf.mxu0
        %v1171 = vadd.f32 %v1121, %v1170
        %v1172 = vpop.f32.mrf.mxu0
        %1173 = vdwg.mxu0
        %v1174 = vlaneseq
        %v1175 = vshrl.u32 %v1174, 7
        %v1176 = vsub.s32 0, %v1175
        %v1177 = vrot.slane %v557, %v1176
        %v1178 = vadd.f32 %v1168, %v1177
        %v1179 = vadd.f32 %v1171, %v1177
        %v1180 = vsel %vm578, %v1178, 0.0
        %1181 = vadd.xlane.f32.xlu0 %v1180
        %v1182 = vpop.xlane.xlu0 %1181
        %v1183 = vsel %vm578, %v1179, 0.0
        %1184 = vadd.xlane.f32.xlu0 %v1183
        %v1185 = vpop.xlane.xlu0 %1184
        %v1186 = vrcp.pop 32.0
        %v1187 = vmul.f32 %v1182, %v1186
        %v1188 = vmul.f32 %v1185, %v1186
        %v1189 = vsub.f32 %v1178, %v1187
        %v1190 = vsub.f32 %v1179, %v1188
        %v1191 = vmul.f32 %v1189, %v1189
        %v1192 = vmul.f32 %v1190, %v1190
        %v1193 = vsel %vm578, %v1191, 0.0
        %1194 = vadd.xlane.f32.xlu0 %v1193
        %v1195 = vpop.xlane.xlu0 %1194
        %v1196 = vsel %vm578, %v1192, 0.0
        %1197 = vadd.xlane.f32.xlu0 %v1196
        %v1198 = vpop.xlane.xlu0 %1197
        %v1199 = vmul.f32 %v1195, %v1186
        %v1200 = vmul.f32 %v1198, %v1186
        %v1201 = vadd.f32 %v1199, 1e-05
        %v1202 = vadd.f32 %v1200, 1e-05
        %v1203 = vrsqrt.pop %v1201
        %v1204 = vrsqrt.pop %v1202
        %v1205 = vmul.f32 %v1189, %v1203
        %v1206 = vmul.f32 %v1190, %v1204
        %v1207 = vlaneseq
        %v1208 = vshrl.u32 %v1207, 7
        %v1209 = vsub.s32 1, %v1208
        %v1210 = vrot.slane %v557, %v1209
        %v1211 = vmul.f32 %v1205, %v1210
        %v1212 = vmul.f32 %v1206, %v1210
        %v1213 = vlaneseq
        %v1214 = vshrl.u32 %v1213, 7
        %v1215 = vsub.s32 2, %v1214
        %v1216 = vrot.slane %v557, %v1215
        %v1217 = vadd.f32 %v1211, %v1216
        %v1218 = vadd.f32 %v1212, %v1216
        %v1219 = vadd.f32 %v526, %v1217
        %v1220 = vadd.f32 %v527, %v1218
        %v1221 = vpack.c.bf16 %v1220, %v1219
        %v1223 = vlaneseq
        %v1224 = vshrl.u32 %v1223, 7
        %v1225 = vsub.s32 0, %v1224
        %v1226 = vrot.slane %v558, %v1225
        %v1232 = vunpack.c.l.b16 %v536
        %v1233 = vunpack.c.l.b16 %v537
        %v1234 = vunpack.c.l.b16 %v538
        %v1235 = vunpack.c.l.b16 %v539
        %v1236 = vpack.c.b16 %v1233, %v1232
        %v1237 = vpack.c.b16 %v1235, %v1234
        %v1241 = vsel %vm578, %v1221, 0
        %1243 = vmatprep.subr.bf16.mxu0 0
        %1244 = vmatpush1.bf16.msra.mxu0 0
        %1245 = vmatprep.subr.bf16.mxu0 0
        %1246 = vmatpush1.bf16.msra.mxu0 0
        %1247 = vmatprep.subr.bf16.mxu0 0
        %1248 = vmatpush1.bf16.msra.mxu0 0
        %1249 = vmatprep.subr.bf16.mxu0 0
        %1250 = vmatpush1.bf16.msra.mxu0 0
        %1251 = vmatprep.subr.bf16.mxu0 0
        %1252 = vmatpush1.bf16.msra.mxu0 0
        %1253 = vmatprep.subr.bf16.mxu0 0
        %1254 = vmatpush1.bf16.msra.mxu0 0
        %1255 = vmatprep.subr.bf16.mxu0 0
        %1256 = vmatpush1.bf16.msra.mxu0 %v1237
        %1257 = vmatprep.subr.bf16.mxu0 0
        %1258 = vmatpush1.bf16.msra.mxu0 %v1236
        %1259 = vmatprep.subr.bf16.mxu0 0
        %1260 = vmatpush2.bf16.msra.mxu0 0
        %1261 = vmatprep.subr.bf16.mxu0 0
        %1262 = vmatpush2.bf16.msra.mxu0 0
        %1263 = vmatprep.subr.bf16.mxu0 0
        %1264 = vmatpush2.bf16.msra.mxu0 0
        %1265 = vmatprep.subr.bf16.mxu0 0
        %1266 = vmatpush2.bf16.msra.mxu0 0
        %1267 = vmatprep.subr.bf16.mxu0 0
        %1268 = vmatpush2.bf16.msra.mxu0 0
        %1269 = vmatprep.subr.bf16.mxu0 0
        %1270 = vmatpush2.bf16.msra.mxu0 0
        %1271 = vmatprep.subr.bf16.mxu0 0
        %1272 = vmatpush2.bf16.msra.mxu0 0
        %1273 = vmatprep.subr.bf16.mxu0 0
        %1274 = vmatpush2.bf16.msra.mxu0 0
        %1275 = vmatprep.mubr.bf16.mxu0 0
        %1276 = vmatmul.mubr.bf16.gmra.mxu0 %v1241
        %v1277 = vpop.f32.mrf.mxu0
        %v1278 = vadd.f32 %v1226, %v1277
        %v1279 = vpop.f32.mrf.mxu0
        %v1280 = vpop.f32.mrf.mxu0
        %v1281 = vadd.f32 %v1226, %v1280
        %v1282 = vpop.f32.mrf.mxu0
        %1283 = vdwg.mxu0
        %v1284 = vmul.f32 %v1278, 0.5
        %v1285 = vmul.f32 %v1281, 0.5
        %v1286 = vmul.f32 %v1278, 0.044715
        %v1287 = vmul.f32 %v1281, 0.044715
        %v1288 = vmul.f32 %v1286, %v1278
        %v1289 = vmul.f32 %v1287, %v1281
        %v1290 = vmul.f32 %v1288, %v1278
        %v1291 = vmul.f32 %v1289, %v1281
        %v1292 = vadd.f32 %v1278, %v1290
        %v1293 = vadd.f32 %v1281, %v1291
        %v1294 = vmul.f32 %v1292, 0.7978846
        %v1295 = vmul.f32 %v1293, 0.7978846
        %v1296 = vtanh.pop %v1294
        %v1297 = vtanh.pop %v1295
        %v1298 = vadd.f32 %v1296, 1.0
        %v1299 = vadd.f32 %v1297, 1.0
        %v1300 = vmul.f32 %v1284, %v1298
        %v1301 = vmul.f32 %v1285, %v1299
        %v1302 = vpack.c.bf16 %v1301, %v1300
        %v1303 = vlaneseq
        %v1304 = vshrl.u32 %v1303, 7
        %v1305 = vsub.s32 3, %v1304
        %v1306 = vrot.slane %v557, %v1305
        %v1323 = vunpack.c.l.b16 %v540
        %v1324 = vunpack.c.l.b16 %v541
        %v1325 = vunpack.c.l.b16 %v542
        %v1326 = vunpack.c.l.b16 %v543
        %v1327 = vunpack.c.l.b16 %v544
        %v1328 = vunpack.c.l.b16 %v545
        %v1329 = vunpack.c.l.b16 %v546
        %v1330 = vunpack.c.l.b16 %v547
        %v1331 = vunpack.c.l.b16 %v548
        %v1332 = vunpack.c.l.b16 %v549
        %v1333 = vunpack.c.l.b16 %v550
        %v1334 = vunpack.c.l.b16 %v551
        %v1335 = vunpack.c.l.b16 %v552
        %v1336 = vunpack.c.l.b16 %v553
        %v1337 = vunpack.c.l.b16 %v554
        %v1338 = vunpack.c.l.b16 %v555
        %v1339 = vpack.c.b16 %v1324, %v1323
        %v1340 = vpack.c.b16 %v1326, %v1325
        %v1341 = vpack.c.b16 %v1328, %v1327
        %v1342 = vpack.c.b16 %v1330, %v1329
        %v1343 = vpack.c.b16 %v1332, %v1331
        %v1344 = vpack.c.b16 %v1334, %v1333
        %v1345 = vpack.c.b16 %v1336, %v1335
        %v1346 = vpack.c.b16 %v1338, %v1337
        %1355 = vmatprep.subr.bf16.mxu0 0
        %1356 = vmatpush1.bf16.msra.mxu0 %v1346
        %1357 = vmatprep.subr.bf16.mxu0 0
        %1358 = vmatpush1.bf16.msra.mxu0 %v1345
        %1359 = vmatprep.subr.bf16.mxu0 0
        %1360 = vmatpush1.bf16.msra.mxu0 %v1344
        %1361 = vmatprep.subr.bf16.mxu0 0
        %1362 = vmatpush1.bf16.msra.mxu0 %v1343
        %1363 = vmatprep.subr.bf16.mxu0 0
        %1364 = vmatpush1.bf16.msra.mxu0 %v1342
        %1365 = vmatprep.subr.bf16.mxu0 0
        %1366 = vmatpush1.bf16.msra.mxu0 %v1341
        %1367 = vmatprep.subr.bf16.mxu0 0
        %1368 = vmatpush1.bf16.msra.mxu0 %v1340
        %1369 = vmatprep.subr.bf16.mxu0 0
        %1370 = vmatpush1.bf16.msra.mxu0 %v1339
        %1371 = vmatprep.subr.bf16.mxu0 0
        %1372 = vmatpush2.bf16.msra.mxu0 0
        %1373 = vmatprep.subr.bf16.mxu0 0
        %1374 = vmatpush2.bf16.msra.mxu0 0
        %1375 = vmatprep.subr.bf16.mxu0 0
        %1376 = vmatpush2.bf16.msra.mxu0 0
        %1377 = vmatprep.subr.bf16.mxu0 0
        %1378 = vmatpush2.bf16.msra.mxu0 0
        %1379 = vmatprep.subr.bf16.mxu0 0
        %1380 = vmatpush2.bf16.msra.mxu0 0
        %1381 = vmatprep.subr.bf16.mxu0 0
        %1382 = vmatpush2.bf16.msra.mxu0 0
        %1383 = vmatprep.subr.bf16.mxu0 0
        %1384 = vmatpush2.bf16.msra.mxu0 0
        %1385 = vmatprep.subr.bf16.mxu0 0
        %1386 = vmatpush2.bf16.msra.mxu0 0
        %1387 = vmatprep.mubr.bf16.mxu0 0
        %1388 = vmatmul.mubr.bf16.gmra.mxu0 %v1302
        %v1389 = vpop.f32.mrf.mxu0
        %v1390 = vadd.f32 %v1306, %v1389
        %v1391 = vpop.f32.mrf.mxu0
        %v1392 = vpop.f32.mrf.mxu0
        %v1393 = vadd.f32 %v1306, %v1392
        %v1394 = vpop.f32.mrf.mxu0
        %1395 = vdwg.mxu0
        %v1396 = vsel %vm578, %v1390, 0.0
        %1397 = vadd.xlane.f32.xlu0 %v1396
        %v1398 = vpop.xlane.xlu0 %1397
        %v1399 = vsel %vm578, %v1393, 0.0
        %1400 = vadd.xlane.f32.xlu0 %v1399
        %v1401 = vpop.xlane.xlu0 %1400
        %v1402 = vmul.f32 %v1398, %v1186
        %v1403 = vmul.f32 %v1401, %v1186
        %v1404 = vsub.f32 %v1390, %v1402
        %v1405 = vsub.f32 %v1393, %v1403
        %v1406 = vmul.f32 %v1404, %v1404
        %v1407 = vmul.f32 %v1405, %v1405
        %v1408 = vsel %vm578, %v1406, 0.0
        %1409 = vadd.xlane.f32.xlu0 %v1408
        %v1410 = vpop.xlane.xlu0 %1409
        %v1411 = vsel %vm578, %v1407, 0.0
        %1412 = vadd.xlane.f32.xlu0 %v1411
        %v1413 = vpop.xlane.xlu0 %1412
        %v1414 = vmul.f32 %v1410, %v1186
        %v1415 = vmul.f32 %v1413, %v1186
        %v1416 = vadd.f32 %v1414, 1e-05
        %v1417 = vadd.f32 %v1415, 1e-05
        %v1418 = vrsqrt.pop %v1416
        %v1419 = vrsqrt.pop %v1417
        %v1420 = vmul.f32 %v1404, %v1418
        %v1421 = vmul.f32 %v1405, %v1419
        %v1422 = vlaneseq
        %v1423 = vshrl.u32 %v1422, 7
        %v1424 = vsub.s32 4, %v1423
        %v1425 = vrot.slane %v557, %v1424
        %v1426 = vmul.f32 %v1420, %v1425
        %v1427 = vmul.f32 %v1421, %v1425
        %v1428 = vlaneseq
        %v1429 = vshrl.u32 %v1428, 7
        %v1430 = vsub.s32 5, %v1429
        %v1431 = vrot.slane %v557, %v1430
        %v1432 = vadd.f32 %v1426, %v1431
        %v1433 = vadd.f32 %v1427, %v1431
        %v1434 = vadd.f32 %v1219, %v1432
        %v1435 = vadd.f32 %v1220, %v1433
        %s1436 = scalar_lea.vmem %s1, 16
        %v1437 = vld [vmem:[%s1436] sm:$0xf]
        %v1438 = vld [vmem:[%s1436 + $0x4] sm:$0xf]
        %v1439 = vld [vmem:[%s1436 + $0x8] sm:$0xf]
        %v1440 = vld [vmem:[%s1436 + $0xc] sm:$0xf]
        %s1441 = scalar_lea.vmem %s2, 16
        %v1442 = vld [vmem:[%s1441] sm:$0xf]
        %v1443 = vld [vmem:[%s1441 + $0x4] sm:$0xf]
        %v1444 = vld [vmem:[%s1441 + $0x8] sm:$0xf]
        %v1445 = vld [vmem:[%s1441 + $0xc] sm:$0xf]
        %s1446 = scalar_lea.vmem %s3, 16
        %v1447 = vld [vmem:[%s1446] sm:$0xf]
        %v1448 = vld [vmem:[%s1446 + $0x4] sm:$0xf]
        %v1449 = vld [vmem:[%s1446 + $0x8] sm:$0xf]
        %v1450 = vld [vmem:[%s1446 + $0xc] sm:$0xf]
        %s1451 = scalar_lea.vmem %s4, 64
        %v1452 = vld [vmem:[%s1451] sm:$0xf]
        %v1453 = vld [vmem:[%s1451 + $0x4] sm:$0xf]
        %v1454 = vld [vmem:[%s1451 + $0x8] sm:$0xf]
        %v1455 = vld [vmem:[%s1451 + $0xc] sm:$0xf]
        %v1456 = vld [vmem:[%s1451 + $0x10] sm:$0xf]
        %v1457 = vld [vmem:[%s1451 + $0x14] sm:$0xf]
        %v1458 = vld [vmem:[%s1451 + $0x18] sm:$0xf]
        %v1459 = vld [vmem:[%s1451 + $0x1c] sm:$0xf]
        %v1460 = vld [vmem:[%s1451 + $0x20] sm:$0xf]
        %v1461 = vld [vmem:[%s1451 + $0x24] sm:$0xf]
        %v1462 = vld [vmem:[%s1451 + $0x28] sm:$0xf]
        %v1463 = vld [vmem:[%s1451 + $0x2c] sm:$0xf]
        %v1464 = vld [vmem:[%s1451 + $0x30] sm:$0xf]
        %v1465 = vld [vmem:[%s1451 + $0x34] sm:$0xf]
        %v1466 = vld [vmem:[%s1451 + $0x38] sm:$0xf]
        %v1467 = vld [vmem:[%s1451 + $0x3c] sm:$0xf]
        %s1468 = scalar_lea.vmem [#allocation3], 1
        %v1469 = vld [vmem:[%s1468] sm:$0x1]
        %s1470 = scalar_lea.vmem %s6, 8
        %v1471 = vld [vmem:[%s1470] sm:$0x3f]
        %s1472 = scalar_lea.vmem [#allocation6], 1
        %v1473 = vld [vmem:[%s1472] sm:$0x1]
        %v1474 = vpack.c.bf16 %v1435, %v1434
        %v1476 = vlaneseq
        %v1477 = vshrl.u32 %v1476, 7
        %v1478 = vsub.s32 0, %v1477
        %v1479 = vrot.slane %v1469, %v1478
        %v1485 = vunpack.c.l.b16 %v1437
        %v1486 = vunpack.c.l.b16 %v1438
        %v1487 = vunpack.c.l.b16 %v1439
        %v1488 = vunpack.c.l.b16 %v1440
        %v1489 = vpack.c.b16 %v1486, %v1485
        %v1490 = vpack.c.b16 %v1488, %v1487
        %v1494 = vsel %vm578, %v1474, 0
        %1496 = vmatprep.subr.bf16.mxu0 0
        %1497 = vmatpush1.bf16.msra.mxu0 0
        %1498 = vmatprep.subr.bf16.mxu0 0
        %1499 = vmatpush1.bf16.msra.mxu0 0
        %1500 = vmatprep.subr.bf16.mxu0 0
        %1501 = vmatpush1.bf16.msra.mxu0 0
        %1502 = vmatprep.subr.bf16.mxu0 0
        %1503 = vmatpush1.bf16.msra.mxu0 0
        %1504 = vmatprep.subr.bf16.mxu0 0
        %1505 = vmatpush1.bf16.msra.mxu0 0
        %1506 = vmatprep.subr.bf16.mxu0 0
        %1507 = vmatpush1.bf16.msra.mxu0 0
        %1508 = vmatprep.subr.bf16.mxu0 0
        %1509 = vmatpush1.bf16.msra.mxu0 %v1490
        %1510 = vmatprep.subr.bf16.mxu0 0
        %1511 = vmatpush1.bf16.msra.mxu0 %v1489
        %1512 = vmatprep.subr.bf16.mxu0 0
        %1513 = vmatpush2.bf16.msra.mxu0 0
        %1514 = vmatprep.subr.bf16.mxu0 0
        %1515 = vmatpush2.bf16.msra.mxu0 0
        %1516 = vmatprep.subr.bf16.mxu0 0
        %1517 = vmatpush2.bf16.msra.mxu0 0
        %1518 = vmatprep.subr.bf16.mxu0 0
        %1519 = vmatpush2.bf16.msra.mxu0 0
        %1520 = vmatprep.subr.bf16.mxu0 0
        %1521 = vmatpush2.bf16.msra.mxu0 0
        %1522 = vmatprep.subr.bf16.mxu0 0
        %1523 = vmatpush2.bf16.msra.mxu0 0
        %1524 = vmatprep.subr.bf16.mxu0 0
        %1525 = vmatpush2.bf16.msra.mxu0 0
        %1526 = vmatprep.subr.bf16.mxu0 0
        %1527 = vmatpush2.bf16.msra.mxu0 0
        %1528 = vmatprep.mubr.bf16.mxu0 0
        %1529 = vmatmul.mubr.bf16.gmra.mxu0 %v1494
        %v1530 = vpop.f32.mrf.mxu0
        %v1531 = vadd.f32 %v1479, %v1530
        %v1532 = vpop.f32.mrf.mxu0
        %v1533 = vpop.f32.mrf.mxu0
        %v1534 = vadd.f32 %v1479, %v1533
        %v1535 = vpop.f32.mrf.mxu0
        %1536 = vdwg.mxu0
        %v1537 = vmul.f32 %v1531, 0.25
        %v1538 = vmul.f32 %v1534, 0.25
        %v1539 = vpack.c.bf16 %v1537, %v1537
        %v1540 = vpack.c.bf16 %v1538, %v1538
        %v1541 = vpack.c.bf16 %v1531, %v1531
        %v1542 = vpack.c.bf16 %v1534, %v1534
        %1544 = vrot.lane.b32.xlu0 %v1541, 96
        %v1545 = vpop.permute.xlu0 %1544
        %v1547 = vsel %vm632, %v1539, 0
        %v1550 = vsel %vm632, %v1545, 0
        %1552 = vmatprep.subr.bf16.mxu0 0
        %1553 = vmatpush1.bf16.xpose.msra.mxu0 0
        %1554 = vmatprep.subr.bf16.mxu0 0
        %1555 = vmatpush1.bf16.xpose.msra.mxu0 0
        %1556 = vmatprep.subr.bf16.mxu0 0
        %1557 = vmatpush1.bf16.xpose.msra.mxu0 0
        %1558 = vmatprep.subr.bf16.mxu0 0
        %1559 = vmatpush1.bf16.xpose.msra.mxu0 0
        %1560 = vmatprep.subr.bf16.mxu0 0
        %1561 = vmatpush1.bf16.xpose.msra.mxu0 0
        %1562 = vmatprep.subr.bf16.mxu0 0
        %1563 = vmatpush1.bf16.xpose.msra.mxu0 0
        %1564 = vmatprep.subr.bf16.mxu0 0
        %1565 = vmatpush1.bf16.xpose.msra.mxu0 0
        %1566 = vmatprep.subr.bf16.mxu0 0
        %1567 = vmatpush1.bf16.xpose.msra.mxu0 %v1550
        %1568 = vmatprep.subr.bf16.mxu0 0
        %1569 = vmatpush2.bf16.xpose.msra.mxu0 0
        %1570 = vmatprep.subr.bf16.mxu0 0
        %1571 = vmatpush2.bf16.xpose.msra.mxu0 0
        %1572 = vmatprep.subr.bf16.mxu0 0
        %1573 = vmatpush2.bf16.xpose.msra.mxu0 0
        %1574 = vmatprep.subr.bf16.mxu0 0
        %1575 = vmatpush2.bf16.xpose.msra.mxu0 0
        %1576 = vmatprep.subr.bf16.mxu0 0
        %1577 = vmatpush2.bf16.xpose.msra.mxu0 0
        %1578 = vmatprep.subr.bf16.mxu0 0
        %1579 = vmatpush2.bf16.xpose.msra.mxu0 0
        %1580 = vmatprep.subr.bf16.mxu0 0
        %1581 = vmatpush2.bf16.xpose.msra.mxu0 0
        %1582 = vmatprep.subr.bf16.mxu0 0
        %1583 = vmatpush2.bf16.xpose.msra.mxu0 0
        %1584 = vmatprep.mubr.bf16.mxu0 0
        %1585 = vmatmul.mubr.bf16.gmra.mxu0 %v1547
        %v1586 = vpop.f32.mrf.mxu0
        %v1587 = vadd.f32 0.0, %v1586
        %v1588 = vpop.f32.mrf.mxu0
        %v1589 = vpop.f32.mrf.mxu0
        %v1590 = vpop.f32.mrf.mxu0
        %1591 = vdwg.mxu0
        %1593 = vrot.lane.b32.xlu0 %v1542, 96
        %v1594 = vpop.permute.xlu0 %1593
        %v1596 = vsel %vm632, %v1540, 0
        %v1599 = vsel %vm632, %v1594, 0
        %1601 = vmatprep.subr.bf16.mxu0 0
        %1602 = vmatpush1.bf16.xpose.msra.mxu0 0
        %1603 = vmatprep.subr.bf16.mxu0 0
        %1604 = vmatpush1.bf16.xpose.msra.mxu0 0
        %1605 = vmatprep.subr.bf16.mxu0 0
        %1606 = vmatpush1.bf16.xpose.msra.mxu0 0
        %1607 = vmatprep.subr.bf16.mxu0 0
        %1608 = vmatpush1.bf16.xpose.msra.mxu0 0
        %1609 = vmatprep.subr.bf16.mxu0 0
        %1610 = vmatpush1.bf16.xpose.msra.mxu0 0
        %1611 = vmatprep.subr.bf16.mxu0 0
        %1612 = vmatpush1.bf16.xpose.msra.mxu0 0
        %1613 = vmatprep.subr.bf16.mxu0 0
        %1614 = vmatpush1.bf16.xpose.msra.mxu0 0
        %1615 = vmatprep.subr.bf16.mxu0 0
        %1616 = vmatpush1.bf16.xpose.msra.mxu0 %v1599
        %1617 = vmatprep.subr.bf16.mxu0 0
        %1618 = vmatpush2.bf16.xpose.msra.mxu0 0
        %1619 = vmatprep.subr.bf16.mxu0 0
        %1620 = vmatpush2.bf16.xpose.msra.mxu0 0
        %1621 = vmatprep.subr.bf16.mxu0 0
        %1622 = vmatpush2.bf16.xpose.msra.mxu0 0
        %1623 = vmatprep.subr.bf16.mxu0 0
        %1624 = vmatpush2.bf16.xpose.msra.mxu0 0
        %1625 = vmatprep.subr.bf16.mxu0 0
        %1626 = vmatpush2.bf16.xpose.msra.mxu0 0
        %1627 = vmatprep.subr.bf16.mxu0 0
        %1628 = vmatpush2.bf16.xpose.msra.mxu0 0
        %1629 = vmatprep.subr.bf16.mxu0 0
        %1630 = vmatpush2.bf16.xpose.msra.mxu0 0
        %1631 = vmatprep.subr.bf16.mxu0 0
        %1632 = vmatpush2.bf16.xpose.msra.mxu0 0
        %1633 = vmatprep.mubr.bf16.mxu0 0
        %1634 = vmatmul.mubr.bf16.gmra.mxu0 %v1596
        %v1635 = vpop.f32.mrf.mxu0
        %v1636 = vadd.f32 0.0, %v1635
        %v1637 = vpop.f32.mrf.mxu0
        %v1638 = vpop.f32.mrf.mxu0
        %v1639 = vpop.f32.mrf.mxu0
        %1640 = vdwg.mxu0
        %v1641 = vsel %vm728, %v1587, -inf
        %1642 = vmax.xlane.f32.xlu0 %v1641
        %v1643 = vpop.xlane.xlu0 %1642
        %v1644 = vsel %vm728, %v1636, -inf
        %1645 = vmax.xlane.f32.xlu0 %v1644
        %v1646 = vpop.xlane.xlu0 %1645
        %v1647 = vsub.f32 %v1587, %v1643
        %v1648 = vsub.f32 %v1636, %v1646
        %v1649 = vmul.f32 %v1647, 1.442695
        %v1650 = vpow.pop %v1649
        %v1651 = vmul.f32 %v1648, 1.442695
        %v1652 = vpow.pop %v1651
        %v1653 = vsel %vm728, %v1650, 0.0
        %1654 = vadd.xlane.f32.xlu0 %v1653
        %v1655 = vpop.xlane.xlu0 %1654
        %v1656 = vsel %vm728, %v1652, 0.0
        %1657 = vadd.xlane.f32.xlu0 %v1656
        %v1658 = vpop.xlane.xlu0 %1657
        %v1659 = vrcp.pop %v1655
        %v1660 = vmul.f32 %v1650, %v1659
        %v1661 = vrcp.pop %v1658
        %v1662 = vmul.f32 %v1652, %v1661
        %v1663 = vpack.c.bf16 %v1660, %v1660
        %v1664 = vpack.c.bf16 %v1662, %v1662
        %1665 = vrot.lane.b32.xlu0 %v1541, 64
        %v1666 = vpop.permute.xlu0 %1665
        %v1668 = vsel %vm728, %v1663, 0
        %v1671 = vsel %vm758, %v1666, 0
        %1673 = vmatprep.subr.bf16.mxu0 0
        %1674 = vmatpush1.bf16.msra.mxu0 0
        %1675 = vmatprep.subr.bf16.mxu0 0
        %1676 = vmatpush1.bf16.msra.mxu0 0
        %1677 = vmatprep.subr.bf16.mxu0 0
        %1678 = vmatpush1.bf16.msra.mxu0 0
        %1679 = vmatprep.subr.bf16.mxu0 0
        %1680 = vmatpush1.bf16.msra.mxu0 0
        %1681 = vmatprep.subr.bf16.mxu0 0
        %1682 = vmatpush1.bf16.msra.mxu0 0
        %1683 = vmatprep.subr.bf16.mxu0 0
        %1684 = vmatpush1.bf16.msra.mxu0 0
        %1685 = vmatprep.subr.bf16.mxu0 0
        %1686 = vmatpush1.bf16.msra.mxu0 0
        %1687 = vmatprep.subr.bf16.mxu0 0
        %1688 = vmatpush1.bf16.msra.mxu0 %v1671
        %1689 = vmatprep.subr.bf16.mxu0 0
        %1690 = vmatpush2.bf16.msra.mxu0 0
        %1691 = vmatprep.subr.bf16.mxu0 0
        %1692 = vmatpush2.bf16.msra.mxu0 0
        %1693 = vmatprep.subr.bf16.mxu0 0
        %1694 = vmatpush2.bf16.msra.mxu0 0
        %1695 = vmatprep.subr.bf16.mxu0 0
        %1696 = vmatpush2.bf16.msra.mxu0 0
        %1697 = vmatprep.subr.bf16.mxu0 0
        %1698 = vmatpush2.bf16.msra.mxu0 0
        %1699 = vmatprep.subr.bf16.mxu0 0
        %1700 = vmatpush2.bf16.msra.mxu0 0
        %1701 = vmatprep.subr.bf16.mxu0 0
        %1702 = vmatpush2.bf16.msra.mxu0 0
        %1703 = vmatprep.subr.bf16.mxu0 0
        %1704 = vmatpush2.bf16.msra.mxu0 0
        %1705 = vmatprep.mubr.bf16.mxu0 0
        %1706 = vmatmul.mubr.bf16.gmra.mxu0 %v1668
        %v1707 = vpop.f32.mrf.mxu0
        %v1708 = vadd.f32 0.0, %v1707
        %v1709 = vpop.f32.mrf.mxu0
        %v1710 = vpop.f32.mrf.mxu0
        %v1711 = vpop.f32.mrf.mxu0
        %1712 = vdwg.mxu0
        %1713 = vrot.lane.b32.xlu0 %v1542, 64
        %v1714 = vpop.permute.xlu0 %1713
        %v1716 = vsel %vm728, %v1664, 0
        %v1719 = vsel %vm758, %v1714, 0
        %1721 = vmatprep.subr.bf16.mxu0 0
        %1722 = vmatpush1.bf16.msra.mxu0 0
        %1723 = vmatprep.subr.bf16.mxu0 0
        %1724 = vmatpush1.bf16.msra.mxu0 0
        %1725 = vmatprep.subr.bf16.mxu0 0
        %1726 = vmatpush1.bf16.msra.mxu0 0
        %1727 = vmatprep.subr.bf16.mxu0 0
        %1728 = vmatpush1.bf16.msra.mxu0 0
        %1729 = vmatprep.subr.bf16.mxu0 0
        %1730 = vmatpush1.bf16.msra.mxu0 0
        %1731 = vmatprep.subr.bf16.mxu0 0
        %1732 = vmatpush1.bf16.msra.mxu0 0
        %1733 = vmatprep.subr.bf16.mxu0 0
        %1734 = vmatpush1.bf16.msra.mxu0 0
        %1735 = vmatprep.subr.bf16.mxu0 0
        %1736 = vmatpush1.bf16.msra.mxu0 %v1719
        %1737 = vmatprep.subr.bf16.mxu0 0
        %1738 = vmatpush2.bf16.msra.mxu0 0
        %1739 = vmatprep.subr.bf16.mxu0 0
        %1740 = vmatpush2.bf16.msra.mxu0 0
        %1741 = vmatprep.subr.bf16.mxu0 0
        %1742 = vmatpush2.bf16.msra.mxu0 0
        %1743 = vmatprep.subr.bf16.mxu0 0
        %1744 = vmatpush2.bf16.msra.mxu0 0
        %1745 = vmatprep.subr.bf16.mxu0 0
        %1746 = vmatpush2.bf16.msra.mxu0 0
        %1747 = vmatprep.subr.bf16.mxu0 0
        %1748 = vmatpush2.bf16.msra.mxu0 0
        %1749 = vmatprep.subr.bf16.mxu0 0
        %1750 = vmatpush2.bf16.msra.mxu0 0
        %1751 = vmatprep.subr.bf16.mxu0 0
        %1752 = vmatpush2.bf16.msra.mxu0 0
        %1753 = vmatprep.mubr.bf16.mxu0 0
        %1754 = vmatmul.mubr.bf16.gmra.mxu0 %v1716
        %v1755 = vpop.f32.mrf.mxu0
        %v1756 = vadd.f32 0.0, %v1755
        %v1757 = vpop.f32.mrf.mxu0
        %v1758 = vpop.f32.mrf.mxu0
        %v1759 = vpop.f32.mrf.mxu0
        %1760 = vdwg.mxu0
        %v1761 = vpack.c.bf16 %v1756, %v1708
        %1763 = vrot.lane.b32.xlu0 %v1539, 112
        %v1764 = vpop.permute.xlu0 %1763
        %1765 = vrot.lane.b32.xlu0 %v1541, 80
        %v1766 = vpop.permute.xlu0 %1765
        %v1768 = vsel %vm632, %v1764, 0
        %v1771 = vsel %vm632, %v1766, 0
        %1773 = vmatprep.subr.bf16.mxu0 0
        %1774 = vmatpush1.bf16.xpose.msra.mxu0 0
        %1775 = vmatprep.subr.bf16.mxu0 0
        %1776 = vmatpush1.bf16.xpose.msra.mxu0 0
        %1777 = vmatprep.subr.bf16.mxu0 0
        %1778 = vmatpush1.bf16.xpose.msra.mxu0 0
        %1779 = vmatprep.subr.bf16.mxu0 0
        %1780 = vmatpush1.bf16.xpose.msra.mxu0 0
        %1781 = vmatprep.subr.bf16.mxu0 0
        %1782 = vmatpush1.bf16.xpose.msra.mxu0 0
        %1783 = vmatprep.subr.bf16.mxu0 0
        %1784 = vmatpush1.bf16.xpose.msra.mxu0 0
        %1785 = vmatprep.subr.bf16.mxu0 0
        %1786 = vmatpush1.bf16.xpose.msra.mxu0 0
        %1787 = vmatprep.subr.bf16.mxu0 0
        %1788 = vmatpush1.bf16.xpose.msra.mxu0 %v1771
        %1789 = vmatprep.subr.bf16.mxu0 0
        %1790 = vmatpush2.bf16.xpose.msra.mxu0 0
        %1791 = vmatprep.subr.bf16.mxu0 0
        %1792 = vmatpush2.bf16.xpose.msra.mxu0 0
        %1793 = vmatprep.subr.bf16.mxu0 0
        %1794 = vmatpush2.bf16.xpose.msra.mxu0 0
        %1795 = vmatprep.subr.bf16.mxu0 0
        %1796 = vmatpush2.bf16.xpose.msra.mxu0 0
        %1797 = vmatprep.subr.bf16.mxu0 0
        %1798 = vmatpush2.bf16.xpose.msra.mxu0 0
        %1799 = vmatprep.subr.bf16.mxu0 0
        %1800 = vmatpush2.bf16.xpose.msra.mxu0 0
        %1801 = vmatprep.subr.bf16.mxu0 0
        %1802 = vmatpush2.bf16.xpose.msra.mxu0 0
        %1803 = vmatprep.subr.bf16.mxu0 0
        %1804 = vmatpush2.bf16.xpose.msra.mxu0 0
        %1805 = vmatprep.mubr.bf16.mxu0 0
        %1806 = vmatmul.mubr.bf16.gmra.mxu0 %v1768
        %v1807 = vpop.f32.mrf.mxu0
        %v1808 = vadd.f32 0.0, %v1807
        %v1809 = vpop.f32.mrf.mxu0
        %v1810 = vpop.f32.mrf.mxu0
        %v1811 = vpop.f32.mrf.mxu0
        %1812 = vdwg.mxu0
        %1814 = vrot.lane.b32.xlu0 %v1540, 112
        %v1815 = vpop.permute.xlu0 %1814
        %1816 = vrot.lane.b32.xlu0 %v1542, 80
        %v1817 = vpop.permute.xlu0 %1816
        %v1819 = vsel %vm632, %v1815, 0
        %v1822 = vsel %vm632, %v1817, 0
        %1824 = vmatprep.subr.bf16.mxu0 0
        %1825 = vmatpush1.bf16.xpose.msra.mxu0 0
        %1826 = vmatprep.subr.bf16.mxu0 0
        %1827 = vmatpush1.bf16.xpose.msra.mxu0 0
        %1828 = vmatprep.subr.bf16.mxu0 0
        %1829 = vmatpush1.bf16.xpose.msra.mxu0 0
        %1830 = vmatprep.subr.bf16.mxu0 0
        %1831 = vmatpush1.bf16.xpose.msra.mxu0 0
        %1832 = vmatprep.subr.bf16.mxu0 0
        %1833 = vmatpush1.bf16.xpose.msra.mxu0 0
        %1834 = vmatprep.subr.bf16.mxu0 0
        %1835 = vmatpush1.bf16.xpose.msra.mxu0 0
        %1836 = vmatprep.subr.bf16.mxu0 0
        %1837 = vmatpush1.bf16.xpose.msra.mxu0 0
        %1838 = vmatprep.subr.bf16.mxu0 0
        %1839 = vmatpush1.bf16.xpose.msra.mxu0 %v1822
        %1840 = vmatprep.subr.bf16.mxu0 0
        %1841 = vmatpush2.bf16.xpose.msra.mxu0 0
        %1842 = vmatprep.subr.bf16.mxu0 0
        %1843 = vmatpush2.bf16.xpose.msra.mxu0 0
        %1844 = vmatprep.subr.bf16.mxu0 0
        %1845 = vmatpush2.bf16.xpose.msra.mxu0 0
        %1846 = vmatprep.subr.bf16.mxu0 0
        %1847 = vmatpush2.bf16.xpose.msra.mxu0 0
        %1848 = vmatprep.subr.bf16.mxu0 0
        %1849 = vmatpush2.bf16.xpose.msra.mxu0 0
        %1850 = vmatprep.subr.bf16.mxu0 0
        %1851 = vmatpush2.bf16.xpose.msra.mxu0 0
        %1852 = vmatprep.subr.bf16.mxu0 0
        %1853 = vmatpush2.bf16.xpose.msra.mxu0 0
        %1854 = vmatprep.subr.bf16.mxu0 0
        %1855 = vmatpush2.bf16.xpose.msra.mxu0 0
        %1856 = vmatprep.mubr.bf16.mxu0 0
        %1857 = vmatmul.mubr.bf16.gmra.mxu0 %v1819
        %v1858 = vpop.f32.mrf.mxu0
        %v1859 = vadd.f32 0.0, %v1858
        %v1860 = vpop.f32.mrf.mxu0
        %v1861 = vpop.f32.mrf.mxu0
        %v1862 = vpop.f32.mrf.mxu0
        %1863 = vdwg.mxu0
        %v1864 = vsel %vm728, %v1808, -inf
        %1865 = vmax.xlane.f32.xlu0 %v1864
        %v1866 = vpop.xlane.xlu0 %1865
        %v1867 = vsel %vm728, %v1859, -inf
        %1868 = vmax.xlane.f32.xlu0 %v1867
        %v1869 = vpop.xlane.xlu0 %1868
        %v1870 = vsub.f32 %v1808, %v1866
        %v1871 = vsub.f32 %v1859, %v1869
        %v1872 = vmul.f32 %v1870, 1.442695
        %v1873 = vpow.pop %v1872
        %v1874 = vmul.f32 %v1871, 1.442695
        %v1875 = vpow.pop %v1874
        %v1876 = vsel %vm728, %v1873, 0.0
        %1877 = vadd.xlane.f32.xlu0 %v1876
        %v1878 = vpop.xlane.xlu0 %1877
        %v1879 = vsel %vm728, %v1875, 0.0
        %1880 = vadd.xlane.f32.xlu0 %v1879
        %v1881 = vpop.xlane.xlu0 %1880
        %v1882 = vrcp.pop %v1878
        %v1883 = vmul.f32 %v1873, %v1882
        %v1884 = vrcp.pop %v1881
        %v1885 = vmul.f32 %v1875, %v1884
        %v1886 = vpack.c.bf16 %v1883, %v1883
        %v1887 = vpack.c.bf16 %v1885, %v1885
        %1888 = vrot.lane.b32.xlu0 %v1541, 48
        %v1889 = vpop.permute.xlu0 %1888
        %v1891 = vsel %vm728, %v1886, 0
        %v1894 = vsel %vm758, %v1889, 0
        %1896 = vmatprep.subr.bf16.mxu0 0
        %1897 = vmatpush1.bf16.msra.mxu0 0
        %1898 = vmatprep.subr.bf16.mxu0 0
        %1899 = vmatpush1.bf16.msra.mxu0 0
        %1900 = vmatprep.subr.bf16.mxu0 0
        %1901 = vmatpush1.bf16.msra.mxu0 0
        %1902 = vmatprep.subr.bf16.mxu0 0
        %1903 = vmatpush1.bf16.msra.mxu0 0
        %1904 = vmatprep.subr.bf16.mxu0 0
        %1905 = vmatpush1.bf16.msra.mxu0 0
        %1906 = vmatprep.subr.bf16.mxu0 0
        %1907 = vmatpush1.bf16.msra.mxu0 0
        %1908 = vmatprep.subr.bf16.mxu0 0
        %1909 = vmatpush1.bf16.msra.mxu0 0
        %1910 = vmatprep.subr.bf16.mxu0 0
        %1911 = vmatpush1.bf16.msra.mxu0 %v1894
        %1912 = vmatprep.subr.bf16.mxu0 0
        %1913 = vmatpush2.bf16.msra.mxu0 0
        %1914 = vmatprep.subr.bf16.mxu0 0
        %1915 = vmatpush2.bf16.msra.mxu0 0
        %1916 = vmatprep.subr.bf16.mxu0 0
        %1917 = vmatpush2.bf16.msra.mxu0 0
        %1918 = vmatprep.subr.bf16.mxu0 0
        %1919 = vmatpush2.bf16.msra.mxu0 0
        %1920 = vmatprep.subr.bf16.mxu0 0
        %1921 = vmatpush2.bf16.msra.mxu0 0
        %1922 = vmatprep.subr.bf16.mxu0 0
        %1923 = vmatpush2.bf16.msra.mxu0 0
        %1924 = vmatprep.subr.bf16.mxu0 0
        %1925 = vmatpush2.bf16.msra.mxu0 0
        %1926 = vmatprep.subr.bf16.mxu0 0
        %1927 = vmatpush2.bf16.msra.mxu0 0
        %1928 = vmatprep.mubr.bf16.mxu0 0
        %1929 = vmatmul.mubr.bf16.gmra.mxu0 %v1891
        %v1930 = vpop.f32.mrf.mxu0
        %v1931 = vadd.f32 0.0, %v1930
        %v1932 = vpop.f32.mrf.mxu0
        %v1933 = vpop.f32.mrf.mxu0
        %v1934 = vpop.f32.mrf.mxu0
        %1935 = vdwg.mxu0
        %1936 = vrot.lane.b32.xlu0 %v1542, 48
        %v1937 = vpop.permute.xlu0 %1936
        %v1939 = vsel %vm728, %v1887, 0
        %v1942 = vsel %vm758, %v1937, 0
        %1944 = vmatprep.subr.bf16.mxu0 0
        %1945 = vmatpush1.bf16.msra.mxu0 0
        %1946 = vmatprep.subr.bf16.mxu0 0
        %1947 = vmatpush1.bf16.msra.mxu0 0
        %1948 = vmatprep.subr.bf16.mxu0 0
        %1949 = vmatpush1.bf16.msra.mxu0 0
        %1950 = vmatprep.subr.bf16.mxu0 0
        %1951 = vmatpush1.bf16.msra.mxu0 0
        %1952 = vmatprep.subr.bf16.mxu0 0
        %1953 = vmatpush1.bf16.msra.mxu0 0
        %1954 = vmatprep.subr.bf16.mxu0 0
        %1955 = vmatpush1.bf16.msra.mxu0 0
        %1956 = vmatprep.subr.bf16.mxu0 0
        %1957 = vmatpush1.bf16.msra.mxu0 0
        %1958 = vmatprep.subr.bf16.mxu0 0
        %1959 = vmatpush1.bf16.msra.mxu0 %v1942
        %1960 = vmatprep.subr.bf16.mxu0 0
        %1961 = vmatpush2.bf16.msra.mxu0 0
        %1962 = vmatprep.subr.bf16.mxu0 0
        %1963 = vmatpush2.bf16.msra.mxu0 0
        %1964 = vmatprep.subr.bf16.mxu0 0
        %1965 = vmatpush2.bf16.msra.mxu0 0
        %1966 = vmatprep.subr.bf16.mxu0 0
        %1967 = vmatpush2.bf16.msra.mxu0 0
        %1968 = vmatprep.subr.bf16.mxu0 0
        %1969 = vmatpush2.bf16.msra.mxu0 0
        %1970 = vmatprep.subr.bf16.mxu0 0
        %1971 = vmatpush2.bf16.msra.mxu0 0
        %1972 = vmatprep.subr.bf16.mxu0 0
        %1973 = vmatpush2.bf16.msra.mxu0 0
        %1974 = vmatprep.subr.bf16.mxu0 0
        %1975 = vmatpush2.bf16.msra.mxu0 0
        %1976 = vmatprep.mubr.bf16.mxu0 0
        %1977 = vmatmul.mubr.bf16.gmra.mxu0 %v1939
        %v1978 = vpop.f32.mrf.mxu0
        %v1979 = vadd.f32 0.0, %v1978
        %v1980 = vpop.f32.mrf.mxu0
        %v1981 = vpop.f32.mrf.mxu0
        %v1982 = vpop.f32.mrf.mxu0
        %1983 = vdwg.mxu0
        %v1984 = vpack.c.bf16 %v1979, %v1931
        %v1987 = vunpack.c.l.b16 %v1444
        %v1988 = vunpack.c.l.b16 %v1445
        %v1989 = vpack.c.b16 %v1988, %v1987
        %v1992 = vsel %vm632, %v1984, 0
        %1994 = vmatprep.subr.bf16.mxu0 0
        %1995 = vmatpush1.bf16.msra.mxu0 0
        %1996 = vmatprep.subr.bf16.mxu0 0
        %1997 = vmatpush1.bf16.msra.mxu0 0
        %1998 = vmatprep.subr.bf16.mxu0 0
        %1999 = vmatpush1.bf16.msra.mxu0 0
        %2000 = vmatprep.subr.bf16.mxu0 0
        %2001 = vmatpush1.bf16.msra.mxu0 0
        %2002 = vmatprep.subr.bf16.mxu0 0
        %2003 = vmatpush1.bf16.msra.mxu0 0
        %2004 = vmatprep.subr.bf16.mxu0 0
        %2005 = vmatpush1.bf16.msra.mxu0 0
        %2006 = vmatprep.subr.bf16.mxu0 0
        %2007 = vmatpush1.bf16.msra.mxu0 0
        %2008 = vmatprep.subr.bf16.mxu0 0
        %2009 = vmatpush1.bf16.msra.mxu0 %v1989
        %2010 = vmatprep.subr.bf16.mxu0 0
        %2011 = vmatpush2.bf16.msra.mxu0 0
        %2012 = vmatprep.subr.bf16.mxu0 0
        %2013 = vmatpush2.bf16.msra.mxu0 0
        %2014 = vmatprep.subr.bf16.mxu0 0
        %2015 = vmatpush2.bf16.msra.mxu0 0
        %2016 = vmatprep.subr.bf16.mxu0 0
        %2017 = vmatpush2.bf16.msra.mxu0 0
        %2018 = vmatprep.subr.bf16.mxu0 0
        %2019 = vmatpush2.bf16.msra.mxu0 0
        %2020 = vmatprep.subr.bf16.mxu0 0
        %2021 = vmatpush2.bf16.msra.mxu0 0
        %2022 = vmatprep.subr.bf16.mxu0 0
        %2023 = vmatpush2.bf16.msra.mxu0 0
        %2024 = vmatprep.subr.bf16.mxu0 0
        %2025 = vmatpush2.bf16.msra.mxu0 0
        %2026 = vmatprep.mubr.bf16.mxu0 0
        %2027 = vmatmul.mubr.bf16.gmra.mxu0 %v1992
        %v2028 = vpop.f32.mrf.mxu0
        %v2029 = vadd.f32 0.0, %v2028
        %v2030 = vpop.f32.mrf.mxu0
        %v2031 = vpop.f32.mrf.mxu0
        %v2032 = vadd.f32 0.0, %v2031
        %v2033 = vpop.f32.mrf.mxu0
        %2034 = vdwg.mxu0
        %v2037 = vunpack.c.l.b16 %v1442
        %v2038 = vunpack.c.l.b16 %v1443
        %v2039 = vpack.c.b16 %v2038, %v2037
        %v2042 = vsel %vm632, %v1761, 0
        %2044 = vmatprep.subr.bf16.mxu0 0
        %2045 = vmatpush1.bf16.msra.mxu0 0
        %2046 = vmatprep.subr.bf16.mxu0 0
        %2047 = vmatpush1.bf16.msra.mxu0 0
        %2048 = vmatprep.subr.bf16.mxu0 0
        %2049 = vmatpush1.bf16.msra.mxu0 0
        %2050 = vmatprep.subr.bf16.mxu0 0
        %2051 = vmatpush1.bf16.msra.mxu0 0
        %2052 = vmatprep.subr.bf16.mxu0 0
        %2053 = vmatpush1.bf16.msra.mxu0 0
        %2054 = vmatprep.subr.bf16.mxu0 0
        %2055 = vmatpush1.bf16.msra.mxu0 0
        %2056 = vmatprep.subr.bf16.mxu0 0
        %2057 = vmatpush1.bf16.msra.mxu0 0
        %2058 = vmatprep.subr.bf16.mxu0 0
        %2059 = vmatpush1.bf16.msra.mxu0 %v2039
        %2060 = vmatprep.subr.bf16.mxu0 0
        %2061 = vmatpush2.bf16.msra.mxu0 0
        %2062 = vmatprep.subr.bf16.mxu0 0
        %2063 = vmatpush2.bf16.msra.mxu0 0
        %2064 = vmatprep.subr.bf16.mxu0 0
        %2065 = vmatpush2.bf16.msra.mxu0 0
        %2066 = vmatprep.subr.bf16.mxu0 0
        %2067 = vmatpush2.bf16.msra.mxu0 0
        %2068 = vmatprep.subr.bf16.mxu0 0
        %2069 = vmatpush2.bf16.msra.mxu0 0
        %2070 = vmatprep.subr.bf16.mxu0 0
        %2071 = vmatpush2.bf16.msra.mxu0 0
        %2072 = vmatprep.subr.bf16.mxu0 0
        %2073 = vmatpush2.bf16.msra.mxu0 0
        %2074 = vmatprep.subr.bf16.mxu0 0
        %2075 = vmatpush2.bf16.msra.mxu0 0
        %2076 = vmatprep.mubr.bf16.mxu0 0
        %2077 = vmatmul.mubr.bf16.gmra.mxu0 %v2042
        %v2078 = vpop.f32.mrf.mxu0
        %v2079 = vadd.f32 %v2029, %v2078
        %v2080 = vpop.f32.mrf.mxu0
        %v2081 = vpop.f32.mrf.mxu0
        %v2082 = vadd.f32 %v2032, %v2081
        %v2083 = vpop.f32.mrf.mxu0
        %2084 = vdwg.mxu0
        %v2085 = vlaneseq
        %v2086 = vshrl.u32 %v2085, 7
        %v2087 = vsub.s32 0, %v2086
        %v2088 = vrot.slane %v1471, %v2087
        %v2089 = vadd.f32 %v2079, %v2088
        %v2090 = vadd.f32 %v2082, %v2088
        %v2091 = vsel %vm578, %v2089, 0.0
        %2092 = vadd.xlane.f32.xlu0 %v2091
        %v2093 = vpop.xlane.xlu0 %2092
        %v2094 = vsel %vm578, %v2090, 0.0
        %2095 = vadd.xlane.f32.xlu0 %v2094
        %v2096 = vpop.xlane.xlu0 %2095
        %v2097 = vmul.f32 %v2093, %v1186
        %v2098 = vmul.f32 %v2096, %v1186
        %v2099 = vsub.f32 %v2089, %v2097
        %v2100 = vsub.f32 %v2090, %v2098
        %v2101 = vmul.f32 %v2099, %v2099
        %v2102 = vmul.f32 %v2100, %v2100
        %v2103 = vsel %vm578, %v2101, 0.0
        %2104 = vadd.xlane.f32.xlu0 %v2103
        %v2105 = vpop.xlane.xlu0 %2104
        %v2106 = vsel %vm578, %v2102, 0.0
        %2107 = vadd.xlane.f32.xlu0 %v2106
        %v2108 = vpop.xlane.xlu0 %2107
        %v2109 = vmul.f32 %v2105, %v1186
        %v2110 = vmul.f32 %v2108, %v1186
        %v2111 = vadd.f32 %v2109, 1e-05
        %v2112 = vadd.f32 %v2110, 1e-05
        %v2113 = vrsqrt.pop %v2111
        %v2114 = vrsqrt.pop %v2112
        %v2115 = vmul.f32 %v2099, %v2113
        %v2116 = vmul.f32 %v2100, %v2114
        %v2117 = vlaneseq
        %v2118 = vshrl.u32 %v2117, 7
        %v2119 = vsub.s32 1, %v2118
        %v2120 = vrot.slane %v1471, %v2119
        %v2121 = vmul.f32 %v2115, %v2120
        %v2122 = vmul.f32 %v2116, %v2120
        %v2123 = vlaneseq
        %v2124 = vshrl.u32 %v2123, 7
        %v2125 = vsub.s32 2, %v2124
        %v2126 = vrot.slane %v1471, %v2125
        %v2127 = vadd.f32 %v2121, %v2126
        %v2128 = vadd.f32 %v2122, %v2126
        %v2129 = vadd.f32 %v1434, %v2127
        %v2130 = vadd.f32 %v1435, %v2128
        %v2131 = vpack.c.bf16 %v2130, %v2129
        %v2133 = vlaneseq
        %v2134 = vshrl.u32 %v2133, 7
        %v2135 = vsub.s32 0, %v2134
        %v2136 = vrot.slane %v1473, %v2135
        %v2142 = vunpack.c.l.b16 %v1447
        %v2143 = vunpack.c.l.b16 %v1448
        %v2144 = vunpack.c.l.b16 %v1449
        %v2145 = vunpack.c.l.b16 %v1450
        %v2146 = vpack.c.b16 %v2143, %v2142
        %v2147 = vpack.c.b16 %v2145, %v2144
        %v2151 = vsel %vm578, %v2131, 0
        %2153 = vmatprep.subr.bf16.mxu0 0
        %2154 = vmatpush1.bf16.msra.mxu0 0
        %2155 = vmatprep.subr.bf16.mxu0 0
        %2156 = vmatpush1.bf16.msra.mxu0 0
        %2157 = vmatprep.subr.bf16.mxu0 0
        %2158 = vmatpush1.bf16.msra.mxu0 0
        %2159 = vmatprep.subr.bf16.mxu0 0
        %2160 = vmatpush1.bf16.msra.mxu0 0
        %2161 = vmatprep.subr.bf16.mxu0 0
        %2162 = vmatpush1.bf16.msra.mxu0 0
        %2163 = vmatprep.subr.bf16.mxu0 0
        %2164 = vmatpush1.bf16.msra.mxu0 0
        %2165 = vmatprep.subr.bf16.mxu0 0
        %2166 = vmatpush1.bf16.msra.mxu0 %v2147
        %2167 = vmatprep.subr.bf16.mxu0 0
        %2168 = vmatpush1.bf16.msra.mxu0 %v2146
        %2169 = vmatprep.subr.bf16.mxu0 0
        %2170 = vmatpush2.bf16.msra.mxu0 0
        %2171 = vmatprep.subr.bf16.mxu0 0
        %2172 = vmatpush2.bf16.msra.mxu0 0
        %2173 = vmatprep.subr.bf16.mxu0 0
        %2174 = vmatpush2.bf16.msra.mxu0 0
        %2175 = vmatprep.subr.bf16.mxu0 0
        %2176 = vmatpush2.bf16.msra.mxu0 0
        %2177 = vmatprep.subr.bf16.mxu0 0
        %2178 = vmatpush2.bf16.msra.mxu0 0
        %2179 = vmatprep.subr.bf16.mxu0 0
        %2180 = vmatpush2.bf16.msra.mxu0 0
        %2181 = vmatprep.subr.bf16.mxu0 0
        %2182 = vmatpush2.bf16.msra.mxu0 0
        %2183 = vmatprep.subr.bf16.mxu0 0
        %2184 = vmatpush2.bf16.msra.mxu0 0
        %2185 = vmatprep.mubr.bf16.mxu0 0
        %2186 = vmatmul.mubr.bf16.gmra.mxu0 %v2151
        %v2187 = vpop.f32.mrf.mxu0
        %v2188 = vadd.f32 %v2136, %v2187
        %v2189 = vpop.f32.mrf.mxu0
        %v2190 = vpop.f32.mrf.mxu0
        %v2191 = vadd.f32 %v2136, %v2190
        %v2192 = vpop.f32.mrf.mxu0
        %2193 = vdwg.mxu0
        %v2194 = vmul.f32 %v2188, 0.5
        %v2195 = vmul.f32 %v2191, 0.5
        %v2196 = vmul.f32 %v2188, 0.044715
        %v2197 = vmul.f32 %v2191, 0.044715
        %v2198 = vmul.f32 %v2196, %v2188
        %v2199 = vmul.f32 %v2197, %v2191
        %v2200 = vmul.f32 %v2198, %v2188
        %v2201 = vmul.f32 %v2199, %v2191
        %v2202 = vadd.f32 %v2188, %v2200
        %v2203 = vadd.f32 %v2191, %v2201
        %v2204 = vmul.f32 %v2202, 0.7978846
        %v2205 = vmul.f32 %v2203, 0.7978846
        %v2206 = vtanh.pop %v2204
        %v2207 = vtanh.pop %v2205
        %v2208 = vadd.f32 %v2206, 1.0
        %v2209 = vadd.f32 %v2207, 1.0
        %v2210 = vmul.f32 %v2194, %v2208
        %v2211 = vmul.f32 %v2195, %v2209
        %v2212 = vpack.c.bf16 %v2211, %v2210
        %v2213 = vlaneseq
        %v2214 = vshrl.u32 %v2213, 7
        %v2215 = vsub.s32 3, %v2214
        %v2216 = vrot.slane %v1471, %v2215
        %v2233 = vunpack.c.l.b16 %v1452
        %v2234 = vunpack.c.l.b16 %v1453
        %v2235 = vunpack.c.l.b16 %v1454
        %v2236 = vunpack.c.l.b16 %v1455
        %v2237 = vunpack.c.l.b16 %v1456
        %v2238 = vunpack.c.l.b16 %v1457
        %v2239 = vunpack.c.l.b16 %v1458
        %v2240 = vunpack.c.l.b16 %v1459
        %v2241 = vunpack.c.l.b16 %v1460
        %v2242 = vunpack.c.l.b16 %v1461
        %v2243 = vunpack.c.l.b16 %v1462
        %v2244 = vunpack.c.l.b16 %v1463
        %v2245 = vunpack.c.l.b16 %v1464
        %v2246 = vunpack.c.l.b16 %v1465
        %v2247 = vunpack.c.l.b16 %v1466
        %v2248 = vunpack.c.l.b16 %v1467
        %v2249 = vpack.c.b16 %v2234, %v2233
        %v2250 = vpack.c.b16 %v2236, %v2235
        %v2251 = vpack.c.b16 %v2238, %v2237
        %v2252 = vpack.c.b16 %v2240, %v2239
        %v2253 = vpack.c.b16 %v2242, %v2241
        %v2254 = vpack.c.b16 %v2244, %v2243
        %v2255 = vpack.c.b16 %v2246, %v2245
        %v2256 = vpack.c.b16 %v2248, %v2247
        %2265 = vmatprep.subr.bf16.mxu0 0
        %2266 = vmatpush1.bf16.msra.mxu0 %v2256
        %2267 = vmatprep.subr.bf16.mxu0 0
        %2268 = vmatpush1.bf16.msra.mxu0 %v2255
        %2269 = vmatprep.subr.bf16.mxu0 0
        %2270 = vmatpush1.bf16.msra.mxu0 %v2254
        %2271 = vmatprep.subr.bf16.mxu0 0
        %2272 = vmatpush1.bf16.msra.mxu0 %v2253
        %2273 = vmatprep.subr.bf16.mxu0 0
        %2274 = vmatpush1.bf16.msra.mxu0 %v2252
        %2275 = vmatprep.subr.bf16.mxu0 0
        %2276 = vmatpush1.bf16.msra.mxu0 %v2251
        %2277 = vmatprep.subr.bf16.mxu0 0
        %2278 = vmatpush1.bf16.msra.mxu0 %v2250
        %2279 = vmatprep.subr.bf16.mxu0 0
        %2280 = vmatpush1.bf16.msra.mxu0 %v2249
        %2281 = vmatprep.subr.bf16.mxu0 0
        %2282 = vmatpush2.bf16.msra.mxu0 0
        %2283 = vmatprep.subr.bf16.mxu0 0
        %2284 = vmatpush2.bf16.msra.mxu0 0
        %2285 = vmatprep.subr.bf16.mxu0 0
        %2286 = vmatpush2.bf16.msra.mxu0 0
        %2287 = vmatprep.subr.bf16.mxu0 0
        %2288 = vmatpush2.bf16.msra.mxu0 0
        %2289 = vmatprep.subr.bf16.mxu0 0
        %2290 = vmatpush2.bf16.msra.mxu0 0
        %2291 = vmatprep.subr.bf16.mxu0 0
        %2292 = vmatpush2.bf16.msra.mxu0 0
        %2293 = vmatprep.subr.bf16.mxu0 0
        %2294 = vmatpush2.bf16.msra.mxu0 0
        %2295 = vmatprep.subr.bf16.mxu0 0
        %2296 = vmatpush2.bf16.msra.mxu0 0
        %2297 = vmatprep.mubr.bf16.mxu0 0
        %2298 = vmatmul.mubr.bf16.gmra.mxu0 %v2212
        %v2299 = vpop.f32.mrf.mxu0
        %v2300 = vadd.f32 %v2216, %v2299
        %v2301 = vpop.f32.mrf.mxu0
        %v2302 = vpop.f32.mrf.mxu0
        %v2303 = vadd.f32 %v2216, %v2302
        %v2304 = vpop.f32.mrf.mxu0
        %2305 = vdwg.mxu0
        %v2306 = vsel %vm578, %v2300, 0.0
        %2307 = vadd.xlane.f32.xlu0 %v2306
        %v2308 = vpop.xlane.xlu0 %2307
        %v2309 = vsel %vm578, %v2303, 0.0
        %2310 = vadd.xlane.f32.xlu0 %v2309
        %v2311 = vpop.xlane.xlu0 %2310
        %v2312 = vmul.f32 %v2308, %v1186
        %v2313 = vmul.f32 %v2311, %v1186
        %v2314 = vsub.f32 %v2300, %v2312
        %v2315 = vsub.f32 %v2303, %v2313
        %v2316 = vmul.f32 %v2314, %v2314
        %v2317 = vmul.f32 %v2315, %v2315
        %v2318 = vsel %vm578, %v2316, 0.0
        %2319 = vadd.xlane.f32.xlu0 %v2318
        %v2320 = vpop.xlane.xlu0 %2319
        %v2321 = vsel %vm578, %v2317, 0.0
        %2322 = vadd.xlane.f32.xlu0 %v2321
        %v2323 = vpop.xlane.xlu0 %2322
        %v2324 = vmul.f32 %v2320, %v1186
        %v2325 = vmul.f32 %v2323, %v1186
        %v2326 = vadd.f32 %v2324, 1e-05
        %v2327 = vadd.f32 %v2325, 1e-05
        %v2328 = vrsqrt.pop %v2326
        %v2329 = vrsqrt.pop %v2327
        %v2330 = vmul.f32 %v2314, %v2328
        %v2331 = vmul.f32 %v2315, %v2329
        %v2332 = vlaneseq
        %v2333 = vshrl.u32 %v2332, 7
        %v2334 = vsub.s32 4, %v2333
        %v2335 = vrot.slane %v1471, %v2334
        %v2336 = vmul.f32 %v2330, %v2335
        %v2337 = vmul.f32 %v2331, %v2335
        %v2338 = vlaneseq
        %v2339 = vshrl.u32 %v2338, 7
        %v2340 = vsub.s32 5, %v2339
        %v2341 = vrot.slane %v1471, %v2340
        %v2342 = vadd.f32 %v2336, %v2341
        %v2343 = vadd.f32 %v2337, %v2341
        %v2344 = vadd.f32 %v2129, %v2342
        %v2345 = vadd.f32 %v2130, %v2343
        %v2346 = vld [vmem:[#allocation8] sm:$0x7]
        %v2347 = vld [vmem:[%s11] sm:$0x3]
        %v2348 = vsel %vm578, %v2344, 0.0
        %2349 = vadd.xlane.f32.xlu0 %v2348
        %v2350 = vpop.xlane.xlu0 %2349
        %v2351 = vsel %vm578, %v2345, 0.0
        %2352 = vadd.xlane.f32.xlu0 %v2351
        %v2353 = vpop.xlane.xlu0 %2352
        %v2354 = vmul.f32 %v2350, %v1186
        %v2355 = vmul.f32 %v2353, %v1186
        %v2356 = vsub.f32 %v2344, %v2354
        %v2357 = vsub.f32 %v2345, %v2355
        %v2358 = vmul.f32 %v2356, %v2356
        %v2359 = vmul.f32 %v2357, %v2357
        %v2360 = vsel %vm578, %v2358, 0.0
        %2361 = vadd.xlane.f32.xlu0 %v2360
        %v2362 = vpop.xlane.xlu0 %2361
        %v2363 = vsel %vm578, %v2359, 0.0
        %2364 = vadd.xlane.f32.xlu0 %v2363
        %v2365 = vpop.xlane.xlu0 %2364
        %v2366 = vmul.f32 %v2362, %v1186
        %v2367 = vmul.f32 %v2365, %v1186
        %v2368 = vadd.f32 %v2366, 1e-05
        %v2369 = vadd.f32 %v2367, 1e-05
        %v2370 = vrsqrt.pop %v2368
        %v2371 = vrsqrt.pop %v2369
        %v2372 = vmul.f32 %v2356, %v2370
        %v2373 = vmul.f32 %v2357, %v2371
        %v2374 = vlaneseq
        %v2375 = vshrl.u32 %v2374, 7
        %v2376 = vsub.s32 0, %v2375
        %v2377 = vrot.slane %v2346, %v2376
        %v2378 = vmul.f32 %v2372, %v2377
        %v2379 = vmul.f32 %v2373, %v2377
        %v2380 = vlaneseq
        %v2381 = vshrl.u32 %v2380, 7
        %v2382 = vsub.s32 1, %v2381
        %v2383 = vrot.slane %v2346, %v2382
        %v2384 = vadd.f32 %v2378, %v2383
        %v2385 = vadd.f32 %v2379, %v2383
        %2386 = vst.msk [vmem:[%s509] sm:$0xff] %vm578, %v2384
        %2387 = vst.msk [vmem:[%s509 + $0x8] sm:$0xff] %vm578, %v2385
        %v2388 = vld [vmem:[%s8] sm:$0xf]
        %v2389 = vld [vmem:[%s8 + $0x4] sm:$0xf]
        %v2390 = vld [vmem:[%s8 + $0x8] sm:$0xf]
        %v2391 = vld [vmem:[%s8 + $0xc] sm:$0xf]
        %v2392 = vld [vmem:[%s9] sm:$0xf]
        %v2393 = vld [vmem:[%s9 + $0x4] sm:$0xf]
        %v2394 = vld [vmem:[%s9 + $0x8] sm:$0xf]
        %v2395 = vld [vmem:[%s9 + $0xc] sm:$0xf]
        %v2396 = vld [vmem:[#allocation2] sm:$0x1]
        %v2397 = vpack.c.bf16 %v2385, %v2384
        %v2398 = vlaneseq
        %v2399 = vshrl.u32 %v2398, 7
        %v2400 = vsub.s32 2, %v2399
        %v2401 = vrot.slane %v2346, %v2400
        %v2406 = vunpack.c.l.b16 %v2388
        %v2407 = vunpack.c.l.b16 %v2389
        %v2408 = vunpack.c.l.b16 %v2390
        %v2409 = vunpack.c.l.b16 %v2391
        %v2410 = vpack.c.b16 %v2407, %v2406
        %v2411 = vpack.c.b16 %v2409, %v2408
        %v2415 = vsel %vm578, %v2397, 0
        %2417 = vmatprep.subr.bf16.mxu0 0
        %2418 = vmatpush1.bf16.msra.mxu0 0
        %2419 = vmatprep.subr.bf16.mxu0 0
        %2420 = vmatpush1.bf16.msra.mxu0 0
        %2421 = vmatprep.subr.bf16.mxu0 0
        %2422 = vmatpush1.bf16.msra.mxu0 0
        %2423 = vmatprep.subr.bf16.mxu0 0
        %2424 = vmatpush1.bf16.msra.mxu0 0
        %2425 = vmatprep.subr.bf16.mxu0 0
        %2426 = vmatpush1.bf16.msra.mxu0 0
        %2427 = vmatprep.subr.bf16.mxu0 0
        %2428 = vmatpush1.bf16.msra.mxu0 0
        %2429 = vmatprep.subr.bf16.mxu0 0
        %2430 = vmatpush1.bf16.msra.mxu0 %v2411
        %2431 = vmatprep.subr.bf16.mxu0 0
        %2432 = vmatpush1.bf16.msra.mxu0 %v2410
        %2433 = vmatprep.subr.bf16.mxu0 0
        %2434 = vmatpush2.bf16.msra.mxu0 0
        %2435 = vmatprep.subr.bf16.mxu0 0
        %2436 = vmatpush2.bf16.msra.mxu0 0
        %2437 = vmatprep.subr.bf16.mxu0 0
        %2438 = vmatpush2.bf16.msra.mxu0 0
        %2439 = vmatprep.subr.bf16.mxu0 0
        %2440 = vmatpush2.bf16.msra.mxu0 0
        %2441 = vmatprep.subr.bf16.mxu0 0
        %2442 = vmatpush2.bf16.msra.mxu0 0
        %2443 = vmatprep.subr.bf16.mxu0 0
        %2444 = vmatpush2.bf16.msra.mxu0 0
        %2445 = vmatprep.subr.bf16.mxu0 0
        %2446 = vmatpush2.bf16.msra.mxu0 0
        %2447 = vmatprep.subr.bf16.mxu0 0
        %2448 = vmatpush2.bf16.msra.mxu0 0
        %2449 = vmatprep.mubr.bf16.mxu0 0
        %2450 = vmatmul.mubr.bf16.gmra.mxu0 %v2415
        %v2451 = vpop.f32.mrf.mxu0
        %v2452 = vadd.f32 %v2401, %v2451
        %v2453 = vpop.f32.mrf.mxu0
        %v2454 = vpop.f32.mrf.mxu0
        %v2455 = vadd.f32 %v2401, %v2454
        %v2456 = vpop.f32.mrf.mxu0
        %2457 = vdwg.mxu0
        %v2458 = vmul.f32 %v2452, 0.5
        %v2459 = vmul.f32 %v2455, 0.5
        %v2460 = vmul.f32 %v2452, 0.044715
        %v2461 = vmul.f32 %v2455, 0.044715
        %v2462 = vmul.f32 %v2460, %v2452
        %v2463 = vmul.f32 %v2461, %v2455
        %v2464 = vmul.f32 %v2462, %v2452
        %v2465 = vmul.f32 %v2463, %v2455
        %v2466 = vadd.f32 %v2452, %v2464
        %v2467 = vadd.f32 %v2455, %v2465
        %v2468 = vmul.f32 %v2466, 0.7978846
        %v2469 = vmul.f32 %v2467, 0.7978846
        %v2470 = vtanh.pop %v2468
        %v2471 = vtanh.pop %v2469
        %v2472 = vadd.f32 %v2470, 1.0
        %v2473 = vadd.f32 %v2471, 1.0
        %v2474 = vmul.f32 %v2458, %v2472
        %v2475 = vmul.f32 %v2459, %v2473
        %v2476 = vpack.c.bf16 %v2475, %v2474
        %v2477 = vlaneseq
        %v2478 = vshrl.u32 %v2477, 7
        %v2479 = vsub.s32 0, %v2478
        %v2480 = vrot.slane %v2347, %v2479
        %v2485 = vunpack.c.l.b16 %v2392
        %v2486 = vunpack.c.l.b16 %v2393
        %v2487 = vunpack.c.l.b16 %v2394
        %v2488 = vunpack.c.l.b16 %v2395
        %v2489 = vpack.c.b16 %v2486, %v2485
        %v2490 = vpack.c.b16 %v2488, %v2487
        %v2494 = vsel %vm578, %v2476, 0
        %2496 = vmatprep.subr.bf16.mxu0 0
        %2497 = vmatpush1.bf16.msra.mxu0 0
        %2498 = vmatprep.subr.bf16.mxu0 0
        %2499 = vmatpush1.bf16.msra.mxu0 0
        %2500 = vmatprep.subr.bf16.mxu0 0
        %2501 = vmatpush1.bf16.msra.mxu0 0
        %2502 = vmatprep.subr.bf16.mxu0 0
        %2503 = vmatpush1.bf16.msra.mxu0 0
        %2504 = vmatprep.subr.bf16.mxu0 0
        %2505 = vmatpush1.bf16.msra.mxu0 0
        %2506 = vmatprep.subr.bf16.mxu0 0
        %2507 = vmatpush1.bf16.msra.mxu0 0
        %2508 = vmatprep.subr.bf16.mxu0 0
        %2509 = vmatpush1.bf16.msra.mxu0 %v2490
        %2510 = vmatprep.subr.bf16.mxu0 0
        %2511 = vmatpush1.bf16.msra.mxu0 %v2489
        %2512 = vmatprep.subr.bf16.mxu0 0
        %2513 = vmatpush2.bf16.msra.mxu0 0
        %2514 = vmatprep.subr.bf16.mxu0 0
        %2515 = vmatpush2.bf16.msra.mxu0 0
        %2516 = vmatprep.subr.bf16.mxu0 0
        %2517 = vmatpush2.bf16.msra.mxu0 0
        %2518 = vmatprep.subr.bf16.mxu0 0
        %2519 = vmatpush2.bf16.msra.mxu0 0
        %2520 = vmatprep.subr.bf16.mxu0 0
        %2521 = vmatpush2.bf16.msra.mxu0 0
        %2522 = vmatprep.subr.bf16.mxu0 0
        %2523 = vmatpush2.bf16.msra.mxu0 0
        %2524 = vmatprep.subr.bf16.mxu0 0
        %2525 = vmatpush2.bf16.msra.mxu0 0
        %2526 = vmatprep.subr.bf16.mxu0 0
        %2527 = vmatpush2.bf16.msra.mxu0 0
        %2528 = vmatprep.mubr.bf16.mxu0 0
        %2529 = vmatmul.mubr.bf16.gmra.mxu0 %v2494
        %v2530 = vpop.f32.mrf.mxu0
        %v2531 = vadd.f32 %v2480, %v2530
        %v2532 = vpop.f32.mrf.mxu0
        %v2533 = vpop.f32.mrf.mxu0
        %v2534 = vadd.f32 %v2480, %v2533
        %v2535 = vpop.f32.mrf.mxu0
        %2536 = vdwg.mxu0
        %v2537 = vmul.f32 %v2531, 0.5
        %v2538 = vmul.f32 %v2534, 0.5
        %v2539 = vmul.f32 %v2531, 0.044715
        %v2540 = vmul.f32 %v2534, 0.044715
        %v2541 = vmul.f32 %v2539, %v2531
        %v2542 = vmul.f32 %v2540, %v2534
        %v2543 = vmul.f32 %v2541, %v2531
        %v2544 = vmul.f32 %v2542, %v2534
        %v2545 = vadd.f32 %v2531, %v2543
        %v2546 = vadd.f32 %v2534, %v2544
        %v2547 = vmul.f32 %v2545, 0.7978846
        %v2548 = vmul.f32 %v2546, 0.7978846
        %v2549 = vtanh.pop %v2547
        %v2550 = vtanh.pop %v2548
        %v2551 = vadd.f32 %v2549, 1.0
        %v2552 = vadd.f32 %v2550, 1.0
        %v2553 = vmul.f32 %v2537, %v2551
        %v2554 = vmul.f32 %v2538, %v2552
        %v2555 = vlaneseq
        %v2556 = vshrl.u32 %v2555, 7
        %v2557 = vsub.s32 1, %v2556
        %v2558 = vrot.slane %v2347, %v2557
        %v2559 = vmul.f32 %v2553, %v2558
        %v2560 = vmul.f32 %v2554, %v2558
        %v2561 = vsel %vm728, %v2559, 0.0
        %2562 = vadd.xlane.f32.xlu0 %v2561
        %v2563 = vpop.xlane.xlu0 %2562
        %v2564 = vsel %vm728, %v2560, 0.0
        %2565 = vadd.xlane.f32.xlu0 %v2564
        %v2566 = vpop.xlane.xlu0 %2565
        %v2568 = vlaneseq
        %v2569 = vshrl.u32 %v2568, 7
        %v2570 = vsub.s32 0, %v2569
        %v2571 = vrot.slane %v2396, %v2570
        %2572 = vset.pattern.permute.xlu0 0
        %2573 = vperm.xlu0 %2572, %v2571
        %v2574 = vpop.permute.xlu0 %2573
        %v2576 = vadd.f32 %v2563, %v2574
        %v2577 = vadd.f32 %v2566, %v2574
        %v2580 = vlaneseq
        %v2581 = vand.u32 %v2580, 127
        %v2582 = vlaneseq
        %v2583 = vshrl.u32 %v2582, 7
        %v2584 = vsub.s32 %v2581, %v2583
        %v2585 = vrot.slane %v2576, %v2584
        %v2586 = vlaneseq
        %v2587 = vshrl.u32 %v2586, 7
        %v2588 = vsub.s32 %v2581, %v2587
        %v2589 = vrot.slane %v2577, %v2588
        %vm2590 = vcmask 1041409
        %v2591 = vsel %vm2590, %v2589, %v2585
        %vm2593 = vcmask 58368
        %v2594 = vsel %vm2593, %v2591, -inf
        %2595 = vmax.xlane.f32.xlu0 %v2594
        %v2596 = vpop.xlane.xlu0 %2595
        %v2598 = vlaneseq
        %v2599 = vshrl.u32 %v2598, 7
        %v2600 = vsub.s32 0, %v2599
        %v2601 = vrot.slane %v2596, %v2600
        %v2602 = vlaneseq
        %v2603 = vshrl.u32 %v2602, 7
        %v2604 = vsub.s32 1, %v2603
        %v2605 = vrot.slane %v2596, %v2604
        %v2608 = vsub.f32 %v2576, %v2601
        %v2609 = vsub.f32 %v2577, %v2605
        %v2610 = vmul.f32 %v2608, 1.442695
        %v2611 = vpow.pop %v2610
        %v2612 = vmul.f32 %v2609, 1.442695
        %v2613 = vpow.pop %v2612
        %2616 = vset.pattern.permute.xlu0 0
        %2617 = vperm.xlu0 %2616, %v2611
        %v2618 = vpop.permute.xlu0 %2617
        %2619 = vset.pattern.permute.xlu0 0
        %2620 = vperm.xlu0 %2619, %v2613
        %v2621 = vpop.permute.xlu0 %2620
        %v2622 = vlaneseq
        %v2623 = vshrl.u32 %v2622, 7
        %v2624 = vsub.s32 %v2581, %v2623
        %v2625 = vrot.slane %v2618, %v2624
        %v2626 = vlaneseq
        %v2627 = vshrl.u32 %v2626, 7
        %v2628 = vsub.s32 %v2581, %v2627
        %v2629 = vrot.slane %v2621, %v2628
        %v2630 = vsel %vm2590, %v2629, %v2625
        %v2632 = vsel %vm2593, %v2630, 0.0
        %2633 = vadd.xlane.f32.xlu0 %v2632
        %v2634 = vpop.xlane.xlu0 %2633
        %v2635 = vrcp.pop %v2634
        %v2637 = vlaneseq
        %v2638 = vshrl.u32 %v2637, 7
        %v2639 = vsub.s32 0, %v2638
        %v2640 = vrot.slane %v2635, %v2639
        %v2641 = vlaneseq
        %v2642 = vshrl.u32 %v2641, 7
        %v2643 = vsub.s32 1, %v2642
        %v2644 = vrot.slane %v2635, %v2643
        %v2647 = vmul.f32 %v2611, %v2640
        %v2648 = vmul.f32 %v2613, %v2644
        %2651 = vset.pattern.permute.xlu0 0
        %2652 = vperm.xlu0 %2651, %v2647
        %v2653 = vpop.permute.xlu0 %2652
        %2654 = vset.pattern.permute.xlu0 0
        %2655 = vperm.xlu0 %2654, %v2648
        %v2656 = vpop.permute.xlu0 %2655
        %v2657 = vlaneseq
        %v2658 = vshrl.u32 %v2657, 7
        %v2659 = vsub.s32 %v2581, %v2658
        %v2660 = vrot.slane %v2653, %v2659
        %v2661 = vlaneseq
        %v2662 = vshrl.u32 %v2661, 7
        %v2663 = vsub.s32 %v2581, %v2662
        %v2664 = vrot.slane %v2656, %v2663
        %vm2667 = vcmask 57344
        %2668 = vst.msk [vmem:[%s516] sm:$0x1] %vm2667, %v2660
        %2669 = vst.msk [vmem:[%s516 + $0x1] sm:$0x1] %vm2667, %v2664
        %s2670 = sand.u32 %s322, 1
        %s2671 = scalar_lea.sflag [#allocation5], %s2670
        %s2672 = sand.u32 %s322, 1
        %s2673 = smul.addr %s2672, 16
        %s2674 = scalar_lea.vmem [#allocation9], %s2673
        %s2675 = sand.u32 %s348, 1
        %s2676 = scalar_lea.sflag [#allocation11], %s2675
        %s2677 = sand.u32 %s348, 1
        %s2678 = smul.addr %s2677, 2
        %s2679 = scalar_lea.vmem [#allocation10], %s2678
        // Predicated region
        $region85: #{tpu_custom_call.1} parent=71 // pred_check
          %p2680 = pneg %p332
        $region86: #{tpu_custom_call.1} parent=71 // pred_check_branch
          %2682 = sbr.rel (%p2680) target = $region88
        $region87: #{tpu_custom_call.1} parent=71 // pred_region
          %s2683 = smul.u32 2, %s36
          %s2685 = ssub.s32 256, 256
          %2686 = vsyncadd %s2671, %s2685
          %s2687 = smul.addr %s2683, 128
          %s2688 = scalar_lea.hbm %s13, %s2687
          %s2689 = sshll.u32 %s2674, 4
          %s2690 = int_to_ptr.vmem [resolvable:$true] %s2689
          %2695 = dma.vmem_to_hbm [thread:$0]  %s2690, 256, %s2688, %s2671, 128, 128, 8
        $region88: #{tpu_custom_call.1} parent=71 // pred_fallthru
          _
        // Predicated region
        $region89: #{tpu_custom_call.1} parent=71 // pred_check
          %p2696 = pneg %p358
        $region90: #{tpu_custom_call.1} parent=71 // pred_check_branch
          %2698 = sbr.rel (%p2696) target = $region92
        $region91: #{tpu_custom_call.1} parent=71 // pred_region
          %s2699 = smul.u32 2, %s36
          %s2701 = ssub.s32 32, 32
          %2702 = vsyncadd %s2676, %s2701
          %s2703 = smul.addr %s2699, 16
          %s2704 = scalar_lea.hbm %s14, %s2703
          %s2705 = sshll.u32 %s2679, 4
          %s2706 = int_to_ptr.vmem [resolvable:$true] %s2705
          %2711 = dma.vmem_to_hbm [thread:$0]  %s2706, 32, %s2704, %s2676, 16, 16, 1
        $region92: #{tpu_custom_call.1} parent=71 // pred_fallthru
          _
      $region72: #{tpu_custom_call.1} parent=5 // pred_fallthru
        _
      %p2712 = scmp.le.s32.totalorder 2, %s31
      // Predicated region
      $region93: #{tpu_custom_call.1} parent=5 // pred_check
        %p2713 = pneg %p2712
      $region94: #{tpu_custom_call.1} parent=5 // pred_check_branch
        %2715 = sbr.rel (%p2713) target = $region96
      $region95: #{tpu_custom_call.1} parent=5 // pred_region
        %s2716 = ssub.s32 %s31, 2
        // Predicated region
        $region97: #{tpu_custom_call.1} parent=95 // pred_check
          %p2717 = pneg %p338
        $region98: #{tpu_custom_call.1} parent=95 // pred_check_branch
          %2719 = sbr.rel (%p2717) target = $region100
        $region99: #{tpu_custom_call.1} parent=95 // pred_region
          %s2720 = sand.u32 %s323, 1
          %s2721 = scalar_lea.sflag [#allocation5], %s2720
          %s2722 = sand.u32 %s323, 1
          %s2723 = smul.addr %s2722, 16
          %s2724 = scalar_lea.vmem [#allocation9], %s2723
          %2725 = dma.done %s2721, 256
        $region100: #{tpu_custom_call.1} parent=95 // pred_fallthru
          _
        // Predicated region
        $region101: #{tpu_custom_call.1} parent=95 // pred_check
          %p2726 = pneg %p364
        $region102: #{tpu_custom_call.1} parent=95 // pred_check_branch
          %2728 = sbr.rel (%p2726) target = $region104
        $region103: #{tpu_custom_call.1} parent=95 // pred_region
          %s2729 = sand.u32 %s349, 1
          %s2730 = scalar_lea.sflag [#allocation11], %s2729
          %s2731 = sand.u32 %s349, 1
          %s2732 = smul.addr %s2731, 2
          %s2733 = scalar_lea.vmem [#allocation10], %s2732
          %2734 = dma.done %s2730, 32
        $region104: #{tpu_custom_call.1} parent=95 // pred_fallthru
          _
      $region96: #{tpu_custom_call.1} parent=5 // pred_fallthru
        _
    $region6: #{tpu_custom_call.1} parent=1 // loop_footer
      %s35 = sadd.s32 1, %s31
    $region7: #{tpu_custom_call.1} parent=1 // loop_footer_branch
      %30 = sbr.rel target = $region3
    $region8: #{tpu_custom_call.1} parent=1 // loop_exit
      _
    %2735 = vsyncpa [#allocation4], 1
    %s2736 = scalar_lea.sflag [#allocation4], 1
    %2737 = vsyncpa %s2736, 1
    %2738 = vsyncpa [#allocation7], 1
    %2739 = vsyncpa [#allocation5], 1
    %s2740 = scalar_lea.sflag [#allocation5], 1
    %2741 = vsyncpa %s2740, 1
    %2742 = vsyncpa [#allocation11], 1
    %s2743 = scalar_lea.sflag [#allocation11], 1
    %2744 = vsyncpa %s2743, 1

</llo_original>
